<compile_context>
chip_gen: v7x
topology: tpu7x:2x2x1
jax: 0.10.0
libtpu: 0.0.40
codegen_flags: <defaults>
</compile_context>

<pallas_src>
import functools

import jax
import jax.numpy as jnp
import numpy as np
from jax.experimental import pallas as pl
from jax.experimental.pallas import tpu as pltpu


# ----------------------------------------------------------------------------
# Pallas kernel: full rollout (recurrence + output head) in one launch
# ----------------------------------------------------------------------------
def _ntm_rollout_kernel(
    x_ref,          # [T*B, I]    (in_data | prev_reads), time-flattened
    state0_ref,     # [B, 4H]     initial packed state [h1|c1|h2|c2]
    w_x1_ref,       # [I, 4H]     W_ih1^T
    w_h1_ref,       # [H, 4H]     W_hh1^T
    b1_ref,         # [1, 4H]     b_ih1 + b_hh1
    w_x2_ref,       # [H, 4H]     W_ih2^T
    w_h2_ref,       # [H, 4H]     W_hh2^T
    b2_ref,         # [1, 4H]     b_ih2 + b_hh2
    rd_ref,         # [T*B, Mr]   read_data, time-flattened
    w_out_s_ref,    # [4H, O]     zero-padded: rows 2H:3H = w_out[:, :H]^T
    w_out_r_ref,    # [Mr, O]     w_out[:, H:]^T
    b_out_ref,      # [1, O]
    state_seq_ref,  # [T*B, 4H]   OUT: per-step packed state [h1|c1|h2|c2]
    out_ref,        # [T*B, O]    OUT: sigmoid(out_net([h2 | read_data]))
    gx_sc,          # VMEM [T*B, 4H] scratch: hoisted x-part of cell-1 gates
    *,
    seq_len,
    batch,
    hidden,
):
    T, B, H = seq_len, batch, hidden

    # ---- Prologue (off the recurrent critical path): x-part of cell-1 gates.
    gx_sc[...] = (
        jnp.dot(x_ref[...], w_x1_ref[...], preferred_element_type=jnp.float32)
        + b1_ref[...]
    )

    # ---- Hoisted weight loads / bias broadcast (not re-done per step).
    w_h1 = w_h1_ref[...]
    w_x2 = w_x2_ref[...]
    w_h2 = w_h2_ref[...]
    b2 = jnp.broadcast_to(b2_ref[...], (B, 4 * H))

    # ---- Loop-carried (vreg-resident) recurrent state.
    h1 = state0_ref[:, 0:H]
    c1 = state0_ref[:, H:2 * H]
    h2 = state0_ref[:, 2 * H:3 * H]
    c2 = state0_ref[:, 3 * H:4 * H]

    # TODO(synk): the quarter-vreg gate slices could be replaced by full-width
    # sigmoid/tanh + lane-mask selects + pltpu.roll alignment; skipped (micro-opt).
    for t in range(T):  # fully unrolled: T is small and static
        r0 = t * B

        # LSTM cell 1: only the h-dependent matmul is on the critical path.
        g1 = gx_sc[r0:r0 + B, :] + jnp.dot(
            h1, w_h1, preferred_element_type=jnp.float32)
        i1 = jax.nn.sigmoid(g1[:, 0:H])
        f1 = jax.nn.sigmoid(g1[:, H:2 * H])
        gg1 = jnp.tanh(g1[:, 2 * H:3 * H])
        o1 = jax.nn.sigmoid(g1[:, 3 * H:4 * H])
        c1 = f1 * c1 + i1 * gg1
        h1 = o1 * jnp.tanh(c1)

        # LSTM cell 2: two accumulating dots (no concat, no staging buffer).
        g2 = (
            jnp.dot(h1, w_x2, preferred_element_type=jnp.float32)
            + jnp.dot(h2, w_h2, preferred_element_type=jnp.float32)
            + b2
        )
        i2 = jax.nn.sigmoid(g2[:, 0:H])
        f2 = jax.nn.sigmoid(g2[:, H:2 * H])
        gg2 = jnp.tanh(g2[:, 2 * H:3 * H])
        o2 = jax.nn.sigmoid(g2[:, 3 * H:4 * H])
        c2 = f2 * c2 + i2 * gg2
        h2 = o2 * jnp.tanh(c2)

        # Per-step packed state (these stores feed the epilogue, not the
        # recurrence, so they are off the serial critical path).
        state_seq_ref[r0:r0 + B, 0:H] = h1
        state_seq_ref[r0:r0 + B, H:2 * H] = c1
        state_seq_ref[r0:r0 + B, 2 * H:3 * H] = h2
        state_seq_ref[r0:r0 + B, 3 * H:4 * H] = c2

    # ---- Epilogue: output Linear + sigmoid over the whole sequence.
    # w_out_s is zero except rows 2H:3H, so the packed state slab feeds one
    # lane-dense K=4H (=128) MXU matmul directly -- no h2 slice pass needed.
    out_ref[...] = jax.nn.sigmoid(
        jnp.dot(state_seq_ref[...], w_out_s_ref[...],
                preferred_element_type=jnp.float32)
        + jnp.dot(rd_ref[...], w_out_r_ref[...],
                  preferred_element_type=jnp.float32)
        + b_out_ref[...]
    )


# ----------------------------------------------------------------------------
# Wrapper
# ----------------------------------------------------------------------------
@jax.jit
def controller_rollout(x_seq, read_data_seq, state_packed, prep):
    """Fused T-step NTMControllerTwoLSTM rollout (forward + output head).

    x_seq         : [T, B, I]   I = in_data_dim + sum(read dims)
    read_data_seq : [T, B, Mr]
    state_packed  : [B, 4H]     packed [h1|c1|h2|c2]
    returns       : (state_seq [T, B, 4H], out_seq [T, B, O])
    """
    T, B, I = x_seq.shape
    Mr = read_data_seq.shape[-1]
    H4 = state_packed.shape[-1]
    H = H4 // 4
    O = prep["b_out"].shape[-1]

    # Metadata-only reshapes (row-major flatten of the leading T,B axes).
    x_flat = x_seq.reshape(T * B, I)
    rd_flat = read_data_seq.reshape(T * B, Mr)

    kernel = functools.partial(_ntm_rollout_kernel,
                               seq_len=T, batch=B, hidden=H)

    # Single launch, no grid: every operand is a whole-array VMEM-resident
    # block; the time recurrence is unrolled inside the kernel body.
    # TODO(synk): if B grows to >= 2 MXU tiles (v7x), add a leading "parallel"
    # batch-tile grid axis to engage the second TensorCore; pointless at B=8.
    state_seq_flat, out_flat = pl.pallas_call(
        kernel,
        out_shape=(
            jax.ShapeDtypeStruct((T * B, H4), jnp.float32),
            jax.ShapeDtypeStruct((T * B, O), jnp.float32),
        ),
        scratch_shapes=[pltpu.VMEM((T * B, H4), jnp.float32)],
    )(
        x_flat, state_packed,
        prep["w_x1"], prep["w_h1"], prep["b1"],
        prep["w_x2"], prep["w_h2"], prep["b2"],
        rd_flat, prep["w_out_s"], prep["w_out_r"], prep["b_out"],
    )
    return state_seq_flat.reshape(T, B, H4), out_flat.reshape(T, B, O)


def controller_reset(prep, batch_size=1):
    """Mirrors reset(): states = bias_fc(0) (i.e. the bias vectors), packed."""
    packed = jnp.concatenate(
        [prep["h_bias1"], prep["c_bias1"], prep["h_bias2"], prep["c_bias2"]],
        axis=-1,
    ).reshape(1, -1)
    return jnp.tile(packed, (batch_size, 1))


def preprocess_params(params):
    """One-time weight prep: transposes, bias sums, output-weight split and
    zero-padding.  Nothing here runs per timestep or per call."""
    H4 = params["w_ih1"].shape[0]
    H = H4 // 4
    O = params["w_out"].shape[0]
    w_out_s = jnp.zeros((H4, O), jnp.float32)
    w_out_s = w_out_s.at[2 * H:3 * H, :].set(params["w_out"][:, :H].T)
    return {
        "w_x1": params["w_ih1"].T,                              # [I, 4H]
        "w_h1": params["w_hh1"].T,                              # [H, 4H]
        "b1": (params["b_ih1"] + params["b_hh1"]).reshape(1, H4),
        "w_x2": params["w_ih2"].T,                              # [H, 4H]
        "w_h2": params["w_hh2"].T,                              # [H, 4H]
        "b2": (params["b_ih2"] + params["b_hh2"]).reshape(1, H4),
        "w_out_s": w_out_s,                                     # [4H, O]
        "w_out_r": params["w_out"][:, H:].T,                    # [Mr, O]
        "b_out": params["b_out"].reshape(1, -1),
        "h_bias1": params["h_bias1"],
        "c_bias1": params["c_bias1"],
        "h_bias2": params["h_bias2"],
        "c_bias2": params["c_bias2"],
    }


def init_params(key, input_size, controller_size, output_size, read_data_size):
    """Deterministic synthetic parameters (shapes match the torch module)."""
    H = controller_size
    ks = jax.random.split(key, 14)
    u = lambda k, shape, scale: jax.random.uniform(
        k, shape, jnp.float32, -scale, scale)
    s_lstm = 1.0 / np.sqrt(H)
    s_out = np.sqrt(6.0 / read_data_size)
    return {
        # nn.LSTMCell(input_size, H)
        "w_ih1": u(ks[0], (4 * H, input_size), s_lstm),
        "w_hh1": u(ks[1], (4 * H, H), s_lstm),
        "b_ih1": u(ks[2], (4 * H,), s_lstm),
        "b_hh1": u(ks[3], (4 * H,), s_lstm),
        # nn.LSTMCell(H, H)
        "w_ih2": u(ks[4], (4 * H, H), s_lstm),
        "w_hh2": u(ks[5], (4 * H, H), s_lstm),
        "b_ih2": u(ks[6], (4 * H,), s_lstm),
        "b_hh2": u(ks[7], (4 * H,), s_lstm),
        # nn.Linear(read_data_size, output_size)
        "w_out": u(ks[8], (output_size, read_data_size), s_out),
        "b_out": u(ks[9], (output_size,), 1.0 / np.sqrt(read_data_size)),
        # bias FCs (only their bias matters for reset, since their input is 0)
        "h_bias1": u(ks[10], (H,), 1.0),
        "h_bias2": u(ks[11], (H,), 1.0),
        "c_bias1": u(ks[12], (H,), 1.0),
        "c_bias2": u(ks[13], (H,), 1.0),
    }


# ----------------------------------------------------------------------------
# Pure-JAX reference (per-step loop, mirrors the torch module exactly)
# ----------------------------------------------------------------------------
def _ref_lstm_cell(x, h, c, w_ih, w_hh, b_ih, b_hh):
    H = h.shape[-1]
    g = (jnp.matmul(x, w_ih.T, precision="highest") + b_ih
         + jnp.matmul(h, w_hh.T, precision="highest") + b_hh)
    i = jax.nn.sigmoid(g[:, :H])
    f = jax.nn.sigmoid(g[:, H:2 * H])
    gg = jnp.tanh(g[:, 2 * H:3 * H])
    o = jax.nn.sigmoid(g[:, 3 * H:])
    c_new = f * c + i * gg
    return o * jnp.tanh(c_new), c_new


def ref_rollout(in_seq, reads_seq, read_data_seq, state, params):
    h1, c1, h2, c2 = state
    h2s, c2s, outs = [], [], []
    for t in range(in_seq.shape[0]):
        x = jnp.concatenate([in_seq[t], reads_seq[t]], axis=-1)
        h1, c1 = _ref_lstm_cell(x, h1, c1, params["w_ih1"], params["w_hh1"],
                                params["b_ih1"], params["b_hh1"])
        h2, c2 = _ref_lstm_cell(h1, h2, c2, params["w_ih2"], params["w_hh2"],
                                params["b_ih2"], params["b_hh2"])
        complete = jnp.concatenate([h2, read_data_seq[t]], axis=-1)
        out = jax.nn.sigmoid(
            jnp.matmul(complete, params["w_out"].T, precision="highest")
            + params["b_out"])
        h2s.append(h2), c2s.append(c2), outs.append(out)
    return jnp.stack(h2s), jnp.stack(c2s), jnp.stack(outs), (h1, c1, h2, c2)


# ----------------------------------------------------------------------------
if __name__ == "__main__":
    T = 8               # timesteps fused into one kernel launch
    batch = 8           # full sublane group
    in_dim = 8
    read_dim = 24
    num_reads = 1
    input_size = in_dim + num_reads * read_dim                 # 32
    controller_size = 32                                       # 4H = 128 lanes
    read_data_size = controller_size + num_reads * read_dim    # 56
    output_size = 16
    H = controller_size

    params = init_params(jax.random.PRNGKey(0), input_size, controller_size,
                         output_size, read_data_size)
    prep = preprocess_params(params)   # one-time: transposes / sums / padding

    k1, k2, k3 = jax.random.split(jax.random.PRNGKey(0), 3)
    in_seq = jax.random.normal(k1, (T, batch, in_dim), jnp.float32)
    reads_seq = jax.random.normal(k2, (T, batch, read_dim), jnp.float32)
    read_data_seq = jax.random.normal(k3, (T, batch, read_dim), jnp.float32)

    # Single concat for the whole sequence (amortized; no per-step concat).
    x_seq = jnp.concatenate([in_seq, reads_seq], axis=-1)       # [T, B, 32]
    state0 = controller_reset(prep, batch_size=batch)           # [B, 128]

    # ---- Fused Pallas rollout: recurrence + output head in ONE launch ----
    state_seq, out_seq = controller_rollout(x_seq, read_data_seq, state0, prep)
    jax.block_until_ready((state_seq, out_seq))

    h2_seq = state_seq[:, :, 2 * H:3 * H]
    c2_seq = state_seq[:, :, 3 * H:4 * H]
    state_final = state_seq[-1]          # final packed [h1|c1|h2|c2]

    # ---- Reference check ----
    h1_0 = jnp.tile(params["h_bias1"][None], (batch, 1))
    c1_0 = jnp.tile(params["c_bias1"][None], (batch, 1))
    h2_0 = jnp.tile(params["h_bias2"][None], (batch, 1))
    c2_0 = jnp.tile(params["c_bias2"][None], (batch, 1))
    h2_ref, c2_ref, out_seq_ref, final_ref = ref_rollout(
        in_seq, reads_seq, read_data_seq, (h1_0, c1_0, h2_0, c2_0), params)

    # Tolerances loosened knowingly: MXU f32 matmul path / EUP transcendentals
    # vs. a precision="highest" reference, compounding over T recurrent steps.
    TOL = dict(rtol=1e-3, atol=1e-4)
    np.testing.assert_allclose(np.asarray(h2_seq), np.asarray(h2_ref), **TOL)
    np.testing.assert_allclose(np.asarray(c2_seq), np.asarray(c2_ref), **TOL)
    np.testing.assert_allclose(np.asarray(out_seq), np.asarray(out_seq_ref), **TOL)
    fh1, fc1, fh2, fc2 = final_ref
    np.testing.assert_allclose(np.asarray(state_final[:, 0:H]),
                               np.asarray(fh1), **TOL)
    np.testing.assert_allclose(np.asarray(state_final[:, H:2 * H]),
                               np.asarray(fc1), **TOL)
    np.testing.assert_allclose(np.asarray(state_final[:, 2 * H:3 * H]),
                               np.asarray(fh2), **TOL)
    np.testing.assert_allclose(np.asarray(state_final[:, 3 * H:4 * H]),
                               np.asarray(fc2), **TOL)

    print("KERNEL_OK")
</pallas_src>

<mosaic_0001>
module attributes {stable_mosaic.version = 11 : i64} {
  func.func @_ntm_rollout_kernel(%arg0: memref<64x32xf32, #tpu.memory_space<vmem>>, %arg1: memref<8x128xf32, #tpu.memory_space<vmem>>, %arg2: memref<32x128xf32, #tpu.memory_space<vmem>>, %arg3: memref<32x128xf32, #tpu.memory_space<vmem>>, %arg4: memref<1x128xf32, #tpu.memory_space<vmem>>, %arg5: memref<32x128xf32, #tpu.memory_space<vmem>>, %arg6: memref<32x128xf32, #tpu.memory_space<vmem>>, %arg7: memref<1x128xf32, #tpu.memory_space<vmem>>, %arg8: memref<64x24xf32, #tpu.memory_space<vmem>>, %arg9: memref<128x16xf32, #tpu.memory_space<vmem>>, %arg10: memref<24x16xf32, #tpu.memory_space<vmem>>, %arg11: memref<1x16xf32, #tpu.memory_space<vmem>>, %arg12: memref<64x128xf32, #tpu.memory_space<vmem>>, %arg13: memref<64x16xf32, #tpu.memory_space<vmem>>, %arg14: memref<64x128xf32, #tpu.memory_space<vmem>>) attributes {dimension_semantics = [], scalar_prefetch = 0 : i64, scratch_operands = 1 : i64, tpu.core_type = #tpu.core_type<tc>} {
    %c0 = arith.constant 0 : index
    %c0_0 = arith.constant 0 : index
    %0 = vector.load %arg0[%c0, %c0_0] : memref<64x32xf32, #tpu.memory_space<vmem>>, vector<64x32xf32>
    %c0_1 = arith.constant 0 : index
    %c0_2 = arith.constant 0 : index
    %1 = vector.load %arg2[%c0_1, %c0_2] : memref<32x128xf32, #tpu.memory_space<vmem>>, vector<32x128xf32>
    %cst = arith.constant dense<0.000000e+00> : vector<64x128xf32>
    %2 = tpu.matmul %0, %1, %cst {dimension_numbers = #tpu.dot_dimension_numbers<[1], [0], [0], [1], [0, 0, 1, 1], [], []>} : vector<64x32xf32>, vector<32x128xf32>, vector<64x128xf32> -> vector<64x128xf32>
    %c0_3 = arith.constant 0 : index
    %c0_4 = arith.constant 0 : index
    %3 = vector.load %arg4[%c0_3, %c0_4] : memref<1x128xf32, #tpu.memory_space<vmem>>, vector<1x128xf32>
    %4 = vector.broadcast %3 : vector<1x128xf32> to vector<64x128xf32>
    %5 = arith.addf %2, %4 : vector<64x128xf32>
    %c0_5 = arith.constant 0 : index
    %c0_6 = arith.constant 0 : index
    %6 = vector.load %arg14[%c0_5, %c0_6] : memref<64x128xf32, #tpu.memory_space<vmem>>, vector<64x128xf32>
    tpu.vector_store %arg14[%c0_5, %c0_6], %5 {strides = array<i32>} : memref<64x128xf32, #tpu.memory_space<vmem>>, vector<64x128xf32>,
    %c0_7 = arith.constant 0 : index
    %c0_8 = arith.constant 0 : index
    %7 = vector.load %arg3[%c0_7, %c0_8] : memref<32x128xf32, #tpu.memory_space<vmem>>, vector<32x128xf32>
    %c0_9 = arith.constant 0 : index
    %c0_10 = arith.constant 0 : index
    %8 = vector.load %arg5[%c0_9, %c0_10] : memref<32x128xf32, #tpu.memory_space<vmem>>, vector<32x128xf32>
    %c0_11 = arith.constant 0 : index
    %c0_12 = arith.constant 0 : index
    %9 = vector.load %arg6[%c0_11, %c0_12] : memref<32x128xf32, #tpu.memory_space<vmem>>, vector<32x128xf32>
    %c0_13 = arith.constant 0 : index
    %c0_14 = arith.constant 0 : index
    %10 = vector.load %arg7[%c0_13, %c0_14] : memref<1x128xf32, #tpu.memory_space<vmem>>, vector<1x128xf32>
    %11 = vector.shape_cast %10 : vector<1x128xf32> to vector<1x128xf32>
    %12 = vector.broadcast %11 : vector<1x128xf32> to vector<8x128xf32>
    %c0_15 = arith.constant 0 : index
    %c0_16 = arith.constant 0 : index
    %13 = vector.load %arg1[%c0_15, %c0_16] : memref<8x128xf32, #tpu.memory_space<vmem>>, vector<8x32xf32>
    %c0_17 = arith.constant 0 : index
    %c32 = arith.constant 32 : index
    %14 = vector.load %arg1[%c0_17, %c32] : memref<8x128xf32, #tpu.memory_space<vmem>>, vector<8x32xf32>
    %c0_18 = arith.constant 0 : index
    %c64 = arith.constant 64 : index
    %15 = vector.load %arg1[%c0_18, %c64] : memref<8x128xf32, #tpu.memory_space<vmem>>, vector<8x32xf32>
    %c0_19 = arith.constant 0 : index
    %c96 = arith.constant 96 : index
    %16 = vector.load %arg1[%c0_19, %c96] : memref<8x128xf32, #tpu.memory_space<vmem>>, vector<8x32xf32>
    %c0_20 = arith.constant 0 : index
    %c0_21 = arith.constant 0 : index
    %17 = vector.load %arg14[%c0_20, %c0_21] : memref<64x128xf32, #tpu.memory_space<vmem>>, vector<8x128xf32>
    %cst_22 = arith.constant dense<0.000000e+00> : vector<8x128xf32>
    %18 = tpu.matmul %13, %7, %cst_22 {dimension_numbers = #tpu.dot_dimension_numbers<[1], [0], [0], [1], [0, 0, 1, 1], [], []>} : vector<8x32xf32>, vector<32x128xf32>, vector<8x128xf32> -> vector<8x128xf32>
    %19 = arith.addf %17, %18 : vector<8x128xf32>
    %20 = vector.extract_strided_slice %19 {offsets = [0, 0], sizes = [8, 32], strides = [1, 1]} : vector<8x128xf32> to vector<8x32xf32>
    %21 = arith.negf %20 : vector<8x32xf32>
    %22 = math.exp %21 : vector<8x32xf32>
    %cst_23 = arith.constant 1.000000e+00 : f32
    %23 = vector.broadcast %cst_23 : f32 to vector<8x32xf32>
    %24 = arith.addf %23, %22 : vector<8x32xf32>
    %25 = arith.divf %23, %24 : vector<8x32xf32>
    %26 = vector.extract_strided_slice %19 {offsets = [0, 32], sizes = [8, 32], strides = [1, 1]} : vector<8x128xf32> to vector<8x32xf32>
    %27 = arith.negf %26 : vector<8x32xf32>
    %28 = math.exp %27 : vector<8x32xf32>
    %cst_24 = arith.constant 1.000000e+00 : f32
    %29 = vector.broadcast %cst_24 : f32 to vector<8x32xf32>
    %30 = arith.addf %29, %28 : vector<8x32xf32>
    %31 = arith.divf %29, %30 : vector<8x32xf32>
    %32 = vector.extract_strided_slice %19 {offsets = [0, 64], sizes = [8, 32], strides = [1, 1]} : vector<8x128xf32> to vector<8x32xf32>
    %33 = math.tanh %32 : vector<8x32xf32>
    %34 = vector.extract_strided_slice %19 {offsets = [0, 96], sizes = [8, 32], strides = [1, 1]} : vector<8x128xf32> to vector<8x32xf32>
    %35 = arith.negf %34 : vector<8x32xf32>
    %36 = math.exp %35 : vector<8x32xf32>
    %cst_25 = arith.constant 1.000000e+00 : f32
    %37 = vector.broadcast %cst_25 : f32 to vector<8x32xf32>
    %38 = arith.addf %37, %36 : vector<8x32xf32>
    %39 = arith.divf %37, %38 : vector<8x32xf32>
    %40 = arith.mulf %31, %14 : vector<8x32xf32>
    %41 = arith.mulf %25, %33 : vector<8x32xf32>
    %42 = arith.addf %40, %41 : vector<8x32xf32>
    %43 = math.tanh %42 : vector<8x32xf32>
    %44 = arith.mulf %39, %43 : vector<8x32xf32>
    %cst_26 = arith.constant dense<0.000000e+00> : vector<8x128xf32>
    %45 = tpu.matmul %44, %8, %cst_26 {dimension_numbers = #tpu.dot_dimension_numbers<[1], [0], [0], [1], [0, 0, 1, 1], [], []>} : vector<8x32xf32>, vector<32x128xf32>, vector<8x128xf32> -> vector<8x128xf32>
    %cst_27 = arith.constant dense<0.000000e+00> : vector<8x128xf32>
    %46 = tpu.matmul %15, %9, %cst_27 {dimension_numbers = #tpu.dot_dimension_numbers<[1], [0], [0], [1], [0, 0, 1, 1], [], []>} : vector<8x32xf32>, vector<32x128xf32>, vector<8x128xf32> -> vector<8x128xf32>
    %47 = arith.addf %45, %46 : vector<8x128xf32>
    %48 = arith.addf %47, %12 : vector<8x128xf32>
    %49 = vector.extract_strided_slice %48 {offsets = [0, 0], sizes = [8, 32], strides = [1, 1]} : vector<8x128xf32> to vector<8x32xf32>
    %50 = arith.negf %49 : vector<8x32xf32>
    %51 = math.exp %50 : vector<8x32xf32>
    %cst_28 = arith.constant 1.000000e+00 : f32
    %52 = vector.broadcast %cst_28 : f32 to vector<8x32xf32>
    %53 = arith.addf %52, %51 : vector<8x32xf32>
    %54 = arith.divf %52, %53 : vector<8x32xf32>
    %55 = vector.extract_strided_slice %48 {offsets = [0, 32], sizes = [8, 32], strides = [1, 1]} : vector<8x128xf32> to vector<8x32xf32>
    %56 = arith.negf %55 : vector<8x32xf32>
    %57 = math.exp %56 : vector<8x32xf32>
    %cst_29 = arith.constant 1.000000e+00 : f32
    %58 = vector.broadcast %cst_29 : f32 to vector<8x32xf32>
    %59 = arith.addf %58, %57 : vector<8x32xf32>
    %60 = arith.divf %58, %59 : vector<8x32xf32>
    %61 = vector.extract_strided_slice %48 {offsets = [0, 64], sizes = [8, 32], strides = [1, 1]} : vector<8x128xf32> to vector<8x32xf32>
    %62 = math.tanh %61 : vector<8x32xf32>
    %63 = vector.extract_strided_slice %48 {offsets = [0, 96], sizes = [8, 32], strides = [1, 1]} : vector<8x128xf32> to vector<8x32xf32>
    %64 = arith.negf %63 : vector<8x32xf32>
    %65 = math.exp %64 : vector<8x32xf32>
    %cst_30 = arith.constant 1.000000e+00 : f32
    %66 = vector.broadcast %cst_30 : f32 to vector<8x32xf32>
    %67 = arith.addf %66, %65 : vector<8x32xf32>
    %68 = arith.divf %66, %67 : vector<8x32xf32>
    %69 = arith.mulf %60, %16 : vector<8x32xf32>
    %70 = arith.mulf %54, %62 : vector<8x32xf32>
    %71 = arith.addf %69, %70 : vector<8x32xf32>
    %72 = math.tanh %71 : vector<8x32xf32>
    %73 = arith.mulf %68, %72 : vector<8x32xf32>
    %c0_31 = arith.constant 0 : index
    %c0_32 = arith.constant 0 : index
    %74 = vector.load %arg12[%c0_31, %c0_32] : memref<64x128xf32, #tpu.memory_space<vmem>>, vector<8x32xf32>
    tpu.vector_store %arg12[%c0_31, %c0_32], %44 {strides = array<i32>} : memref<64x128xf32, #tpu.memory_space<vmem>>, vector<8x32xf32>,
    %c0_33 = arith.constant 0 : index
    %c32_34 = arith.constant 32 : index
    %75 = vector.load %arg12[%c0_33, %c32_34] : memref<64x128xf32, #tpu.memory_space<vmem>>, vector<8x32xf32>
    tpu.vector_store %arg12[%c0_33, %c32_34], %42 {strides = array<i32>} : memref<64x128xf32, #tpu.memory_space<vmem>>, vector<8x32xf32>,
    %c0_35 = arith.constant 0 : index
    %c64_36 = arith.constant 64 : index
    %76 = vector.load %arg12[%c0_35, %c64_36] : memref<64x128xf32, #tpu.memory_space<vmem>>, vector<8x32xf32>
    tpu.vector_store %arg12[%c0_35, %c64_36], %73 {strides = array<i32>} : memref<64x128xf32, #tpu.memory_space<vmem>>, vector<8x32xf32>,
    %c0_37 = arith.constant 0 : index
    %c96_38 = arith.constant 96 : index
    %77 = vector.load %arg12[%c0_37, %c96_38] : memref<64x128xf32, #tpu.memory_space<vmem>>, vector<8x32xf32>
    tpu.vector_store %arg12[%c0_37, %c96_38], %71 {strides = array<i32>} : memref<64x128xf32, #tpu.memory_space<vmem>>, vector<8x32xf32>,
    %c8 = arith.constant 8 : index
    %c0_39 = arith.constant 0 : index
    %78 = vector.load %arg14[%c8, %c0_39] : memref<64x128xf32, #tpu.memory_space<vmem>>, vector<8x128xf32>
    %cst_40 = arith.constant dense<0.000000e+00> : vector<8x128xf32>
    %79 = tpu.matmul %44, %7, %cst_40 {dimension_numbers = #tpu.dot_dimension_numbers<[1], [0], [0], [1], [0, 0, 1, 1], [], []>} : vector<8x32xf32>, vector<32x128xf32>, vector<8x128xf32> -> vector<8x128xf32>
    %80 = arith.addf %78, %79 : vector<8x128xf32>
    %81 = vector.extract_strided_slice %80 {offsets = [0, 0], sizes = [8, 32], strides = [1, 1]} : vector<8x128xf32> to vector<8x32xf32>
    %82 = arith.negf %81 : vector<8x32xf32>
    %83 = math.exp %82 : vector<8x32xf32>
    %cst_41 = arith.constant 1.000000e+00 : f32
    %84 = vector.broadcast %cst_41 : f32 to vector<8x32xf32>
    %85 = arith.addf %84, %83 : vector<8x32xf32>
    %86 = arith.divf %84, %85 : vector<8x32xf32>
    %87 = vector.extract_strided_slice %80 {offsets = [0, 32], sizes = [8, 32], strides = [1, 1]} : vector<8x128xf32> to vector<8x32xf32>
    %88 = arith.negf %87 : vector<8x32xf32>
    %89 = math.exp %88 : vector<8x32xf32>
    %cst_42 = arith.constant 1.000000e+00 : f32
    %90 = vector.broadcast %cst_42 : f32 to vector<8x32xf32>
    %91 = arith.addf %90, %89 : vector<8x32xf32>
    %92 = arith.divf %90, %91 : vector<8x32xf32>
    %93 = vector.extract_strided_slice %80 {offsets = [0, 64], sizes = [8, 32], strides = [1, 1]} : vector<8x128xf32> to vector<8x32xf32>
    %94 = math.tanh %93 : vector<8x32xf32>
    %95 = vector.extract_strided_slice %80 {offsets = [0, 96], sizes = [8, 32], strides = [1, 1]} : vector<8x128xf32> to vector<8x32xf32>
    %96 = arith.negf %95 : vector<8x32xf32>
    %97 = math.exp %96 : vector<8x32xf32>
    %cst_43 = arith.constant 1.000000e+00 : f32
    %98 = vector.broadcast %cst_43 : f32 to vector<8x32xf32>
    %99 = arith.addf %98, %97 : vector<8x32xf32>
    %100 = arith.divf %98, %99 : vector<8x32xf32>
    %101 = arith.mulf %92, %42 : vector<8x32xf32>
    %102 = arith.mulf %86, %94 : vector<8x32xf32>
    %103 = arith.addf %101, %102 : vector<8x32xf32>
    %104 = math.tanh %103 : vector<8x32xf32>
    %105 = arith.mulf %100, %104 : vector<8x32xf32>
    %cst_44 = arith.constant dense<0.000000e+00> : vector<8x128xf32>
    %106 = tpu.matmul %105, %8, %cst_44 {dimension_numbers = #tpu.dot_dimension_numbers<[1], [0], [0], [1], [0, 0, 1, 1], [], []>} : vector<8x32xf32>, vector<32x128xf32>, vector<8x128xf32> -> vector<8x128xf32>
    %cst_45 = arith.constant dense<0.000000e+00> : vector<8x128xf32>
    %107 = tpu.matmul %73, %9, %cst_45 {dimension_numbers = #tpu.dot_dimension_numbers<[1], [0], [0], [1], [0, 0, 1, 1], [], []>} : vector<8x32xf32>, vector<32x128xf32>, vector<8x128xf32> -> vector<8x128xf32>
    %108 = arith.addf %106, %107 : vector<8x128xf32>
    %109 = arith.addf %108, %12 : vector<8x128xf32>
    %110 = vector.extract_strided_slice %109 {offsets = [0, 0], sizes = [8, 32], strides = [1, 1]} : vector<8x128xf32> to vector<8x32xf32>
    %111 = arith.negf %110 : vector<8x32xf32>
    %112 = math.exp %111 : vector<8x32xf32>
    %cst_46 = arith.constant 1.000000e+00 : f32
    %113 = vector.broadcast %cst_46 : f32 to vector<8x32xf32>
    %114 = arith.addf %113, %112 : vector<8x32xf32>
    %115 = arith.divf %113, %114 : vector<8x32xf32>
    %116 = vector.extract_strided_slice %109 {offsets = [0, 32], sizes = [8, 32], strides = [1, 1]} : vector<8x128xf32> to vector<8x32xf32>
    %117 = arith.negf %116 : vector<8x32xf32>
    %118 = math.exp %117 : vector<8x32xf32>
    %cst_47 = arith.constant 1.000000e+00 : f32
    %119 = vector.broadcast %cst_47 : f32 to vector<8x32xf32>
    %120 = arith.addf %119, %118 : vector<8x32xf32>
    %121 = arith.divf %119, %120 : vector<8x32xf32>
    %122 = vector.extract_strided_slice %109 {offsets = [0, 64], sizes = [8, 32], strides = [1, 1]} : vector<8x128xf32> to vector<8x32xf32>
    %123 = math.tanh %122 : vector<8x32xf32>
    %124 = vector.extract_strided_slice %109 {offsets = [0, 96], sizes = [8, 32], strides = [1, 1]} : vector<8x128xf32> to vector<8x32xf32>
    %125 = arith.negf %124 : vector<8x32xf32>
    %126 = math.exp %125 : vector<8x32xf32>
    %cst_48 = arith.constant 1.000000e+00 : f32
    %127 = vector.broadcast %cst_48 : f32 to vector<8x32xf32>
    %128 = arith.addf %127, %126 : vector<8x32xf32>
    %129 = arith.divf %127, %128 : vector<8x32xf32>
    %130 = arith.mulf %121, %71 : vector<8x32xf32>
    %131 = arith.mulf %115, %123 : vector<8x32xf32>
    %132 = arith.addf %130, %131 : vector<8x32xf32>
    %133 = math.tanh %132 : vector<8x32xf32>
    %134 = arith.mulf %129, %133 : vector<8x32xf32>
    %c8_49 = arith.constant 8 : index
    %c0_50 = arith.constant 0 : index
    %135 = vector.load %arg12[%c8_49, %c0_50] : memref<64x128xf32, #tpu.memory_space<vmem>>, vector<8x32xf32>
    tpu.vector_store %arg12[%c8_49, %c0_50], %105 {strides = array<i32>} : memref<64x128xf32, #tpu.memory_space<vmem>>, vector<8x32xf32>,
    %c8_51 = arith.constant 8 : index
    %c32_52 = arith.constant 32 : index
    %136 = vector.load %arg12[%c8_51, %c32_52] : memref<64x128xf32, #tpu.memory_space<vmem>>, vector<8x32xf32>
    tpu.vector_store %arg12[%c8_51, %c32_52], %103 {strides = array<i32>} : memref<64x128xf32, #tpu.memory_space<vmem>>, vector<8x32xf32>,
    %c8_53 = arith.constant 8 : index
    %c64_54 = arith.constant 64 : index
    %137 = vector.load %arg12[%c8_53, %c64_54] : memref<64x128xf32, #tpu.memory_space<vmem>>, vector<8x32xf32>
    tpu.vector_store %arg12[%c8_53, %c64_54], %134 {strides = array<i32>} : memref<64x128xf32, #tpu.memory_space<vmem>>, vector<8x32xf32>,
    %c8_55 = arith.constant 8 : index
    %c96_56 = arith.constant 96 : index
    %138 = vector.load %arg12[%c8_55, %c96_56] : memref<64x128xf32, #tpu.memory_space<vmem>>, vector<8x32xf32>
    tpu.vector_store %arg12[%c8_55, %c96_56], %132 {strides = array<i32>} : memref<64x128xf32, #tpu.memory_space<vmem>>, vector<8x32xf32>,
    %c16 = arith.constant 16 : index
    %c0_57 = arith.constant 0 : index
    %139 = vector.load %arg14[%c16, %c0_57] : memref<64x128xf32, #tpu.memory_space<vmem>>, vector<8x128xf32>
    %cst_58 = arith.constant dense<0.000000e+00> : vector<8x128xf32>
    %140 = tpu.matmul %105, %7, %cst_58 {dimension_numbers = #tpu.dot_dimension_numbers<[1], [0], [0], [1], [0, 0, 1, 1], [], []>} : vector<8x32xf32>, vector<32x128xf32>, vector<8x128xf32> -> vector<8x128xf32>
    %141 = arith.addf %139, %140 : vector<8x128xf32>
    %142 = vector.extract_strided_slice %141 {offsets = [0, 0], sizes = [8, 32], strides = [1, 1]} : vector<8x128xf32> to vector<8x32xf32>
    %143 = arith.negf %142 : vector<8x32xf32>
    %144 = math.exp %143 : vector<8x32xf32>
    %cst_59 = arith.constant 1.000000e+00 : f32
    %145 = vector.broadcast %cst_59 : f32 to vector<8x32xf32>
    %146 = arith.addf %145, %144 : vector<8x32xf32>
    %147 = arith.divf %145, %146 : vector<8x32xf32>
    %148 = vector.extract_strided_slice %141 {offsets = [0, 32], sizes = [8, 32], strides = [1, 1]} : vector<8x128xf32> to vector<8x32xf32>
    %149 = arith.negf %148 : vector<8x32xf32>
    %150 = math.exp %149 : vector<8x32xf32>
    %cst_60 = arith.constant 1.000000e+00 : f32
    %151 = vector.broadcast %cst_60 : f32 to vector<8x32xf32>
    %152 = arith.addf %151, %150 : vector<8x32xf32>
    %153 = arith.divf %151, %152 : vector<8x32xf32>
    %154 = vector.extract_strided_slice %141 {offsets = [0, 64], sizes = [8, 32], strides = [1, 1]} : vector<8x128xf32> to vector<8x32xf32>
    %155 = math.tanh %154 : vector<8x32xf32>
    %156 = vector.extract_strided_slice %141 {offsets = [0, 96], sizes = [8, 32], strides = [1, 1]} : vector<8x128xf32> to vector<8x32xf32>
    %157 = arith.negf %156 : vector<8x32xf32>
    %158 = math.exp %157 : vector<8x32xf32>
    %cst_61 = arith.constant 1.000000e+00 : f32
    %159 = vector.broadcast %cst_61 : f32 to vector<8x32xf32>
    %160 = arith.addf %159, %158 : vector<8x32xf32>
    %161 = arith.divf %159, %160 : vector<8x32xf32>
    %162 = arith.mulf %153, %103 : vector<8x32xf32>
    %163 = arith.mulf %147, %155 : vector<8x32xf32>
    %164 = arith.addf %162, %163 : vector<8x32xf32>
    %165 = math.tanh %164 : vector<8x32xf32>
    %166 = arith.mulf %161, %165 : vector<8x32xf32>
    %cst_62 = arith.constant dense<0.000000e+00> : vector<8x128xf32>
    %167 = tpu.matmul %166, %8, %cst_62 {dimension_numbers = #tpu.dot_dimension_numbers<[1], [0], [0], [1], [0, 0, 1, 1], [], []>} : vector<8x32xf32>, vector<32x128xf32>, vector<8x128xf32> -> vector<8x128xf32>
    %cst_63 = arith.constant dense<0.000000e+00> : vector<8x128xf32>
    %168 = tpu.matmul %134, %9, %cst_63 {dimension_numbers = #tpu.dot_dimension_numbers<[1], [0], [0], [1], [0, 0, 1, 1], [], []>} : vector<8x32xf32>, vector<32x128xf32>, vector<8x128xf32> -> vector<8x128xf32>
    %169 = arith.addf %167, %168 : vector<8x128xf32>
    %170 = arith.addf %169, %12 : vector<8x128xf32>
    %171 = vector.extract_strided_slice %170 {offsets = [0, 0], sizes = [8, 32], strides = [1, 1]} : vector<8x128xf32> to vector<8x32xf32>
    %172 = arith.negf %171 : vector<8x32xf32>
    %173 = math.exp %172 : vector<8x32xf32>
    %cst_64 = arith.constant 1.000000e+00 : f32
    %174 = vector.broadcast %cst_64 : f32 to vector<8x32xf32>
    %175 = arith.addf %174, %173 : vector<8x32xf32>
    %176 = arith.divf %174, %175 : vector<8x32xf32>
    %177 = vector.extract_strided_slice %170 {offsets = [0, 32], sizes = [8, 32], strides = [1, 1]} : vector<8x128xf32> to vector<8x32xf32>
    %178 = arith.negf %177 : vector<8x32xf32>
    %179 = math.exp %178 : vector<8x32xf32>
    %cst_65 = arith.constant 1.000000e+00 : f32
    %180 = vector.broadcast %cst_65 : f32 to vector<8x32xf32>
    %181 = arith.addf %180, %179 : vector<8x32xf32>
    %182 = arith.divf %180, %181 : vector<8x32xf32>
    %183 = vector.extract_strided_slice %170 {offsets = [0, 64], sizes = [8, 32], strides = [1, 1]} : vector<8x128xf32> to vector<8x32xf32>
    %184 = math.tanh %183 : vector<8x32xf32>
    %185 = vector.extract_strided_slice %170 {offsets = [0, 96], sizes = [8, 32], strides = [1, 1]} : vector<8x128xf32> to vector<8x32xf32>
    %186 = arith.negf %185 : vector<8x32xf32>
    %187 = math.exp %186 : vector<8x32xf32>
    %cst_66 = arith.constant 1.000000e+00 : f32
    %188 = vector.broadcast %cst_66 : f32 to vector<8x32xf32>
    %189 = arith.addf %188, %187 : vector<8x32xf32>
    %190 = arith.divf %188, %189 : vector<8x32xf32>
    %191 = arith.mulf %182, %132 : vector<8x32xf32>
    %192 = arith.mulf %176, %184 : vector<8x32xf32>
    %193 = arith.addf %191, %192 : vector<8x32xf32>
    %194 = math.tanh %193 : vector<8x32xf32>
    %195 = arith.mulf %190, %194 : vector<8x32xf32>
    %c16_67 = arith.constant 16 : index
    %c0_68 = arith.constant 0 : index
    %196 = vector.load %arg12[%c16_67, %c0_68] : memref<64x128xf32, #tpu.memory_space<vmem>>, vector<8x32xf32>
    tpu.vector_store %arg12[%c16_67, %c0_68], %166 {strides = array<i32>} : memref<64x128xf32, #tpu.memory_space<vmem>>, vector<8x32xf32>,
    %c16_69 = arith.constant 16 : index
    %c32_70 = arith.constant 32 : index
    %197 = vector.load %arg12[%c16_69, %c32_70] : memref<64x128xf32, #tpu.memory_space<vmem>>, vector<8x32xf32>
    tpu.vector_store %arg12[%c16_69, %c32_70], %164 {strides = array<i32>} : memref<64x128xf32, #tpu.memory_space<vmem>>, vector<8x32xf32>,
    %c16_71 = arith.constant 16 : index
    %c64_72 = arith.constant 64 : index
    %198 = vector.load %arg12[%c16_71, %c64_72] : memref<64x128xf32, #tpu.memory_space<vmem>>, vector<8x32xf32>
    tpu.vector_store %arg12[%c16_71, %c64_72], %195 {strides = array<i32>} : memref<64x128xf32, #tpu.memory_space<vmem>>, vector<8x32xf32>,
    %c16_73 = arith.constant 16 : index
    %c96_74 = arith.constant 96 : index
    %199 = vector.load %arg12[%c16_73, %c96_74] : memref<64x128xf32, #tpu.memory_space<vmem>>, vector<8x32xf32>
    tpu.vector_store %arg12[%c16_73, %c96_74], %193 {strides = array<i32>} : memref<64x128xf32, #tpu.memory_space<vmem>>, vector<8x32xf32>,
    %c24 = arith.constant 24 : index
    %c0_75 = arith.constant 0 : index
    %200 = vector.load %arg14[%c24, %c0_75] : memref<64x128xf32, #tpu.memory_space<vmem>>, vector<8x128xf32>
    %cst_76 = arith.constant dense<0.000000e+00> : vector<8x128xf32>
    %201 = tpu.matmul %166, %7, %cst_76 {dimension_numbers = #tpu.dot_dimension_numbers<[1], [0], [0], [1], [0, 0, 1, 1], [], []>} : vector<8x32xf32>, vector<32x128xf32>, vector<8x128xf32> -> vector<8x128xf32>
    %202 = arith.addf %200, %201 : vector<8x128xf32>
    %203 = vector.extract_strided_slice %202 {offsets = [0, 0], sizes = [8, 32], strides = [1, 1]} : vector<8x128xf32> to vector<8x32xf32>
    %204 = arith.negf %203 : vector<8x32xf32>
    %205 = math.exp %204 : vector<8x32xf32>
    %cst_77 = arith.constant 1.000000e+00 : f32
    %206 = vector.broadcast %cst_77 : f32 to vector<8x32xf32>
    %207 = arith.addf %206, %205 : vector<8x32xf32>
    %208 = arith.divf %206, %207 : vector<8x32xf32>
    %209 = vector.extract_strided_slice %202 {offsets = [0, 32], sizes = [8, 32], strides = [1, 1]} : vector<8x128xf32> to vector<8x32xf32>
    %210 = arith.negf %209 : vector<8x32xf32>
    %211 = math.exp %210 : vector<8x32xf32>
    %cst_78 = arith.constant 1.000000e+00 : f32
    %212 = vector.broadcast %cst_78 : f32 to vector<8x32xf32>
    %213 = arith.addf %212, %211 : vector<8x32xf32>
    %214 = arith.divf %212, %213 : vector<8x32xf32>
    %215 = vector.extract_strided_slice %202 {offsets = [0, 64], sizes = [8, 32], strides = [1, 1]} : vector<8x128xf32> to vector<8x32xf32>
    %216 = math.tanh %215 : vector<8x32xf32>
    %217 = vector.extract_strided_slice %202 {offsets = [0, 96], sizes = [8, 32], strides = [1, 1]} : vector<8x128xf32> to vector<8x32xf32>
    %218 = arith.negf %217 : vector<8x32xf32>
    %219 = math.exp %218 : vector<8x32xf32>
    %cst_79 = arith.constant 1.000000e+00 : f32
    %220 = vector.broadcast %cst_79 : f32 to vector<8x32xf32>
    %221 = arith.addf %220, %219 : vector<8x32xf32>
    %222 = arith.divf %220, %221 : vector<8x32xf32>
    %223 = arith.mulf %214, %164 : vector<8x32xf32>
    %224 = arith.mulf %208, %216 : vector<8x32xf32>
    %225 = arith.addf %223, %224 : vector<8x32xf32>
    %226 = math.tanh %225 : vector<8x32xf32>
    %227 = arith.mulf %222, %226 : vector<8x32xf32>
    %cst_80 = arith.constant dense<0.000000e+00> : vector<8x128xf32>
    %228 = tpu.matmul %227, %8, %cst_80 {dimension_numbers = #tpu.dot_dimension_numbers<[1], [0], [0], [1], [0, 0, 1, 1], [], []>} : vector<8x32xf32>, vector<32x128xf32>, vector<8x128xf32> -> vector<8x128xf32>
    %cst_81 = arith.constant dense<0.000000e+00> : vector<8x128xf32>
    %229 = tpu.matmul %195, %9, %cst_81 {dimension_numbers = #tpu.dot_dimension_numbers<[1], [0], [0], [1], [0, 0, 1, 1], [], []>} : vector<8x32xf32>, vector<32x128xf32>, vector<8x128xf32> -> vector<8x128xf32>
    %230 = arith.addf %228, %229 : vector<8x128xf32>
    %231 = arith.addf %230, %12 : vector<8x128xf32>
    %232 = vector.extract_strided_slice %231 {offsets = [0, 0], sizes = [8, 32], strides = [1, 1]} : vector<8x128xf32> to vector<8x32xf32>
    %233 = arith.negf %232 : vector<8x32xf32>
    %234 = math.exp %233 : vector<8x32xf32>
    %cst_82 = arith.constant 1.000000e+00 : f32
    %235 = vector.broadcast %cst_82 : f32 to vector<8x32xf32>
    %236 = arith.addf %235, %234 : vector<8x32xf32>
    %237 = arith.divf %235, %236 : vector<8x32xf32>
    %238 = vector.extract_strided_slice %231 {offsets = [0, 32], sizes = [8, 32], strides = [1, 1]} : vector<8x128xf32> to vector<8x32xf32>
    %239 = arith.negf %238 : vector<8x32xf32>
    %240 = math.exp %239 : vector<8x32xf32>
    %cst_83 = arith.constant 1.000000e+00 : f32
    %241 = vector.broadcast %cst_83 : f32 to vector<8x32xf32>
    %242 = arith.addf %241, %240 : vector<8x32xf32>
    %243 = arith.divf %241, %242 : vector<8x32xf32>
    %244 = vector.extract_strided_slice %231 {offsets = [0, 64], sizes = [8, 32], strides = [1, 1]} : vector<8x128xf32> to vector<8x32xf32>
    %245 = math.tanh %244 : vector<8x32xf32>
    %246 = vector.extract_strided_slice %231 {offsets = [0, 96], sizes = [8, 32], strides = [1, 1]} : vector<8x128xf32> to vector<8x32xf32>
    %247 = arith.negf %246 : vector<8x32xf32>
    %248 = math.exp %247 : vector<8x32xf32>
    %cst_84 = arith.constant 1.000000e+00 : f32
    %249 = vector.broadcast %cst_84 : f32 to vector<8x32xf32>
    %250 = arith.addf %249, %248 : vector<8x32xf32>
    %251 = arith.divf %249, %250 : vector<8x32xf32>
    %252 = arith.mulf %243, %193 : vector<8x32xf32>
    %253 = arith.mulf %237, %245 : vector<8x32xf32>
    %254 = arith.addf %252, %253 : vector<8x32xf32>
    %255 = math.tanh %254 : vector<8x32xf32>
    %256 = arith.mulf %251, %255 : vector<8x32xf32>
    %c24_85 = arith.constant 24 : index
    %c0_86 = arith.constant 0 : index
    %257 = vector.load %arg12[%c24_85, %c0_86] : memref<64x128xf32, #tpu.memory_space<vmem>>, vector<8x32xf32>
    tpu.vector_store %arg12[%c24_85, %c0_86], %227 {strides = array<i32>} : memref<64x128xf32, #tpu.memory_space<vmem>>, vector<8x32xf32>,
    %c24_87 = arith.constant 24 : index
    %c32_88 = arith.constant 32 : index
    %258 = vector.load %arg12[%c24_87, %c32_88] : memref<64x128xf32, #tpu.memory_space<vmem>>, vector<8x32xf32>
    tpu.vector_store %arg12[%c24_87, %c32_88], %225 {strides = array<i32>} : memref<64x128xf32, #tpu.memory_space<vmem>>, vector<8x32xf32>,
    %c24_89 = arith.constant 24 : index
    %c64_90 = arith.constant 64 : index
    %259 = vector.load %arg12[%c24_89, %c64_90] : memref<64x128xf32, #tpu.memory_space<vmem>>, vector<8x32xf32>
    tpu.vector_store %arg12[%c24_89, %c64_90], %256 {strides = array<i32>} : memref<64x128xf32, #tpu.memory_space<vmem>>, vector<8x32xf32>,
    %c24_91 = arith.constant 24 : index
    %c96_92 = arith.constant 96 : index
    %260 = vector.load %arg12[%c24_91, %c96_92] : memref<64x128xf32, #tpu.memory_space<vmem>>, vector<8x32xf32>
    tpu.vector_store %arg12[%c24_91, %c96_92], %254 {strides = array<i32>} : memref<64x128xf32, #tpu.memory_space<vmem>>, vector<8x32xf32>,
    %c32_93 = arith.constant 32 : index
    %c0_94 = arith.constant 0 : index
    %261 = vector.load %arg14[%c32_93, %c0_94] : memref<64x128xf32, #tpu.memory_space<vmem>>, vector<8x128xf32>
    %cst_95 = arith.constant dense<0.000000e+00> : vector<8x128xf32>
    %262 = tpu.matmul %227, %7, %cst_95 {dimension_numbers = #tpu.dot_dimension_numbers<[1], [0], [0], [1], [0, 0, 1, 1], [], []>} : vector<8x32xf32>, vector<32x128xf32>, vector<8x128xf32> -> vector<8x128xf32>
    %263 = arith.addf %261, %262 : vector<8x128xf32>
    %264 = vector.extract_strided_slice %263 {offsets = [0, 0], sizes = [8, 32], strides = [1, 1]} : vector<8x128xf32> to vector<8x32xf32>
    %265 = arith.negf %264 : vector<8x32xf32>
    %266 = math.exp %265 : vector<8x32xf32>
    %cst_96 = arith.constant 1.000000e+00 : f32
    %267 = vector.broadcast %cst_96 : f32 to vector<8x32xf32>
    %268 = arith.addf %267, %266 : vector<8x32xf32>
    %269 = arith.divf %267, %268 : vector<8x32xf32>
    %270 = vector.extract_strided_slice %263 {offsets = [0, 32], sizes = [8, 32], strides = [1, 1]} : vector<8x128xf32> to vector<8x32xf32>
    %271 = arith.negf %270 : vector<8x32xf32>
    %272 = math.exp %271 : vector<8x32xf32>
    %cst_97 = arith.constant 1.000000e+00 : f32
    %273 = vector.broadcast %cst_97 : f32 to vector<8x32xf32>
    %274 = arith.addf %273, %272 : vector<8x32xf32>
    %275 = arith.divf %273, %274 : vector<8x32xf32>
    %276 = vector.extract_strided_slice %263 {offsets = [0, 64], sizes = [8, 32], strides = [1, 1]} : vector<8x128xf32> to vector<8x32xf32>
    %277 = math.tanh %276 : vector<8x32xf32>
    %278 = vector.extract_strided_slice %263 {offsets = [0, 96], sizes = [8, 32], strides = [1, 1]} : vector<8x128xf32> to vector<8x32xf32>
    %279 = arith.negf %278 : vector<8x32xf32>
    %280 = math.exp %279 : vector<8x32xf32>
    %cst_98 = arith.constant 1.000000e+00 : f32
    %281 = vector.broadcast %cst_98 : f32 to vector<8x32xf32>
    %282 = arith.addf %281, %280 : vector<8x32xf32>
    %283 = arith.divf %281, %282 : vector<8x32xf32>
    %284 = arith.mulf %275, %225 : vector<8x32xf32>
    %285 = arith.mulf %269, %277 : vector<8x32xf32>
    %286 = arith.addf %284, %285 : vector<8x32xf32>
    %287 = math.tanh %286 : vector<8x32xf32>
    %288 = arith.mulf %283, %287 : vector<8x32xf32>
    %cst_99 = arith.constant dense<0.000000e+00> : vector<8x128xf32>
    %289 = tpu.matmul %288, %8, %cst_99 {dimension_numbers = #tpu.dot_dimension_numbers<[1], [0], [0], [1], [0, 0, 1, 1], [], []>} : vector<8x32xf32>, vector<32x128xf32>, vector<8x128xf32> -> vector<8x128xf32>
    %cst_100 = arith.constant dense<0.000000e+00> : vector<8x128xf32>
    %290 = tpu.matmul %256, %9, %cst_100 {dimension_numbers = #tpu.dot_dimension_numbers<[1], [0], [0], [1], [0, 0, 1, 1], [], []>} : vector<8x32xf32>, vector<32x128xf32>, vector<8x128xf32> -> vector<8x128xf32>
    %291 = arith.addf %289, %290 : vector<8x128xf32>
    %292 = arith.addf %291, %12 : vector<8x128xf32>
    %293 = vector.extract_strided_slice %292 {offsets = [0, 0], sizes = [8, 32], strides = [1, 1]} : vector<8x128xf32> to vector<8x32xf32>
    %294 = arith.negf %293 : vector<8x32xf32>
    %295 = math.exp %294 : vector<8x32xf32>
    %cst_101 = arith.constant 1.000000e+00 : f32
    %296 = vector.broadcast %cst_101 : f32 to vector<8x32xf32>
    %297 = arith.addf %296, %295 : vector<8x32xf32>
    %298 = arith.divf %296, %297 : vector<8x32xf32>
    %299 = vector.extract_strided_slice %292 {offsets = [0, 32], sizes = [8, 32], strides = [1, 1]} : vector<8x128xf32> to vector<8x32xf32>
    %300 = arith.negf %299 : vector<8x32xf32>
    %301 = math.exp %300 : vector<8x32xf32>
    %cst_102 = arith.constant 1.000000e+00 : f32
    %302 = vector.broadcast %cst_102 : f32 to vector<8x32xf32>
    %303 = arith.addf %302, %301 : vector<8x32xf32>
    %304 = arith.divf %302, %303 : vector<8x32xf32>
    %305 = vector.extract_strided_slice %292 {offsets = [0, 64], sizes = [8, 32], strides = [1, 1]} : vector<8x128xf32> to vector<8x32xf32>
    %306 = math.tanh %305 : vector<8x32xf32>
    %307 = vector.extract_strided_slice %292 {offsets = [0, 96], sizes = [8, 32], strides = [1, 1]} : vector<8x128xf32> to vector<8x32xf32>
    %308 = arith.negf %307 : vector<8x32xf32>
    %309 = math.exp %308 : vector<8x32xf32>
    %cst_103 = arith.constant 1.000000e+00 : f32
    %310 = vector.broadcast %cst_103 : f32 to vector<8x32xf32>
    %311 = arith.addf %310, %309 : vector<8x32xf32>
    %312 = arith.divf %310, %311 : vector<8x32xf32>
    %313 = arith.mulf %304, %254 : vector<8x32xf32>
    %314 = arith.mulf %298, %306 : vector<8x32xf32>
    %315 = arith.addf %313, %314 : vector<8x32xf32>
    %316 = math.tanh %315 : vector<8x32xf32>
    %317 = arith.mulf %312, %316 : vector<8x32xf32>
    %c32_104 = arith.constant 32 : index
    %c0_105 = arith.constant 0 : index
    %318 = vector.load %arg12[%c32_104, %c0_105] : memref<64x128xf32, #tpu.memory_space<vmem>>, vector<8x32xf32>
    tpu.vector_store %arg12[%c32_104, %c0_105], %288 {strides = array<i32>} : memref<64x128xf32, #tpu.memory_space<vmem>>, vector<8x32xf32>,
    %c32_106 = arith.constant 32 : index
    %c32_107 = arith.constant 32 : index
    %319 = vector.load %arg12[%c32_106, %c32_107] : memref<64x128xf32, #tpu.memory_space<vmem>>, vector<8x32xf32>
    tpu.vector_store %arg12[%c32_106, %c32_107], %286 {strides = array<i32>} : memref<64x128xf32, #tpu.memory_space<vmem>>, vector<8x32xf32>,
    %c32_108 = arith.constant 32 : index
    %c64_109 = arith.constant 64 : index
    %320 = vector.load %arg12[%c32_108, %c64_109] : memref<64x128xf32, #tpu.memory_space<vmem>>, vector<8x32xf32>
    tpu.vector_store %arg12[%c32_108, %c64_109], %317 {strides = array<i32>} : memref<64x128xf32, #tpu.memory_space<vmem>>, vector<8x32xf32>,
    %c32_110 = arith.constant 32 : index
    %c96_111 = arith.constant 96 : index
    %321 = vector.load %arg12[%c32_110, %c96_111] : memref<64x128xf32, #tpu.memory_space<vmem>>, vector<8x32xf32>
    tpu.vector_store %arg12[%c32_110, %c96_111], %315 {strides = array<i32>} : memref<64x128xf32, #tpu.memory_space<vmem>>, vector<8x32xf32>,
    %c40 = arith.constant 40 : index
    %c0_112 = arith.constant 0 : index
    %322 = vector.load %arg14[%c40, %c0_112] : memref<64x128xf32, #tpu.memory_space<vmem>>, vector<8x128xf32>
    %cst_113 = arith.constant dense<0.000000e+00> : vector<8x128xf32>
    %323 = tpu.matmul %288, %7, %cst_113 {dimension_numbers = #tpu.dot_dimension_numbers<[1], [0], [0], [1], [0, 0, 1, 1], [], []>} : vector<8x32xf32>, vector<32x128xf32>, vector<8x128xf32> -> vector<8x128xf32>
    %324 = arith.addf %322, %323 : vector<8x128xf32>
    %325 = vector.extract_strided_slice %324 {offsets = [0, 0], sizes = [8, 32], strides = [1, 1]} : vector<8x128xf32> to vector<8x32xf32>
    %326 = arith.negf %325 : vector<8x32xf32>
    %327 = math.exp %326 : vector<8x32xf32>
    %cst_114 = arith.constant 1.000000e+00 : f32
    %328 = vector.broadcast %cst_114 : f32 to vector<8x32xf32>
    %329 = arith.addf %328, %327 : vector<8x32xf32>
    %330 = arith.divf %328, %329 : vector<8x32xf32>
    %331 = vector.extract_strided_slice %324 {offsets = [0, 32], sizes = [8, 32], strides = [1, 1]} : vector<8x128xf32> to vector<8x32xf32>
    %332 = arith.negf %331 : vector<8x32xf32>
    %333 = math.exp %332 : vector<8x32xf32>
    %cst_115 = arith.constant 1.000000e+00 : f32
    %334 = vector.broadcast %cst_115 : f32 to vector<8x32xf32>
    %335 = arith.addf %334, %333 : vector<8x32xf32>
    %336 = arith.divf %334, %335 : vector<8x32xf32>
    %337 = vector.extract_strided_slice %324 {offsets = [0, 64], sizes = [8, 32], strides = [1, 1]} : vector<8x128xf32> to vector<8x32xf32>
    %338 = math.tanh %337 : vector<8x32xf32>
    %339 = vector.extract_strided_slice %324 {offsets = [0, 96], sizes = [8, 32], strides = [1, 1]} : vector<8x128xf32> to vector<8x32xf32>
    %340 = arith.negf %339 : vector<8x32xf32>
    %341 = math.exp %340 : vector<8x32xf32>
    %cst_116 = arith.constant 1.000000e+00 : f32
    %342 = vector.broadcast %cst_116 : f32 to vector<8x32xf32>
    %343 = arith.addf %342, %341 : vector<8x32xf32>
    %344 = arith.divf %342, %343 : vector<8x32xf32>
    %345 = arith.mulf %336, %286 : vector<8x32xf32>
    %346 = arith.mulf %330, %338 : vector<8x32xf32>
    %347 = arith.addf %345, %346 : vector<8x32xf32>
    %348 = math.tanh %347 : vector<8x32xf32>
    %349 = arith.mulf %344, %348 : vector<8x32xf32>
    %cst_117 = arith.constant dense<0.000000e+00> : vector<8x128xf32>
    %350 = tpu.matmul %349, %8, %cst_117 {dimension_numbers = #tpu.dot_dimension_numbers<[1], [0], [0], [1], [0, 0, 1, 1], [], []>} : vector<8x32xf32>, vector<32x128xf32>, vector<8x128xf32> -> vector<8x128xf32>
    %cst_118 = arith.constant dense<0.000000e+00> : vector<8x128xf32>
    %351 = tpu.matmul %317, %9, %cst_118 {dimension_numbers = #tpu.dot_dimension_numbers<[1], [0], [0], [1], [0, 0, 1, 1], [], []>} : vector<8x32xf32>, vector<32x128xf32>, vector<8x128xf32> -> vector<8x128xf32>
    %352 = arith.addf %350, %351 : vector<8x128xf32>
    %353 = arith.addf %352, %12 : vector<8x128xf32>
    %354 = vector.extract_strided_slice %353 {offsets = [0, 0], sizes = [8, 32], strides = [1, 1]} : vector<8x128xf32> to vector<8x32xf32>
    %355 = arith.negf %354 : vector<8x32xf32>
    %356 = math.exp %355 : vector<8x32xf32>
    %cst_119 = arith.constant 1.000000e+00 : f32
    %357 = vector.broadcast %cst_119 : f32 to vector<8x32xf32>
    %358 = arith.addf %357, %356 : vector<8x32xf32>
    %359 = arith.divf %357, %358 : vector<8x32xf32>
    %360 = vector.extract_strided_slice %353 {offsets = [0, 32], sizes = [8, 32], strides = [1, 1]} : vector<8x128xf32> to vector<8x32xf32>
    %361 = arith.negf %360 : vector<8x32xf32>
    %362 = math.exp %361 : vector<8x32xf32>
    %cst_120 = arith.constant 1.000000e+00 : f32
    %363 = vector.broadcast %cst_120 : f32 to vector<8x32xf32>
    %364 = arith.addf %363, %362 : vector<8x32xf32>
    %365 = arith.divf %363, %364 : vector<8x32xf32>
    %366 = vector.extract_strided_slice %353 {offsets = [0, 64], sizes = [8, 32], strides = [1, 1]} : vector<8x128xf32> to vector<8x32xf32>
    %367 = math.tanh %366 : vector<8x32xf32>
    %368 = vector.extract_strided_slice %353 {offsets = [0, 96], sizes = [8, 32], strides = [1, 1]} : vector<8x128xf32> to vector<8x32xf32>
    %369 = arith.negf %368 : vector<8x32xf32>
    %370 = math.exp %369 : vector<8x32xf32>
    %cst_121 = arith.constant 1.000000e+00 : f32
    %371 = vector.broadcast %cst_121 : f32 to vector<8x32xf32>
    %372 = arith.addf %371, %370 : vector<8x32xf32>
    %373 = arith.divf %371, %372 : vector<8x32xf32>
    %374 = arith.mulf %365, %315 : vector<8x32xf32>
    %375 = arith.mulf %359, %367 : vector<8x32xf32>
    %376 = arith.addf %374, %375 : vector<8x32xf32>
    %377 = math.tanh %376 : vector<8x32xf32>
    %378 = arith.mulf %373, %377 : vector<8x32xf32>
    %c40_122 = arith.constant 40 : index
    %c0_123 = arith.constant 0 : index
    %379 = vector.load %arg12[%c40_122, %c0_123] : memref<64x128xf32, #tpu.memory_space<vmem>>, vector<8x32xf32>
    tpu.vector_store %arg12[%c40_122, %c0_123], %349 {strides = array<i32>} : memref<64x128xf32, #tpu.memory_space<vmem>>, vector<8x32xf32>,
    %c40_124 = arith.constant 40 : index
    %c32_125 = arith.constant 32 : index
    %380 = vector.load %arg12[%c40_124, %c32_125] : memref<64x128xf32, #tpu.memory_space<vmem>>, vector<8x32xf32>
    tpu.vector_store %arg12[%c40_124, %c32_125], %347 {strides = array<i32>} : memref<64x128xf32, #tpu.memory_space<vmem>>, vector<8x32xf32>,
    %c40_126 = arith.constant 40 : index
    %c64_127 = arith.constant 64 : index
    %381 = vector.load %arg12[%c40_126, %c64_127] : memref<64x128xf32, #tpu.memory_space<vmem>>, vector<8x32xf32>
    tpu.vector_store %arg12[%c40_126, %c64_127], %378 {strides = array<i32>} : memref<64x128xf32, #tpu.memory_space<vmem>>, vector<8x32xf32>,
    %c40_128 = arith.constant 40 : index
    %c96_129 = arith.constant 96 : index
    %382 = vector.load %arg12[%c40_128, %c96_129] : memref<64x128xf32, #tpu.memory_space<vmem>>, vector<8x32xf32>
    tpu.vector_store %arg12[%c40_128, %c96_129], %376 {strides = array<i32>} : memref<64x128xf32, #tpu.memory_space<vmem>>, vector<8x32xf32>,
    %c48 = arith.constant 48 : index
    %c0_130 = arith.constant 0 : index
    %383 = vector.load %arg14[%c48, %c0_130] : memref<64x128xf32, #tpu.memory_space<vmem>>, vector<8x128xf32>
    %cst_131 = arith.constant dense<0.000000e+00> : vector<8x128xf32>
    %384 = tpu.matmul %349, %7, %cst_131 {dimension_numbers = #tpu.dot_dimension_numbers<[1], [0], [0], [1], [0, 0, 1, 1], [], []>} : vector<8x32xf32>, vector<32x128xf32>, vector<8x128xf32> -> vector<8x128xf32>
    %385 = arith.addf %383, %384 : vector<8x128xf32>
    %386 = vector.extract_strided_slice %385 {offsets = [0, 0], sizes = [8, 32], strides = [1, 1]} : vector<8x128xf32> to vector<8x32xf32>
    %387 = arith.negf %386 : vector<8x32xf32>
    %388 = math.exp %387 : vector<8x32xf32>
    %cst_132 = arith.constant 1.000000e+00 : f32
    %389 = vector.broadcast %cst_132 : f32 to vector<8x32xf32>
    %390 = arith.addf %389, %388 : vector<8x32xf32>
    %391 = arith.divf %389, %390 : vector<8x32xf32>
    %392 = vector.extract_strided_slice %385 {offsets = [0, 32], sizes = [8, 32], strides = [1, 1]} : vector<8x128xf32> to vector<8x32xf32>
    %393 = arith.negf %392 : vector<8x32xf32>
    %394 = math.exp %393 : vector<8x32xf32>
    %cst_133 = arith.constant 1.000000e+00 : f32
    %395 = vector.broadcast %cst_133 : f32 to vector<8x32xf32>
    %396 = arith.addf %395, %394 : vector<8x32xf32>
    %397 = arith.divf %395, %396 : vector<8x32xf32>
    %398 = vector.extract_strided_slice %385 {offsets = [0, 64], sizes = [8, 32], strides = [1, 1]} : vector<8x128xf32> to vector<8x32xf32>
    %399 = math.tanh %398 : vector<8x32xf32>
    %400 = vector.extract_strided_slice %385 {offsets = [0, 96], sizes = [8, 32], strides = [1, 1]} : vector<8x128xf32> to vector<8x32xf32>
    %401 = arith.negf %400 : vector<8x32xf32>
    %402 = math.exp %401 : vector<8x32xf32>
    %cst_134 = arith.constant 1.000000e+00 : f32
    %403 = vector.broadcast %cst_134 : f32 to vector<8x32xf32>
    %404 = arith.addf %403, %402 : vector<8x32xf32>
    %405 = arith.divf %403, %404 : vector<8x32xf32>
    %406 = arith.mulf %397, %347 : vector<8x32xf32>
    %407 = arith.mulf %391, %399 : vector<8x32xf32>
    %408 = arith.addf %406, %407 : vector<8x32xf32>
    %409 = math.tanh %408 : vector<8x32xf32>
    %410 = arith.mulf %405, %409 : vector<8x32xf32>
    %cst_135 = arith.constant dense<0.000000e+00> : vector<8x128xf32>
    %411 = tpu.matmul %410, %8, %cst_135 {dimension_numbers = #tpu.dot_dimension_numbers<[1], [0], [0], [1], [0, 0, 1, 1], [], []>} : vector<8x32xf32>, vector<32x128xf32>, vector<8x128xf32> -> vector<8x128xf32>
    %cst_136 = arith.constant dense<0.000000e+00> : vector<8x128xf32>
    %412 = tpu.matmul %378, %9, %cst_136 {dimension_numbers = #tpu.dot_dimension_numbers<[1], [0], [0], [1], [0, 0, 1, 1], [], []>} : vector<8x32xf32>, vector<32x128xf32>, vector<8x128xf32> -> vector<8x128xf32>
    %413 = arith.addf %411, %412 : vector<8x128xf32>
    %414 = arith.addf %413, %12 : vector<8x128xf32>
    %415 = vector.extract_strided_slice %414 {offsets = [0, 0], sizes = [8, 32], strides = [1, 1]} : vector<8x128xf32> to vector<8x32xf32>
    %416 = arith.negf %415 : vector<8x32xf32>
    %417 = math.exp %416 : vector<8x32xf32>
    %cst_137 = arith.constant 1.000000e+00 : f32
    %418 = vector.broadcast %cst_137 : f32 to vector<8x32xf32>
    %419 = arith.addf %418, %417 : vector<8x32xf32>
    %420 = arith.divf %418, %419 : vector<8x32xf32>
    %421 = vector.extract_strided_slice %414 {offsets = [0, 32], sizes = [8, 32], strides = [1, 1]} : vector<8x128xf32> to vector<8x32xf32>
    %422 = arith.negf %421 : vector<8x32xf32>
    %423 = math.exp %422 : vector<8x32xf32>
    %cst_138 = arith.constant 1.000000e+00 : f32
    %424 = vector.broadcast %cst_138 : f32 to vector<8x32xf32>
    %425 = arith.addf %424, %423 : vector<8x32xf32>
    %426 = arith.divf %424, %425 : vector<8x32xf32>
    %427 = vector.extract_strided_slice %414 {offsets = [0, 64], sizes = [8, 32], strides = [1, 1]} : vector<8x128xf32> to vector<8x32xf32>
    %428 = math.tanh %427 : vector<8x32xf32>
    %429 = vector.extract_strided_slice %414 {offsets = [0, 96], sizes = [8, 32], strides = [1, 1]} : vector<8x128xf32> to vector<8x32xf32>
    %430 = arith.negf %429 : vector<8x32xf32>
    %431 = math.exp %430 : vector<8x32xf32>
    %cst_139 = arith.constant 1.000000e+00 : f32
    %432 = vector.broadcast %cst_139 : f32 to vector<8x32xf32>
    %433 = arith.addf %432, %431 : vector<8x32xf32>
    %434 = arith.divf %432, %433 : vector<8x32xf32>
    %435 = arith.mulf %426, %376 : vector<8x32xf32>
    %436 = arith.mulf %420, %428 : vector<8x32xf32>
    %437 = arith.addf %435, %436 : vector<8x32xf32>
    %438 = math.tanh %437 : vector<8x32xf32>
    %439 = arith.mulf %434, %438 : vector<8x32xf32>
    %c48_140 = arith.constant 48 : index
    %c0_141 = arith.constant 0 : index
    %440 = vector.load %arg12[%c48_140, %c0_141] : memref<64x128xf32, #tpu.memory_space<vmem>>, vector<8x32xf32>
    tpu.vector_store %arg12[%c48_140, %c0_141], %410 {strides = array<i32>} : memref<64x128xf32, #tpu.memory_space<vmem>>, vector<8x32xf32>,
    %c48_142 = arith.constant 48 : index
    %c32_143 = arith.constant 32 : index
    %441 = vector.load %arg12[%c48_142, %c32_143] : memref<64x128xf32, #tpu.memory_space<vmem>>, vector<8x32xf32>
    tpu.vector_store %arg12[%c48_142, %c32_143], %408 {strides = array<i32>} : memref<64x128xf32, #tpu.memory_space<vmem>>, vector<8x32xf32>,
    %c48_144 = arith.constant 48 : index
    %c64_145 = arith.constant 64 : index
    %442 = vector.load %arg12[%c48_144, %c64_145] : memref<64x128xf32, #tpu.memory_space<vmem>>, vector<8x32xf32>
    tpu.vector_store %arg12[%c48_144, %c64_145], %439 {strides = array<i32>} : memref<64x128xf32, #tpu.memory_space<vmem>>, vector<8x32xf32>,
    %c48_146 = arith.constant 48 : index
    %c96_147 = arith.constant 96 : index
    %443 = vector.load %arg12[%c48_146, %c96_147] : memref<64x128xf32, #tpu.memory_space<vmem>>, vector<8x32xf32>
    tpu.vector_store %arg12[%c48_146, %c96_147], %437 {strides = array<i32>} : memref<64x128xf32, #tpu.memory_space<vmem>>, vector<8x32xf32>,
    %c56 = arith.constant 56 : index
    %c0_148 = arith.constant 0 : index
    %444 = vector.load %arg14[%c56, %c0_148] : memref<64x128xf32, #tpu.memory_space<vmem>>, vector<8x128xf32>
    %cst_149 = arith.constant dense<0.000000e+00> : vector<8x128xf32>
    %445 = tpu.matmul %410, %7, %cst_149 {dimension_numbers = #tpu.dot_dimension_numbers<[1], [0], [0], [1], [0, 0, 1, 1], [], []>} : vector<8x32xf32>, vector<32x128xf32>, vector<8x128xf32> -> vector<8x128xf32>
    %446 = arith.addf %444, %445 : vector<8x128xf32>
    %447 = vector.extract_strided_slice %446 {offsets = [0, 0], sizes = [8, 32], strides = [1, 1]} : vector<8x128xf32> to vector<8x32xf32>
    %448 = arith.negf %447 : vector<8x32xf32>
    %449 = math.exp %448 : vector<8x32xf32>
    %cst_150 = arith.constant 1.000000e+00 : f32
    %450 = vector.broadcast %cst_150 : f32 to vector<8x32xf32>
    %451 = arith.addf %450, %449 : vector<8x32xf32>
    %452 = arith.divf %450, %451 : vector<8x32xf32>
    %453 = vector.extract_strided_slice %446 {offsets = [0, 32], sizes = [8, 32], strides = [1, 1]} : vector<8x128xf32> to vector<8x32xf32>
    %454 = arith.negf %453 : vector<8x32xf32>
    %455 = math.exp %454 : vector<8x32xf32>
    %cst_151 = arith.constant 1.000000e+00 : f32
    %456 = vector.broadcast %cst_151 : f32 to vector<8x32xf32>
    %457 = arith.addf %456, %455 : vector<8x32xf32>
    %458 = arith.divf %456, %457 : vector<8x32xf32>
    %459 = vector.extract_strided_slice %446 {offsets = [0, 64], sizes = [8, 32], strides = [1, 1]} : vector<8x128xf32> to vector<8x32xf32>
    %460 = math.tanh %459 : vector<8x32xf32>
    %461 = vector.extract_strided_slice %446 {offsets = [0, 96], sizes = [8, 32], strides = [1, 1]} : vector<8x128xf32> to vector<8x32xf32>
    %462 = arith.negf %461 : vector<8x32xf32>
    %463 = math.exp %462 : vector<8x32xf32>
    %cst_152 = arith.constant 1.000000e+00 : f32
    %464 = vector.broadcast %cst_152 : f32 to vector<8x32xf32>
    %465 = arith.addf %464, %463 : vector<8x32xf32>
    %466 = arith.divf %464, %465 : vector<8x32xf32>
    %467 = arith.mulf %458, %408 : vector<8x32xf32>
    %468 = arith.mulf %452, %460 : vector<8x32xf32>
    %469 = arith.addf %467, %468 : vector<8x32xf32>
    %470 = math.tanh %469 : vector<8x32xf32>
    %471 = arith.mulf %466, %470 : vector<8x32xf32>
    %cst_153 = arith.constant dense<0.000000e+00> : vector<8x128xf32>
    %472 = tpu.matmul %471, %8, %cst_153 {dimension_numbers = #tpu.dot_dimension_numbers<[1], [0], [0], [1], [0, 0, 1, 1], [], []>} : vector<8x32xf32>, vector<32x128xf32>, vector<8x128xf32> -> vector<8x128xf32>
    %cst_154 = arith.constant dense<0.000000e+00> : vector<8x128xf32>
    %473 = tpu.matmul %439, %9, %cst_154 {dimension_numbers = #tpu.dot_dimension_numbers<[1], [0], [0], [1], [0, 0, 1, 1], [], []>} : vector<8x32xf32>, vector<32x128xf32>, vector<8x128xf32> -> vector<8x128xf32>
    %474 = arith.addf %472, %473 : vector<8x128xf32>
    %475 = arith.addf %474, %12 : vector<8x128xf32>
    %476 = vector.extract_strided_slice %475 {offsets = [0, 0], sizes = [8, 32], strides = [1, 1]} : vector<8x128xf32> to vector<8x32xf32>
    %477 = arith.negf %476 : vector<8x32xf32>
    %478 = math.exp %477 : vector<8x32xf32>
    %cst_155 = arith.constant 1.000000e+00 : f32
    %479 = vector.broadcast %cst_155 : f32 to vector<8x32xf32>
    %480 = arith.addf %479, %478 : vector<8x32xf32>
    %481 = arith.divf %479, %480 : vector<8x32xf32>
    %482 = vector.extract_strided_slice %475 {offsets = [0, 32], sizes = [8, 32], strides = [1, 1]} : vector<8x128xf32> to vector<8x32xf32>
    %483 = arith.negf %482 : vector<8x32xf32>
    %484 = math.exp %483 : vector<8x32xf32>
    %cst_156 = arith.constant 1.000000e+00 : f32
    %485 = vector.broadcast %cst_156 : f32 to vector<8x32xf32>
    %486 = arith.addf %485, %484 : vector<8x32xf32>
    %487 = arith.divf %485, %486 : vector<8x32xf32>
    %488 = vector.extract_strided_slice %475 {offsets = [0, 64], sizes = [8, 32], strides = [1, 1]} : vector<8x128xf32> to vector<8x32xf32>
    %489 = math.tanh %488 : vector<8x32xf32>
    %490 = vector.extract_strided_slice %475 {offsets = [0, 96], sizes = [8, 32], strides = [1, 1]} : vector<8x128xf32> to vector<8x32xf32>
    %491 = arith.negf %490 : vector<8x32xf32>
    %492 = math.exp %491 : vector<8x32xf32>
    %cst_157 = arith.constant 1.000000e+00 : f32
    %493 = vector.broadcast %cst_157 : f32 to vector<8x32xf32>
    %494 = arith.addf %493, %492 : vector<8x32xf32>
    %495 = arith.divf %493, %494 : vector<8x32xf32>
    %496 = arith.mulf %487, %437 : vector<8x32xf32>
    %497 = arith.mulf %481, %489 : vector<8x32xf32>
    %498 = arith.addf %496, %497 : vector<8x32xf32>
    %499 = math.tanh %498 : vector<8x32xf32>
    %500 = arith.mulf %495, %499 : vector<8x32xf32>
    %c56_158 = arith.constant 56 : index
    %c0_159 = arith.constant 0 : index
    %501 = vector.load %arg12[%c56_158, %c0_159] : memref<64x128xf32, #tpu.memory_space<vmem>>, vector<8x32xf32>
    tpu.vector_store %arg12[%c56_158, %c0_159], %471 {strides = array<i32>} : memref<64x128xf32, #tpu.memory_space<vmem>>, vector<8x32xf32>,
    %c56_160 = arith.constant 56 : index
    %c32_161 = arith.constant 32 : index
    %502 = vector.load %arg12[%c56_160, %c32_161] : memref<64x128xf32, #tpu.memory_space<vmem>>, vector<8x32xf32>
    tpu.vector_store %arg12[%c56_160, %c32_161], %469 {strides = array<i32>} : memref<64x128xf32, #tpu.memory_space<vmem>>, vector<8x32xf32>,
    %c56_162 = arith.constant 56 : index
    %c64_163 = arith.constant 64 : index
    %503 = vector.load %arg12[%c56_162, %c64_163] : memref<64x128xf32, #tpu.memory_space<vmem>>, vector<8x32xf32>
    tpu.vector_store %arg12[%c56_162, %c64_163], %500 {strides = array<i32>} : memref<64x128xf32, #tpu.memory_space<vmem>>, vector<8x32xf32>,
    %c56_164 = arith.constant 56 : index
    %c96_165 = arith.constant 96 : index
    %504 = vector.load %arg12[%c56_164, %c96_165] : memref<64x128xf32, #tpu.memory_space<vmem>>, vector<8x32xf32>
    tpu.vector_store %arg12[%c56_164, %c96_165], %498 {strides = array<i32>} : memref<64x128xf32, #tpu.memory_space<vmem>>, vector<8x32xf32>,
    %c0_166 = arith.constant 0 : index
    %c0_167 = arith.constant 0 : index
    %505 = vector.load %arg12[%c0_166, %c0_167] : memref<64x128xf32, #tpu.memory_space<vmem>>, vector<64x128xf32>
    %c0_168 = arith.constant 0 : index
    %c0_169 = arith.constant 0 : index
    %506 = vector.load %arg9[%c0_168, %c0_169] : memref<128x16xf32, #tpu.memory_space<vmem>>, vector<128x16xf32>
    %cst_170 = arith.constant dense<0.000000e+00> : vector<64x16xf32>
    %507 = tpu.matmul %505, %506, %cst_170 {dimension_numbers = #tpu.dot_dimension_numbers<[1], [0], [0], [1], [0, 0, 1, 1], [], []>} : vector<64x128xf32>, vector<128x16xf32>, vector<64x16xf32> -> vector<64x16xf32>
    %c0_171 = arith.constant 0 : index
    %c0_172 = arith.constant 0 : index
    %508 = vector.load %arg8[%c0_171, %c0_172] : memref<64x24xf32, #tpu.memory_space<vmem>>, vector<64x24xf32>
    %c0_173 = arith.constant 0 : index
    %c0_174 = arith.constant 0 : index
    %509 = vector.load %arg10[%c0_173, %c0_174] : memref<24x16xf32, #tpu.memory_space<vmem>>, vector<24x16xf32>
    %cst_175 = arith.constant dense<0.000000e+00> : vector<64x16xf32>
    %510 = tpu.matmul %508, %509, %cst_175 {dimension_numbers = #tpu.dot_dimension_numbers<[1], [0], [0], [1], [0, 0, 1, 1], [], []>} : vector<64x24xf32>, vector<24x16xf32>, vector<64x16xf32> -> vector<64x16xf32>
    %511 = arith.addf %507, %510 : vector<64x16xf32>
    %c0_176 = arith.constant 0 : index
    %c0_177 = arith.constant 0 : index
    %512 = vector.load %arg11[%c0_176, %c0_177] : memref<1x16xf32, #tpu.memory_space<vmem>>, vector<1x16xf32>
    %513 = vector.broadcast %512 : vector<1x16xf32> to vector<64x16xf32>
    %514 = arith.addf %511, %513 : vector<64x16xf32>
    %515 = arith.negf %514 : vector<64x16xf32>
    %516 = math.exp %515 : vector<64x16xf32>
    %cst_178 = arith.constant 1.000000e+00 : f32
    %517 = vector.broadcast %cst_178 : f32 to vector<64x16xf32>
    %518 = arith.addf %517, %516 : vector<64x16xf32>
    %519 = arith.divf %517, %518 : vector<64x16xf32>
    %c0_179 = arith.constant 0 : index
    %c0_180 = arith.constant 0 : index
    %520 = vector.load %arg13[%c0_179, %c0_180] : memref<64x16xf32, #tpu.memory_space<vmem>>, vector<64x16xf32>
    tpu.vector_store %arg13[%c0_179, %c0_180], %519 {strides = array<i32>} : memref<64x16xf32, #tpu.memory_space<vmem>>, vector<64x16xf32>,
    return
  }
}

</mosaic_0001>

<llo_original>
// kernel: controller_rollout.1
$region0: #{controller_rollout.1}
  #allocation0 [shape = 'u32[]', space=smem, size = 0x4, offset = 0x4, fixed_abs, tag = 'smem constant byte address 0x4 - core index']
  #allocation1 [shape = 'u32[144,128]{1,0:T(1,128)}', space=vmem, size = 0x12000, scoped, tag = 'internal scratch']
  #allocation2 [shape = 'f32[64,128]{1,0:T(8,128)}', space=vmem, size = 0x8000, scoped, tag = 'scratch operand']
  %s0 = inlined_call_operand.vmem [shape: f32[64,32], index: 0, kind: input, shape index: {}]
  %s1 = inlined_call_operand.hbm [shape: f32[8,128], index: 1, kind: input, shape index: {}]
  %s2 = inlined_call_operand.vmem [shape: f32[32,128], index: 2, kind: input, shape index: {}]
  %s3 = inlined_call_operand.vmem [shape: f32[32,128], index: 3, kind: input, shape index: {}]
  %s4 = inlined_call_operand.vmem [shape: f32[1,128], index: 4, kind: input, shape index: {}]
  %s5 = inlined_call_operand.vmem [shape: f32[32,128], index: 5, kind: input, shape index: {}]
  %s6 = inlined_call_operand.hbm [shape: f32[32,128], index: 6, kind: input, shape index: {}]
  %s7 = inlined_call_operand.hbm [shape: f32[1,128], index: 7, kind: input, shape index: {}]
  %s8 = inlined_call_operand.vmem [shape: f32[64,24], index: 8, kind: input, shape index: {}]
  %s9 = inlined_call_operand.vmem [shape: f32[128,16], index: 9, kind: input, shape index: {}]
  %s10 = inlined_call_operand.vmem [shape: f32[24,16], index: 10, kind: input, shape index: {}]
  %s11 = inlined_call_operand.hbm [shape: f32[1,16], index: 11, kind: input, shape index: {}]
  %s12 = inlined_call_operand.hbm [shape: f32[64,128], index: 12, kind: output, shape index: {0}]
  %s13 = inlined_call_operand.hbm [shape: f32[64,16], index: 13, kind: output, shape index: {1}]
  %14 = xla_tuple %s12, %s13
  %s15 = sld [smem:[#allocation0]]
  $region82: #{controller_rollout.1} parent=0
    _
  %s17 = ssub.s32 1, %s15
  %s18 = scalar_select 0, %s17, %s15
  $region1: #{controller_rollout.1} parent=0
    #allocation3 [shape = 'u8[4096]{0}', space=vmem, size = 0x1000, scoped, tag = 'input window, operand 1, single buffered']
    #allocation4 [shape = 's32[1]{0}', space=sflag, size = 0x4, scoped, tag = 'scoped memory for controller_rollout.1']
    #allocation5 [shape = 's32[1]{0}', space=sflag, size = 0x4, scoped, tag = 'scoped memory for controller_rollout.1']
    #allocation6 [shape = 'u8[16384]{0}', space=vmem, size = 0x4000, scoped, tag = 'input window, operand 6, single buffered']
    #allocation7 [shape = 's32[1]{0}', space=sflag, size = 0x4, scoped, tag = 'scoped memory for controller_rollout.1']
    #allocation8 [shape = 'u8[512]{0}', space=vmem, size = 0x400, scoped, tag = 'input window, operand 7, single buffered']
    #allocation9 [shape = 'u8[512]{0}', space=vmem, size = 0x400, scoped, tag = 'input window, operand 11, single buffered']
    #allocation10 [shape = 's32[1]{0}', space=sflag, size = 0x4, scoped, tag = 'scoped memory for controller_rollout.1']
    #allocation11 [shape = 'u8[32768]{0}', space=vmem, size = 0x8000, scoped, tag = 'output window, operand 0, single buffered']
    #allocation12 [shape = 'u8[32768]{0}', space=vmem, size = 0x8000, scoped, tag = 'output window, operand 1, single buffered']
    #allocation13 [shape = 's32[1]{0}', space=sflag, size = 0x4, scoped, tag = 'scoped memory for controller_rollout.1']
    %19 = vsyncpa [#allocation4], 0
    %20 = vsyncpa [#allocation7], 0
    %21 = vsyncpa [#allocation10], 0
    %22 = vsyncpa [#allocation5], 0
    %23 = vsyncpa [#allocation13], 0
    // Predicated region
    $region2: #{controller_rollout.1} parent=1 // pred_check
      _
    $region3: #{controller_rollout.1} parent=1 // pred_check_branch
      %25 = sbr.rel (0) target = $region5
    $region4: #{controller_rollout.1} parent=1 // pred_region
      _
    $region5: #{controller_rollout.1} parent=1 // pred_fallthru
      _
    // Predicated region
    $region6: #{controller_rollout.1} parent=1 // pred_check
      _
    $region7: #{controller_rollout.1} parent=1 // pred_check_branch
      %27 = sbr.rel (0) target = $region9
    $region8: #{controller_rollout.1} parent=1 // pred_region
      %s29 = ssub.s32 128, 128
      %30 = vsyncadd [#allocation4], %s29
      %s32 = sshll.u32 [#allocation3], 4
      %s33 = int_to_ptr.vmem [resolvable:$true] %s32
      %35 = dma.hbm_to_vmem [thread:$0]  %s1, 128, %s33, [#allocation4]
    $region9: #{controller_rollout.1} parent=1 // pred_fallthru
      _
    // Predicated region
    $region10: #{controller_rollout.1} parent=1 // pred_check
      _
    $region11: #{controller_rollout.1} parent=1 // pred_check_branch
      %37 = sbr.rel (0) target = $region13
    $region12: #{controller_rollout.1} parent=1 // pred_region
      _
    $region13: #{controller_rollout.1} parent=1 // pred_fallthru
      _
    // Predicated region
    $region14: #{controller_rollout.1} parent=1 // pred_check
      _
    $region15: #{controller_rollout.1} parent=1 // pred_check_branch
      %39 = sbr.rel (0) target = $region17
    $region16: #{controller_rollout.1} parent=1 // pred_region
      _
    $region17: #{controller_rollout.1} parent=1 // pred_fallthru
      _
    // Predicated region
    $region18: #{controller_rollout.1} parent=1 // pred_check
      _
    $region19: #{controller_rollout.1} parent=1 // pred_check_branch
      %41 = sbr.rel (0) target = $region21
    $region20: #{controller_rollout.1} parent=1 // pred_region
      _
    $region21: #{controller_rollout.1} parent=1 // pred_fallthru
      _
    // Predicated region
    $region22: #{controller_rollout.1} parent=1 // pred_check
      _
    $region23: #{controller_rollout.1} parent=1 // pred_check_branch
      %43 = sbr.rel (0) target = $region25
    $region24: #{controller_rollout.1} parent=1 // pred_region
      _
    $region25: #{controller_rollout.1} parent=1 // pred_fallthru
      _
    // Predicated region
    $region26: #{controller_rollout.1} parent=1 // pred_check
      _
    $region27: #{controller_rollout.1} parent=1 // pred_check_branch
      %45 = sbr.rel (0) target = $region29
    $region28: #{controller_rollout.1} parent=1 // pred_region
      %s47 = ssub.s32 512, 512
      %48 = vsyncadd [#allocation7], %s47
      %s49 = sshll.u32 [#allocation6], 4
      %s50 = int_to_ptr.vmem [resolvable:$true] %s49
      %55 = dma.hbm_to_vmem [thread:$0]  %s6, 512, %s50, [#allocation7], 128, 128, 8
    $region29: #{controller_rollout.1} parent=1 // pred_fallthru
      _
    // Predicated region
    $region30: #{controller_rollout.1} parent=1 // pred_check
      _
    $region31: #{controller_rollout.1} parent=1 // pred_check_branch
      %57 = sbr.rel (0) target = $region33
    $region32: #{controller_rollout.1} parent=1 // pred_region
      %s59 = ssub.s32 16, 16
      %60 = vsyncadd [#allocation7], %s59
      %s62 = sshll.u32 [#allocation8], 4
      %s63 = int_to_ptr.vmem [resolvable:$true] %s62
      %65 = dma.hbm_to_vmem [thread:$0]  %s7, 16, %s63, [#allocation7]
    $region33: #{controller_rollout.1} parent=1 // pred_fallthru
      _
    // Predicated region
    $region34: #{controller_rollout.1} parent=1 // pred_check
      _
    $region35: #{controller_rollout.1} parent=1 // pred_check_branch
      %67 = sbr.rel (0) target = $region37
    $region36: #{controller_rollout.1} parent=1 // pred_region
      _
    $region37: #{controller_rollout.1} parent=1 // pred_fallthru
      _
    // Predicated region
    $region38: #{controller_rollout.1} parent=1 // pred_check
      _
    $region39: #{controller_rollout.1} parent=1 // pred_check_branch
      %69 = sbr.rel (0) target = $region41
    $region40: #{controller_rollout.1} parent=1 // pred_region
      _
    $region41: #{controller_rollout.1} parent=1 // pred_fallthru
      _
    // Predicated region
    $region42: #{controller_rollout.1} parent=1 // pred_check
      _
    $region43: #{controller_rollout.1} parent=1 // pred_check_branch
      %71 = sbr.rel (0) target = $region45
    $region44: #{controller_rollout.1} parent=1 // pred_region
      _
    $region45: #{controller_rollout.1} parent=1 // pred_fallthru
      _
    // Predicated region
    $region46: #{controller_rollout.1} parent=1 // pred_check
      _
    $region47: #{controller_rollout.1} parent=1 // pred_check_branch
      %73 = sbr.rel (0) target = $region49
    $region48: #{controller_rollout.1} parent=1 // pred_region
      %s75 = ssub.s32 16, 16
      %76 = vsyncadd [#allocation10], %s75
      %s78 = sshll.u32 [#allocation9], 4
      %s79 = int_to_ptr.vmem [resolvable:$true] %s78
      %81 = dma.hbm_to_vmem [thread:$0]  %s11, 16, %s79, [#allocation10]
    $region49: #{controller_rollout.1} parent=1 // pred_fallthru
      _
    // Predicated region
    $region50: #{controller_rollout.1} parent=1 // pred_check
      _
    $region51: #{controller_rollout.1} parent=1 // pred_check_branch
      %83 = sbr.rel (0) target = $region53
    $region52: #{controller_rollout.1} parent=1 // pred_region
      %84 = dma.done [#allocation4], 128
    $region53: #{controller_rollout.1} parent=1 // pred_fallthru
      _
    // Predicated region
    $region54: #{controller_rollout.1} parent=1 // pred_check
      _
    $region55: #{controller_rollout.1} parent=1 // pred_check_branch
      %86 = sbr.rel (0) target = $region57
    $region56: #{controller_rollout.1} parent=1 // pred_region
      %87 = dma.done [#allocation7], 512
    $region57: #{controller_rollout.1} parent=1 // pred_fallthru
      _
    // Predicated region
    $region58: #{controller_rollout.1} parent=1 // pred_check
      _
    $region59: #{controller_rollout.1} parent=1 // pred_check_branch
      %89 = sbr.rel (0) target = $region61
    $region60: #{controller_rollout.1} parent=1 // pred_region
      %90 = dma.done [#allocation7], 16
    $region61: #{controller_rollout.1} parent=1 // pred_fallthru
      _
    // Predicated region
    $region62: #{controller_rollout.1} parent=1 // pred_check
      _
    $region63: #{controller_rollout.1} parent=1 // pred_check_branch
      %92 = sbr.rel (0) target = $region65
    $region64: #{controller_rollout.1} parent=1 // pred_region
      %93 = dma.done [#allocation10], 16
    $region65: #{controller_rollout.1} parent=1 // pred_fallthru
      _
    %v94 = vld [vmem:[%s0] sm:$0xff]
    %v95 = vld [vmem:[%s0 + $0x8] sm:$0xff]
    %v96 = vld [vmem:[%s0 + $0x10] sm:$0xff]
    %v97 = vld [vmem:[%s0 + $0x18] sm:$0xff]
    %v98 = vld [vmem:[%s0 + $0x20] sm:$0xff]
    %v99 = vld [vmem:[%s0 + $0x28] sm:$0xff]
    %v100 = vld [vmem:[%s0 + $0x30] sm:$0xff]
    %v101 = vld [vmem:[%s0 + $0x38] sm:$0xff]
    %v102 = vld [vmem:[%s2] sm:$0xff]
    %v103 = vld [vmem:[%s2 + $0x8] sm:$0xff]
    %v104 = vld [vmem:[%s2 + $0x10] sm:$0xff]
    %v105 = vld [vmem:[%s2 + $0x18] sm:$0xff]
    %v106 = vld [vmem:[%s4] sm:$0x1]
    %v108 = vlaneseq
    %v109 = vshrl.u32 %v108, 7
    %v110 = vsub.s32 0, %v109
    %v111 = vrot.slane %v106, %v110
    %vm113 = vcmask 261120
    %v115 = vsel %vm113, %v94, 0
    %v118 = vsel %vm113, %v95, 0
    %v121 = vsel %vm113, %v96, 0
    %v124 = vsel %vm113, %v97, 0
    %v127 = vsel %vm113, %v98, 0
    %v130 = vsel %vm113, %v99, 0
    %v133 = vsel %vm113, %v100, 0
    %v136 = vsel %vm113, %v101, 0
    %138 = vmatprep.subr.mxu0 0.0
    %139 = vmatpush1.msra.mxu0 %v102
    %140 = vmatprep.subr.mxu0 0.0
    %141 = vmatpush1.msra.mxu0 %v103
    %142 = vmatprep.subr.mxu0 0.0
    %143 = vmatpush1.msra.mxu0 %v104
    %144 = vmatprep.subr.mxu0 0.0
    %145 = vmatpush1.msra.mxu0 %v105
    %146 = vmatprep.subr.mxu0 0.0
    %147 = vmatpush1.msra.mxu0 0.0
    %148 = vmatprep.subr.mxu0 0.0
    %149 = vmatpush1.msra.mxu0 0.0
    %150 = vmatprep.subr.mxu0 0.0
    %151 = vmatpush1.msra.mxu0 0.0
    %152 = vmatprep.subr.mxu0 0.0
    %153 = vmatpush1.msra.mxu0 0.0
    %154 = vmatprep.subr.mxu0 0.0
    %155 = vmatpush1.msra.mxu0 0.0
    %156 = vmatprep.subr.mxu0 0.0
    %157 = vmatpush1.msra.mxu0 0.0
    %158 = vmatprep.subr.mxu0 0.0
    %159 = vmatpush1.msra.mxu0 0.0
    %160 = vmatprep.subr.mxu0 0.0
    %161 = vmatpush1.msra.mxu0 0.0
    %162 = vmatprep.subr.mxu0 0.0
    %163 = vmatpush1.msra.mxu0 0.0
    %164 = vmatprep.subr.mxu0 0.0
    %165 = vmatpush1.msra.mxu0 0.0
    %166 = vmatprep.subr.mxu0 0.0
    %167 = vmatpush1.msra.mxu0 0.0
    %168 = vmatprep.subr.mxu0 0.0
    %169 = vmatpush1.msra.mxu0 0.0
    %170 = vmatprep.subr.mxu0 0.0
    %171 = vmatpush1.msra.mxu0 0.0
    %172 = vmatprep.subr.mxu0 0.0
    %173 = vmatpush1.msra.mxu0 0.0
    %174 = vmatprep.subr.mxu0 0.0
    %175 = vmatpush1.msra.mxu0 0.0
    %176 = vmatprep.subr.mxu0 0.0
    %177 = vmatpush1.msra.mxu0 0.0
    %178 = vmatprep.subr.mxu0 0.0
    %179 = vmatpush1.msra.mxu0 0.0
    %180 = vmatprep.subr.mxu0 0.0
    %181 = vmatpush1.msra.mxu0 0.0
    %182 = vmatprep.subr.mxu0 0.0
    %183 = vmatpush1.msra.mxu0 0.0
    %184 = vmatprep.subr.mxu0 0.0
    %185 = vmatpush1.msra.mxu0 0.0
    %186 = vmatprep.subr.mxu0 0.0
    %187 = vmatpush1.msra.mxu0 0.0
    %188 = vmatprep.subr.mxu0 0.0
    %189 = vmatpush1.msra.mxu0 0.0
    %190 = vmatprep.subr.mxu0 0.0
    %191 = vmatpush1.msra.mxu0 0.0
    %192 = vmatprep.subr.mxu0 0.0
    %193 = vmatpush1.msra.mxu0 0.0
    %194 = vmatprep.subr.mxu0 0.0
    %195 = vmatpush1.msra.mxu0 0.0
    %196 = vmatprep.subr.mxu0 0.0
    %197 = vmatpush1.msra.mxu0 0.0
    %198 = vmatprep.subr.mxu0 0.0
    %199 = vmatpush1.msra.mxu0 0.0
    %200 = vmatprep.subr.mxu0 0.0
    %201 = vmatpush1.msra.mxu0 0.0
    %202 = vmatprep.mubr.f32.mxu0 0.0
    %203 = vmatmul.mubr.f32.gmra.mrb[0].mxu0 %v115
    %v204 = vpop.f32.mrb[0].mxu0
    %v205 = vadd.f32 %v111, %v204
    %v206 = vpop.f32.mrb[0].mxu0
    %207 = vmatprep.mubr.f32.mxu0 0.0
    %208 = vmatmul.mubr.f32.gmra.mrb[0].mxu0 %v118
    %v209 = vpop.f32.mrb[0].mxu0
    %v210 = vadd.f32 %v111, %v209
    %v211 = vpop.f32.mrb[0].mxu0
    %212 = vmatprep.mubr.f32.mxu0 0.0
    %213 = vmatmul.mubr.f32.gmra.mrb[0].mxu0 %v121
    %v214 = vpop.f32.mrb[0].mxu0
    %v215 = vadd.f32 %v111, %v214
    %v216 = vpop.f32.mrb[0].mxu0
    %217 = vmatprep.mubr.f32.mxu0 0.0
    %218 = vmatmul.mubr.f32.gmra.mrb[0].mxu0 %v124
    %v219 = vpop.f32.mrb[0].mxu0
    %v220 = vadd.f32 %v111, %v219
    %v221 = vpop.f32.mrb[0].mxu0
    %222 = vmatprep.mubr.f32.mxu0 0.0
    %223 = vmatmul.mubr.f32.gmra.mrb[0].mxu0 %v127
    %v224 = vpop.f32.mrb[0].mxu0
    %v225 = vadd.f32 %v111, %v224
    %v226 = vpop.f32.mrb[0].mxu0
    %227 = vmatprep.mubr.f32.mxu0 0.0
    %228 = vmatmul.mubr.f32.gmra.mrb[0].mxu0 %v130
    %v229 = vpop.f32.mrb[0].mxu0
    %v230 = vadd.f32 %v111, %v229
    %v231 = vpop.f32.mrb[0].mxu0
    %232 = vmatprep.mubr.f32.mxu0 0.0
    %233 = vmatmul.mubr.f32.gmra.mrb[0].mxu0 %v133
    %v234 = vpop.f32.mrb[0].mxu0
    %v235 = vadd.f32 %v111, %v234
    %v236 = vpop.f32.mrb[0].mxu0
    %237 = vmatprep.mubr.f32.mxu0 0.0
    %238 = vmatmul.mubr.f32.gmra.mrb[0].mxu0 %v136
    %v239 = vpop.f32.mrb[0].mxu0
    %v240 = vadd.f32 %v111, %v239
    %v241 = vpop.f32.mrb[0].mxu0
    %242 = vdwg.mxu0
    %243 = vst [vmem:[#allocation2] sm:$0xff] %v205
    %244 = vst [vmem:[#allocation2 + $0x8] sm:$0xff] %v210
    %245 = vst [vmem:[#allocation2 + $0x10] sm:$0xff] %v215
    %246 = vst [vmem:[#allocation2 + $0x18] sm:$0xff] %v220
    %247 = vst [vmem:[#allocation2 + $0x20] sm:$0xff] %v225
    %248 = vst [vmem:[#allocation2 + $0x28] sm:$0xff] %v230
    %249 = vst [vmem:[#allocation2 + $0x30] sm:$0xff] %v235
    %250 = vst [vmem:[#allocation2 + $0x38] sm:$0xff] %v240
    %v251 = vld [vmem:[%s3] sm:$0xff]
    %v252 = vld [vmem:[%s3 + $0x8] sm:$0xff]
    %v253 = vld [vmem:[%s3 + $0x10] sm:$0xff]
    %v254 = vld [vmem:[%s3 + $0x18] sm:$0xff]
    %v255 = vld [vmem:[%s5] sm:$0xff]
    %v256 = vld [vmem:[%s5 + $0x8] sm:$0xff]
    %v257 = vld [vmem:[%s5 + $0x10] sm:$0xff]
    %v258 = vld [vmem:[%s5 + $0x18] sm:$0xff]
    %v259 = vld [vmem:[#allocation6] sm:$0xff]
    %v260 = vld [vmem:[#allocation6 + $0x8] sm:$0xff]
    %v261 = vld [vmem:[#allocation6 + $0x10] sm:$0xff]
    %v262 = vld [vmem:[#allocation6 + $0x18] sm:$0xff]
    %v263 = vld [vmem:[#allocation8] sm:$0x1]
    %v265 = vlaneseq
    %v266 = vshrl.u32 %v265, 7
    %v267 = vsub.s32 0, %v266
    %v268 = vrot.slane %v263, %v267
    %v270 = vld [vmem:[#allocation3] sm:$0xff]
    %v271 = vld [vmem:[#allocation2] sm:$0xff]
    %v273 = vsel %vm113, %v270, 0
    %275 = vmatprep.subr.mxu0 0.0
    %276 = vmatpush1.msra.mxu0 %v251
    %277 = vmatprep.subr.mxu0 0.0
    %278 = vmatpush1.msra.mxu0 %v252
    %279 = vmatprep.subr.mxu0 0.0
    %280 = vmatpush1.msra.mxu0 %v253
    %281 = vmatprep.subr.mxu0 0.0
    %282 = vmatpush1.msra.mxu0 %v254
    %283 = vmatprep.subr.mxu0 0.0
    %284 = vmatpush1.msra.mxu0 0.0
    %285 = vmatprep.subr.mxu0 0.0
    %286 = vmatpush1.msra.mxu0 0.0
    %287 = vmatprep.subr.mxu0 0.0
    %288 = vmatpush1.msra.mxu0 0.0
    %289 = vmatprep.subr.mxu0 0.0
    %290 = vmatpush1.msra.mxu0 0.0
    %291 = vmatprep.subr.mxu0 0.0
    %292 = vmatpush1.msra.mxu0 0.0
    %293 = vmatprep.subr.mxu0 0.0
    %294 = vmatpush1.msra.mxu0 0.0
    %295 = vmatprep.subr.mxu0 0.0
    %296 = vmatpush1.msra.mxu0 0.0
    %297 = vmatprep.subr.mxu0 0.0
    %298 = vmatpush1.msra.mxu0 0.0
    %299 = vmatprep.subr.mxu0 0.0
    %300 = vmatpush1.msra.mxu0 0.0
    %301 = vmatprep.subr.mxu0 0.0
    %302 = vmatpush1.msra.mxu0 0.0
    %303 = vmatprep.subr.mxu0 0.0
    %304 = vmatpush1.msra.mxu0 0.0
    %305 = vmatprep.subr.mxu0 0.0
    %306 = vmatpush1.msra.mxu0 0.0
    %307 = vmatprep.subr.mxu0 0.0
    %308 = vmatpush1.msra.mxu0 0.0
    %309 = vmatprep.subr.mxu0 0.0
    %310 = vmatpush1.msra.mxu0 0.0
    %311 = vmatprep.subr.mxu0 0.0
    %312 = vmatpush1.msra.mxu0 0.0
    %313 = vmatprep.subr.mxu0 0.0
    %314 = vmatpush1.msra.mxu0 0.0
    %315 = vmatprep.subr.mxu0 0.0
    %316 = vmatpush1.msra.mxu0 0.0
    %317 = vmatprep.subr.mxu0 0.0
    %318 = vmatpush1.msra.mxu0 0.0
    %319 = vmatprep.subr.mxu0 0.0
    %320 = vmatpush1.msra.mxu0 0.0
    %321 = vmatprep.subr.mxu0 0.0
    %322 = vmatpush1.msra.mxu0 0.0
    %323 = vmatprep.subr.mxu0 0.0
    %324 = vmatpush1.msra.mxu0 0.0
    %325 = vmatprep.subr.mxu0 0.0
    %326 = vmatpush1.msra.mxu0 0.0
    %327 = vmatprep.subr.mxu0 0.0
    %328 = vmatpush1.msra.mxu0 0.0
    %329 = vmatprep.subr.mxu0 0.0
    %330 = vmatpush1.msra.mxu0 0.0
    %331 = vmatprep.subr.mxu0 0.0
    %332 = vmatpush1.msra.mxu0 0.0
    %333 = vmatprep.subr.mxu0 0.0
    %334 = vmatpush1.msra.mxu0 0.0
    %335 = vmatprep.subr.mxu0 0.0
    %336 = vmatpush1.msra.mxu0 0.0
    %337 = vmatprep.subr.mxu0 0.0
    %338 = vmatpush1.msra.mxu0 0.0
    %339 = vmatprep.mubr.f32.mxu0 0.0
    %340 = vmatmul.mubr.f32.gmra.mrb[0].mxu0 %v273
    %v341 = vpop.f32.mrb[0].mxu0
    %v342 = vadd.f32 0.0, %v341
    %v343 = vpop.f32.mrb[0].mxu0
    %344 = vdwg.mxu0
    %v345 = vadd.f32 %v271, %v342
    %v346 = vxor.u32 %v345, 2147483648
    %v347 = vmul.f32 %v346, 1.442695
    %v348 = vpow.pop %v347
    %v349 = vadd.f32 %v348, 1.0
    %v350 = vrcp.pop %v349
    %v351 = vmul.f32 1.0, %v350
    %v352 = vtanh.pop %v345
    %v353 = vmul.f32 %v351, %v270
    %355 = vrot.lane.b32.xlu0 %v352, 64
    %v356 = vpop.permute.xlu0 %355
    %v358 = vmul.f32 %v351, %v356
    %360 = vrot.lane.b32.xlu0 %v358, 32
    %v361 = vpop.permute.xlu0 %360
    %v363 = vadd.f32 %v353, %v361
    %v364 = vtanh.pop %v363
    %366 = vrot.lane.b32.xlu0 %v364, 64
    %v367 = vpop.permute.xlu0 %366
    %v369 = vmul.f32 %v351, %v367
    %370 = vrot.lane.b32.xlu0 %v270, 64
    %v371 = vpop.permute.xlu0 %370
    %v372 = vsel %vm113, %v371, 0
    %374 = vmatprep.subr.mxu0 0.0
    %375 = vmatpush1.msra.mxu0 %v259
    %376 = vmatprep.subr.mxu0 0.0
    %377 = vmatpush1.msra.mxu0 %v260
    %378 = vmatprep.subr.mxu0 0.0
    %379 = vmatpush1.msra.mxu0 %v261
    %380 = vmatprep.subr.mxu0 0.0
    %381 = vmatpush1.msra.mxu0 %v262
    %382 = vmatprep.subr.mxu0 0.0
    %383 = vmatpush1.msra.mxu0 0.0
    %384 = vmatprep.subr.mxu0 0.0
    %385 = vmatpush1.msra.mxu0 0.0
    %386 = vmatprep.subr.mxu0 0.0
    %387 = vmatpush1.msra.mxu0 0.0
    %388 = vmatprep.subr.mxu0 0.0
    %389 = vmatpush1.msra.mxu0 0.0
    %390 = vmatprep.subr.mxu0 0.0
    %391 = vmatpush1.msra.mxu0 0.0
    %392 = vmatprep.subr.mxu0 0.0
    %393 = vmatpush1.msra.mxu0 0.0
    %394 = vmatprep.subr.mxu0 0.0
    %395 = vmatpush1.msra.mxu0 0.0
    %396 = vmatprep.subr.mxu0 0.0
    %397 = vmatpush1.msra.mxu0 0.0
    %398 = vmatprep.subr.mxu0 0.0
    %399 = vmatpush1.msra.mxu0 0.0
    %400 = vmatprep.subr.mxu0 0.0
    %401 = vmatpush1.msra.mxu0 0.0
    %402 = vmatprep.subr.mxu0 0.0
    %403 = vmatpush1.msra.mxu0 0.0
    %404 = vmatprep.subr.mxu0 0.0
    %405 = vmatpush1.msra.mxu0 0.0
    %406 = vmatprep.subr.mxu0 0.0
    %407 = vmatpush1.msra.mxu0 0.0
    %408 = vmatprep.subr.mxu0 0.0
    %409 = vmatpush1.msra.mxu0 0.0
    %410 = vmatprep.subr.mxu0 0.0
    %411 = vmatpush1.msra.mxu0 0.0
    %412 = vmatprep.subr.mxu0 0.0
    %413 = vmatpush1.msra.mxu0 0.0
    %414 = vmatprep.subr.mxu0 0.0
    %415 = vmatpush1.msra.mxu0 0.0
    %416 = vmatprep.subr.mxu0 0.0
    %417 = vmatpush1.msra.mxu0 0.0
    %418 = vmatprep.subr.mxu0 0.0
    %419 = vmatpush1.msra.mxu0 0.0
    %420 = vmatprep.subr.mxu0 0.0
    %421 = vmatpush1.msra.mxu0 0.0
    %422 = vmatprep.subr.mxu0 0.0
    %423 = vmatpush1.msra.mxu0 0.0
    %424 = vmatprep.subr.mxu0 0.0
    %425 = vmatpush1.msra.mxu0 0.0
    %426 = vmatprep.subr.mxu0 0.0
    %427 = vmatpush1.msra.mxu0 0.0
    %428 = vmatprep.subr.mxu0 0.0
    %429 = vmatpush1.msra.mxu0 0.0
    %430 = vmatprep.subr.mxu0 0.0
    %431 = vmatpush1.msra.mxu0 0.0
    %432 = vmatprep.subr.mxu0 0.0
    %433 = vmatpush1.msra.mxu0 0.0
    %434 = vmatprep.subr.mxu0 0.0
    %435 = vmatpush1.msra.mxu0 0.0
    %436 = vmatprep.subr.mxu0 0.0
    %437 = vmatpush1.msra.mxu0 0.0
    %438 = vmatprep.mubr.f32.mxu0 0.0
    %439 = vmatmul.mubr.f32.gmra.mrb[0].mxu0 %v372
    %v440 = vpop.f32.mrb[0].mxu0
    %v441 = vadd.f32 0.0, %v440
    %v442 = vpop.f32.mrb[0].mxu0
    %443 = vdwg.mxu0
    %445 = vrot.lane.b32.xlu0 %v369, 32
    %v446 = vpop.permute.xlu0 %445
    %v447 = vsel %vm113, %v446, 0
    %449 = vmatprep.subr.mxu0 0.0
    %450 = vmatpush1.msra.mxu0 %v255
    %451 = vmatprep.subr.mxu0 0.0
    %452 = vmatpush1.msra.mxu0 %v256
    %453 = vmatprep.subr.mxu0 0.0
    %454 = vmatpush1.msra.mxu0 %v257
    %455 = vmatprep.subr.mxu0 0.0
    %456 = vmatpush1.msra.mxu0 %v258
    %457 = vmatprep.subr.mxu0 0.0
    %458 = vmatpush1.msra.mxu0 0.0
    %459 = vmatprep.subr.mxu0 0.0
    %460 = vmatpush1.msra.mxu0 0.0
    %461 = vmatprep.subr.mxu0 0.0
    %462 = vmatpush1.msra.mxu0 0.0
    %463 = vmatprep.subr.mxu0 0.0
    %464 = vmatpush1.msra.mxu0 0.0
    %465 = vmatprep.subr.mxu0 0.0
    %466 = vmatpush1.msra.mxu0 0.0
    %467 = vmatprep.subr.mxu0 0.0
    %468 = vmatpush1.msra.mxu0 0.0
    %469 = vmatprep.subr.mxu0 0.0
    %470 = vmatpush1.msra.mxu0 0.0
    %471 = vmatprep.subr.mxu0 0.0
    %472 = vmatpush1.msra.mxu0 0.0
    %473 = vmatprep.subr.mxu0 0.0
    %474 = vmatpush1.msra.mxu0 0.0
    %475 = vmatprep.subr.mxu0 0.0
    %476 = vmatpush1.msra.mxu0 0.0
    %477 = vmatprep.subr.mxu0 0.0
    %478 = vmatpush1.msra.mxu0 0.0
    %479 = vmatprep.subr.mxu0 0.0
    %480 = vmatpush1.msra.mxu0 0.0
    %481 = vmatprep.subr.mxu0 0.0
    %482 = vmatpush1.msra.mxu0 0.0
    %483 = vmatprep.subr.mxu0 0.0
    %484 = vmatpush1.msra.mxu0 0.0
    %485 = vmatprep.subr.mxu0 0.0
    %486 = vmatpush1.msra.mxu0 0.0
    %487 = vmatprep.subr.mxu0 0.0
    %488 = vmatpush1.msra.mxu0 0.0
    %489 = vmatprep.subr.mxu0 0.0
    %490 = vmatpush1.msra.mxu0 0.0
    %491 = vmatprep.subr.mxu0 0.0
    %492 = vmatpush1.msra.mxu0 0.0
    %493 = vmatprep.subr.mxu0 0.0
    %494 = vmatpush1.msra.mxu0 0.0
    %495 = vmatprep.subr.mxu0 0.0
    %496 = vmatpush1.msra.mxu0 0.0
    %497 = vmatprep.subr.mxu0 0.0
    %498 = vmatpush1.msra.mxu0 0.0
    %499 = vmatprep.subr.mxu0 0.0
    %500 = vmatpush1.msra.mxu0 0.0
    %501 = vmatprep.subr.mxu0 0.0
    %502 = vmatpush1.msra.mxu0 0.0
    %503 = vmatprep.subr.mxu0 0.0
    %504 = vmatpush1.msra.mxu0 0.0
    %505 = vmatprep.subr.mxu0 0.0
    %506 = vmatpush1.msra.mxu0 0.0
    %507 = vmatprep.subr.mxu0 0.0
    %508 = vmatpush1.msra.mxu0 0.0
    %509 = vmatprep.subr.mxu0 0.0
    %510 = vmatpush1.msra.mxu0 0.0
    %511 = vmatprep.subr.mxu0 0.0
    %512 = vmatpush1.msra.mxu0 0.0
    %513 = vmatprep.mubr.f32.mxu0 0.0
    %514 = vmatmul.mubr.f32.gmra.mrb[0].mxu0 %v447
    %v515 = vpop.f32.mrb[0].mxu0
    %v516 = vadd.f32 %v441, %v515
    %v517 = vpop.f32.mrb[0].mxu0
    %518 = vdwg.mxu0
    %v519 = vadd.f32 %v516, %v268
    %v520 = vxor.u32 %v519, 2147483648
    %v521 = vmul.f32 %v520, 1.442695
    %v522 = vpow.pop %v521
    %v523 = vadd.f32 %v522, 1.0
    %v524 = vrcp.pop %v523
    %v525 = vmul.f32 1.0, %v524
    %v526 = vtanh.pop %v519
    %v528 = vmul.f32 %v525, %v371
    %530 = vrot.lane.b32.xlu0 %v526, 64
    %v531 = vpop.permute.xlu0 %530
    %v533 = vmul.f32 %v525, %v531
    %535 = vrot.lane.b32.xlu0 %v533, 32
    %v536 = vpop.permute.xlu0 %535
    %v538 = vadd.f32 %v528, %v536
    %v539 = vtanh.pop %v538
    %541 = vrot.lane.b32.xlu0 %v539, 64
    %v542 = vpop.permute.xlu0 %541
    %v544 = vmul.f32 %v525, %v542
    %546 = vst.msk [vmem:[#allocation11] sm:$0xff] %vm113, %v446
    %vm547 = vcmask 523520
    %548 = vst.msk [vmem:[#allocation11] sm:$0xff] %vm547, %v363
    %550 = vrot.lane.b32.xlu0 %v544, 96
    %v551 = vpop.permute.xlu0 %550
    %vm553 = vcmask 785920
    %554 = vst.msk [vmem:[#allocation11] sm:$0xff] %vm553, %v551
    %556 = vrot.lane.b32.xlu0 %v538, 64
    %v557 = vpop.permute.xlu0 %556
    %vm559 = vcmask 1048320
    %560 = vst.msk [vmem:[#allocation11] sm:$0xff] %vm559, %v557
    %v561 = vld [vmem:[#allocation2 + $0x8] sm:$0xff]
    %562 = vmatprep.subr.mxu0 0.0
    %563 = vmatpush1.msra.mxu0 %v251
    %564 = vmatprep.subr.mxu0 0.0
    %565 = vmatpush1.msra.mxu0 %v252
    %566 = vmatprep.subr.mxu0 0.0
    %567 = vmatpush1.msra.mxu0 %v253
    %568 = vmatprep.subr.mxu0 0.0
    %569 = vmatpush1.msra.mxu0 %v254
    %570 = vmatprep.subr.mxu0 0.0
    %571 = vmatpush1.msra.mxu0 0.0
    %572 = vmatprep.subr.mxu0 0.0
    %573 = vmatpush1.msra.mxu0 0.0
    %574 = vmatprep.subr.mxu0 0.0
    %575 = vmatpush1.msra.mxu0 0.0
    %576 = vmatprep.subr.mxu0 0.0
    %577 = vmatpush1.msra.mxu0 0.0
    %578 = vmatprep.subr.mxu0 0.0
    %579 = vmatpush1.msra.mxu0 0.0
    %580 = vmatprep.subr.mxu0 0.0
    %581 = vmatpush1.msra.mxu0 0.0
    %582 = vmatprep.subr.mxu0 0.0
    %583 = vmatpush1.msra.mxu0 0.0
    %584 = vmatprep.subr.mxu0 0.0
    %585 = vmatpush1.msra.mxu0 0.0
    %586 = vmatprep.subr.mxu0 0.0
    %587 = vmatpush1.msra.mxu0 0.0
    %588 = vmatprep.subr.mxu0 0.0
    %589 = vmatpush1.msra.mxu0 0.0
    %590 = vmatprep.subr.mxu0 0.0
    %591 = vmatpush1.msra.mxu0 0.0
    %592 = vmatprep.subr.mxu0 0.0
    %593 = vmatpush1.msra.mxu0 0.0
    %594 = vmatprep.subr.mxu0 0.0
    %595 = vmatpush1.msra.mxu0 0.0
    %596 = vmatprep.subr.mxu0 0.0
    %597 = vmatpush1.msra.mxu0 0.0
    %598 = vmatprep.subr.mxu0 0.0
    %599 = vmatpush1.msra.mxu0 0.0
    %600 = vmatprep.subr.mxu0 0.0
    %601 = vmatpush1.msra.mxu0 0.0
    %602 = vmatprep.subr.mxu0 0.0
    %603 = vmatpush1.msra.mxu0 0.0
    %604 = vmatprep.subr.mxu0 0.0
    %605 = vmatpush1.msra.mxu0 0.0
    %606 = vmatprep.subr.mxu0 0.0
    %607 = vmatpush1.msra.mxu0 0.0
    %608 = vmatprep.subr.mxu0 0.0
    %609 = vmatpush1.msra.mxu0 0.0
    %610 = vmatprep.subr.mxu0 0.0
    %611 = vmatpush1.msra.mxu0 0.0
    %612 = vmatprep.subr.mxu0 0.0
    %613 = vmatpush1.msra.mxu0 0.0
    %614 = vmatprep.subr.mxu0 0.0
    %615 = vmatpush1.msra.mxu0 0.0
    %616 = vmatprep.subr.mxu0 0.0
    %617 = vmatpush1.msra.mxu0 0.0
    %618 = vmatprep.subr.mxu0 0.0
    %619 = vmatpush1.msra.mxu0 0.0
    %620 = vmatprep.subr.mxu0 0.0
    %621 = vmatpush1.msra.mxu0 0.0
    %622 = vmatprep.subr.mxu0 0.0
    %623 = vmatpush1.msra.mxu0 0.0
    %624 = vmatprep.subr.mxu0 0.0
    %625 = vmatpush1.msra.mxu0 0.0
    %626 = vmatprep.mubr.f32.mxu0 0.0
    %627 = vmatmul.mubr.f32.gmra.mrb[0].mxu0 %v447
    %v628 = vpop.f32.mrb[0].mxu0
    %v629 = vadd.f32 0.0, %v628
    %v630 = vpop.f32.mrb[0].mxu0
    %631 = vdwg.mxu0
    %v632 = vadd.f32 %v561, %v629
    %v633 = vxor.u32 %v632, 2147483648
    %v634 = vmul.f32 %v633, 1.442695
    %v635 = vpow.pop %v634
    %v636 = vadd.f32 %v635, 1.0
    %v637 = vrcp.pop %v636
    %v638 = vmul.f32 1.0, %v637
    %v639 = vtanh.pop %v632
    %v640 = vmul.f32 %v638, %v363
    %642 = vrot.lane.b32.xlu0 %v639, 64
    %v643 = vpop.permute.xlu0 %642
    %v645 = vmul.f32 %v638, %v643
    %647 = vrot.lane.b32.xlu0 %v645, 32
    %v648 = vpop.permute.xlu0 %647
    %v650 = vadd.f32 %v640, %v648
    %v651 = vtanh.pop %v650
    %653 = vrot.lane.b32.xlu0 %v651, 64
    %v654 = vpop.permute.xlu0 %653
    %v656 = vmul.f32 %v638, %v654
    %657 = vrot.lane.b32.xlu0 %v544, 32
    %v658 = vpop.permute.xlu0 %657
    %v659 = vsel %vm113, %v658, 0
    %661 = vmatprep.subr.mxu0 0.0
    %662 = vmatpush1.msra.mxu0 %v259
    %663 = vmatprep.subr.mxu0 0.0
    %664 = vmatpush1.msra.mxu0 %v260
    %665 = vmatprep.subr.mxu0 0.0
    %666 = vmatpush1.msra.mxu0 %v261
    %667 = vmatprep.subr.mxu0 0.0
    %668 = vmatpush1.msra.mxu0 %v262
    %669 = vmatprep.subr.mxu0 0.0
    %670 = vmatpush1.msra.mxu0 0.0
    %671 = vmatprep.subr.mxu0 0.0
    %672 = vmatpush1.msra.mxu0 0.0
    %673 = vmatprep.subr.mxu0 0.0
    %674 = vmatpush1.msra.mxu0 0.0
    %675 = vmatprep.subr.mxu0 0.0
    %676 = vmatpush1.msra.mxu0 0.0
    %677 = vmatprep.subr.mxu0 0.0
    %678 = vmatpush1.msra.mxu0 0.0
    %679 = vmatprep.subr.mxu0 0.0
    %680 = vmatpush1.msra.mxu0 0.0
    %681 = vmatprep.subr.mxu0 0.0
    %682 = vmatpush1.msra.mxu0 0.0
    %683 = vmatprep.subr.mxu0 0.0
    %684 = vmatpush1.msra.mxu0 0.0
    %685 = vmatprep.subr.mxu0 0.0
    %686 = vmatpush1.msra.mxu0 0.0
    %687 = vmatprep.subr.mxu0 0.0
    %688 = vmatpush1.msra.mxu0 0.0
    %689 = vmatprep.subr.mxu0 0.0
    %690 = vmatpush1.msra.mxu0 0.0
    %691 = vmatprep.subr.mxu0 0.0
    %692 = vmatpush1.msra.mxu0 0.0
    %693 = vmatprep.subr.mxu0 0.0
    %694 = vmatpush1.msra.mxu0 0.0
    %695 = vmatprep.subr.mxu0 0.0
    %696 = vmatpush1.msra.mxu0 0.0
    %697 = vmatprep.subr.mxu0 0.0
    %698 = vmatpush1.msra.mxu0 0.0
    %699 = vmatprep.subr.mxu0 0.0
    %700 = vmatpush1.msra.mxu0 0.0
    %701 = vmatprep.subr.mxu0 0.0
    %702 = vmatpush1.msra.mxu0 0.0
    %703 = vmatprep.subr.mxu0 0.0
    %704 = vmatpush1.msra.mxu0 0.0
    %705 = vmatprep.subr.mxu0 0.0
    %706 = vmatpush1.msra.mxu0 0.0
    %707 = vmatprep.subr.mxu0 0.0
    %708 = vmatpush1.msra.mxu0 0.0
    %709 = vmatprep.subr.mxu0 0.0
    %710 = vmatpush1.msra.mxu0 0.0
    %711 = vmatprep.subr.mxu0 0.0
    %712 = vmatpush1.msra.mxu0 0.0
    %713 = vmatprep.subr.mxu0 0.0
    %714 = vmatpush1.msra.mxu0 0.0
    %715 = vmatprep.subr.mxu0 0.0
    %716 = vmatpush1.msra.mxu0 0.0
    %717 = vmatprep.subr.mxu0 0.0
    %718 = vmatpush1.msra.mxu0 0.0
    %719 = vmatprep.subr.mxu0 0.0
    %720 = vmatpush1.msra.mxu0 0.0
    %721 = vmatprep.subr.mxu0 0.0
    %722 = vmatpush1.msra.mxu0 0.0
    %723 = vmatprep.subr.mxu0 0.0
    %724 = vmatpush1.msra.mxu0 0.0
    %725 = vmatprep.mubr.f32.mxu0 0.0
    %726 = vmatmul.mubr.f32.gmra.mrb[0].mxu0 %v659
    %v727 = vpop.f32.mrb[0].mxu0
    %v728 = vadd.f32 0.0, %v727
    %v729 = vpop.f32.mrb[0].mxu0
    %730 = vdwg.mxu0
    %732 = vrot.lane.b32.xlu0 %v656, 32
    %v733 = vpop.permute.xlu0 %732
    %v734 = vsel %vm113, %v733, 0
    %736 = vmatprep.subr.mxu0 0.0
    %737 = vmatpush1.msra.mxu0 %v255
    %738 = vmatprep.subr.mxu0 0.0
    %739 = vmatpush1.msra.mxu0 %v256
    %740 = vmatprep.subr.mxu0 0.0
    %741 = vmatpush1.msra.mxu0 %v257
    %742 = vmatprep.subr.mxu0 0.0
    %743 = vmatpush1.msra.mxu0 %v258
    %744 = vmatprep.subr.mxu0 0.0
    %745 = vmatpush1.msra.mxu0 0.0
    %746 = vmatprep.subr.mxu0 0.0
    %747 = vmatpush1.msra.mxu0 0.0
    %748 = vmatprep.subr.mxu0 0.0
    %749 = vmatpush1.msra.mxu0 0.0
    %750 = vmatprep.subr.mxu0 0.0
    %751 = vmatpush1.msra.mxu0 0.0
    %752 = vmatprep.subr.mxu0 0.0
    %753 = vmatpush1.msra.mxu0 0.0
    %754 = vmatprep.subr.mxu0 0.0
    %755 = vmatpush1.msra.mxu0 0.0
    %756 = vmatprep.subr.mxu0 0.0
    %757 = vmatpush1.msra.mxu0 0.0
    %758 = vmatprep.subr.mxu0 0.0
    %759 = vmatpush1.msra.mxu0 0.0
    %760 = vmatprep.subr.mxu0 0.0
    %761 = vmatpush1.msra.mxu0 0.0
    %762 = vmatprep.subr.mxu0 0.0
    %763 = vmatpush1.msra.mxu0 0.0
    %764 = vmatprep.subr.mxu0 0.0
    %765 = vmatpush1.msra.mxu0 0.0
    %766 = vmatprep.subr.mxu0 0.0
    %767 = vmatpush1.msra.mxu0 0.0
    %768 = vmatprep.subr.mxu0 0.0
    %769 = vmatpush1.msra.mxu0 0.0
    %770 = vmatprep.subr.mxu0 0.0
    %771 = vmatpush1.msra.mxu0 0.0
    %772 = vmatprep.subr.mxu0 0.0
    %773 = vmatpush1.msra.mxu0 0.0
    %774 = vmatprep.subr.mxu0 0.0
    %775 = vmatpush1.msra.mxu0 0.0
    %776 = vmatprep.subr.mxu0 0.0
    %777 = vmatpush1.msra.mxu0 0.0
    %778 = vmatprep.subr.mxu0 0.0
    %779 = vmatpush1.msra.mxu0 0.0
    %780 = vmatprep.subr.mxu0 0.0
    %781 = vmatpush1.msra.mxu0 0.0
    %782 = vmatprep.subr.mxu0 0.0
    %783 = vmatpush1.msra.mxu0 0.0
    %784 = vmatprep.subr.mxu0 0.0
    %785 = vmatpush1.msra.mxu0 0.0
    %786 = vmatprep.subr.mxu0 0.0
    %787 = vmatpush1.msra.mxu0 0.0
    %788 = vmatprep.subr.mxu0 0.0
    %789 = vmatpush1.msra.mxu0 0.0
    %790 = vmatprep.subr.mxu0 0.0
    %791 = vmatpush1.msra.mxu0 0.0
    %792 = vmatprep.subr.mxu0 0.0
    %793 = vmatpush1.msra.mxu0 0.0
    %794 = vmatprep.subr.mxu0 0.0
    %795 = vmatpush1.msra.mxu0 0.0
    %796 = vmatprep.subr.mxu0 0.0
    %797 = vmatpush1.msra.mxu0 0.0
    %798 = vmatprep.subr.mxu0 0.0
    %799 = vmatpush1.msra.mxu0 0.0
    %800 = vmatprep.mubr.f32.mxu0 0.0
    %801 = vmatmul.mubr.f32.gmra.mrb[0].mxu0 %v734
    %v802 = vpop.f32.mrb[0].mxu0
    %v803 = vadd.f32 %v728, %v802
    %v804 = vpop.f32.mrb[0].mxu0
    %805 = vdwg.mxu0
    %v806 = vadd.f32 %v803, %v268
    %v807 = vxor.u32 %v806, 2147483648
    %v808 = vmul.f32 %v807, 1.442695
    %v809 = vpow.pop %v808
    %v810 = vadd.f32 %v809, 1.0
    %v811 = vrcp.pop %v810
    %v812 = vmul.f32 1.0, %v811
    %v813 = vtanh.pop %v806
    %v814 = vmul.f32 %v812, %v538
    %816 = vrot.lane.b32.xlu0 %v813, 64
    %v817 = vpop.permute.xlu0 %816
    %v819 = vmul.f32 %v812, %v817
    %821 = vrot.lane.b32.xlu0 %v819, 32
    %v822 = vpop.permute.xlu0 %821
    %v824 = vadd.f32 %v814, %v822
    %v825 = vtanh.pop %v824
    %827 = vrot.lane.b32.xlu0 %v825, 64
    %v828 = vpop.permute.xlu0 %827
    %v830 = vmul.f32 %v812, %v828
    %832 = vst.msk [vmem:[#allocation11 + $0x8] sm:$0xff] %vm113, %v733
    %833 = vst.msk [vmem:[#allocation11 + $0x8] sm:$0xff] %vm547, %v650
    %835 = vrot.lane.b32.xlu0 %v830, 96
    %v836 = vpop.permute.xlu0 %835
    %838 = vst.msk [vmem:[#allocation11 + $0x8] sm:$0xff] %vm553, %v836
    %840 = vrot.lane.b32.xlu0 %v824, 64
    %v841 = vpop.permute.xlu0 %840
    %843 = vst.msk [vmem:[#allocation11 + $0x8] sm:$0xff] %vm559, %v841
    %v844 = vld [vmem:[#allocation2 + $0x10] sm:$0xff]
    %845 = vmatprep.subr.mxu0 0.0
    %846 = vmatpush1.msra.mxu0 %v251
    %847 = vmatprep.subr.mxu0 0.0
    %848 = vmatpush1.msra.mxu0 %v252
    %849 = vmatprep.subr.mxu0 0.0
    %850 = vmatpush1.msra.mxu0 %v253
    %851 = vmatprep.subr.mxu0 0.0
    %852 = vmatpush1.msra.mxu0 %v254
    %853 = vmatprep.subr.mxu0 0.0
    %854 = vmatpush1.msra.mxu0 0.0
    %855 = vmatprep.subr.mxu0 0.0
    %856 = vmatpush1.msra.mxu0 0.0
    %857 = vmatprep.subr.mxu0 0.0
    %858 = vmatpush1.msra.mxu0 0.0
    %859 = vmatprep.subr.mxu0 0.0
    %860 = vmatpush1.msra.mxu0 0.0
    %861 = vmatprep.subr.mxu0 0.0
    %862 = vmatpush1.msra.mxu0 0.0
    %863 = vmatprep.subr.mxu0 0.0
    %864 = vmatpush1.msra.mxu0 0.0
    %865 = vmatprep.subr.mxu0 0.0
    %866 = vmatpush1.msra.mxu0 0.0
    %867 = vmatprep.subr.mxu0 0.0
    %868 = vmatpush1.msra.mxu0 0.0
    %869 = vmatprep.subr.mxu0 0.0
    %870 = vmatpush1.msra.mxu0 0.0
    %871 = vmatprep.subr.mxu0 0.0
    %872 = vmatpush1.msra.mxu0 0.0
    %873 = vmatprep.subr.mxu0 0.0
    %874 = vmatpush1.msra.mxu0 0.0
    %875 = vmatprep.subr.mxu0 0.0
    %876 = vmatpush1.msra.mxu0 0.0
    %877 = vmatprep.subr.mxu0 0.0
    %878 = vmatpush1.msra.mxu0 0.0
    %879 = vmatprep.subr.mxu0 0.0
    %880 = vmatpush1.msra.mxu0 0.0
    %881 = vmatprep.subr.mxu0 0.0
    %882 = vmatpush1.msra.mxu0 0.0
    %883 = vmatprep.subr.mxu0 0.0
    %884 = vmatpush1.msra.mxu0 0.0
    %885 = vmatprep.subr.mxu0 0.0
    %886 = vmatpush1.msra.mxu0 0.0
    %887 = vmatprep.subr.mxu0 0.0
    %888 = vmatpush1.msra.mxu0 0.0
    %889 = vmatprep.subr.mxu0 0.0
    %890 = vmatpush1.msra.mxu0 0.0
    %891 = vmatprep.subr.mxu0 0.0
    %892 = vmatpush1.msra.mxu0 0.0
    %893 = vmatprep.subr.mxu0 0.0
    %894 = vmatpush1.msra.mxu0 0.0
    %895 = vmatprep.subr.mxu0 0.0
    %896 = vmatpush1.msra.mxu0 0.0
    %897 = vmatprep.subr.mxu0 0.0
    %898 = vmatpush1.msra.mxu0 0.0
    %899 = vmatprep.subr.mxu0 0.0
    %900 = vmatpush1.msra.mxu0 0.0
    %901 = vmatprep.subr.mxu0 0.0
    %902 = vmatpush1.msra.mxu0 0.0
    %903 = vmatprep.subr.mxu0 0.0
    %904 = vmatpush1.msra.mxu0 0.0
    %905 = vmatprep.subr.mxu0 0.0
    %906 = vmatpush1.msra.mxu0 0.0
    %907 = vmatprep.subr.mxu0 0.0
    %908 = vmatpush1.msra.mxu0 0.0
    %909 = vmatprep.mubr.f32.mxu0 0.0
    %910 = vmatmul.mubr.f32.gmra.mrb[0].mxu0 %v734
    %v911 = vpop.f32.mrb[0].mxu0
    %v912 = vadd.f32 0.0, %v911
    %v913 = vpop.f32.mrb[0].mxu0
    %914 = vdwg.mxu0
    %v915 = vadd.f32 %v844, %v912
    %v916 = vxor.u32 %v915, 2147483648
    %v917 = vmul.f32 %v916, 1.442695
    %v918 = vpow.pop %v917
    %v919 = vadd.f32 %v918, 1.0
    %v920 = vrcp.pop %v919
    %v921 = vmul.f32 1.0, %v920
    %v922 = vtanh.pop %v915
    %v923 = vmul.f32 %v921, %v650
    %925 = vrot.lane.b32.xlu0 %v922, 64
    %v926 = vpop.permute.xlu0 %925
    %v928 = vmul.f32 %v921, %v926
    %930 = vrot.lane.b32.xlu0 %v928, 32
    %v931 = vpop.permute.xlu0 %930
    %v933 = vadd.f32 %v923, %v931
    %v934 = vtanh.pop %v933
    %936 = vrot.lane.b32.xlu0 %v934, 64
    %v937 = vpop.permute.xlu0 %936
    %v939 = vmul.f32 %v921, %v937
    %940 = vrot.lane.b32.xlu0 %v830, 32
    %v941 = vpop.permute.xlu0 %940
    %v942 = vsel %vm113, %v941, 0
    %944 = vmatprep.subr.mxu0 0.0
    %945 = vmatpush1.msra.mxu0 %v259
    %946 = vmatprep.subr.mxu0 0.0
    %947 = vmatpush1.msra.mxu0 %v260
    %948 = vmatprep.subr.mxu0 0.0
    %949 = vmatpush1.msra.mxu0 %v261
    %950 = vmatprep.subr.mxu0 0.0
    %951 = vmatpush1.msra.mxu0 %v262
    %952 = vmatprep.subr.mxu0 0.0
    %953 = vmatpush1.msra.mxu0 0.0
    %954 = vmatprep.subr.mxu0 0.0
    %955 = vmatpush1.msra.mxu0 0.0
    %956 = vmatprep.subr.mxu0 0.0
    %957 = vmatpush1.msra.mxu0 0.0
    %958 = vmatprep.subr.mxu0 0.0
    %959 = vmatpush1.msra.mxu0 0.0
    %960 = vmatprep.subr.mxu0 0.0
    %961 = vmatpush1.msra.mxu0 0.0
    %962 = vmatprep.subr.mxu0 0.0
    %963 = vmatpush1.msra.mxu0 0.0
    %964 = vmatprep.subr.mxu0 0.0
    %965 = vmatpush1.msra.mxu0 0.0
    %966 = vmatprep.subr.mxu0 0.0
    %967 = vmatpush1.msra.mxu0 0.0
    %968 = vmatprep.subr.mxu0 0.0
    %969 = vmatpush1.msra.mxu0 0.0
    %970 = vmatprep.subr.mxu0 0.0
    %971 = vmatpush1.msra.mxu0 0.0
    %972 = vmatprep.subr.mxu0 0.0
    %973 = vmatpush1.msra.mxu0 0.0
    %974 = vmatprep.subr.mxu0 0.0
    %975 = vmatpush1.msra.mxu0 0.0
    %976 = vmatprep.subr.mxu0 0.0
    %977 = vmatpush1.msra.mxu0 0.0
    %978 = vmatprep.subr.mxu0 0.0
    %979 = vmatpush1.msra.mxu0 0.0
    %980 = vmatprep.subr.mxu0 0.0
    %981 = vmatpush1.msra.mxu0 0.0
    %982 = vmatprep.subr.mxu0 0.0
    %983 = vmatpush1.msra.mxu0 0.0
    %984 = vmatprep.subr.mxu0 0.0
    %985 = vmatpush1.msra.mxu0 0.0
    %986 = vmatprep.subr.mxu0 0.0
    %987 = vmatpush1.msra.mxu0 0.0
    %988 = vmatprep.subr.mxu0 0.0
    %989 = vmatpush1.msra.mxu0 0.0
    %990 = vmatprep.subr.mxu0 0.0
    %991 = vmatpush1.msra.mxu0 0.0
    %992 = vmatprep.subr.mxu0 0.0
    %993 = vmatpush1.msra.mxu0 0.0
    %994 = vmatprep.subr.mxu0 0.0
    %995 = vmatpush1.msra.mxu0 0.0
    %996 = vmatprep.subr.mxu0 0.0
    %997 = vmatpush1.msra.mxu0 0.0
    %998 = vmatprep.subr.mxu0 0.0
    %999 = vmatpush1.msra.mxu0 0.0
    %1000 = vmatprep.subr.mxu0 0.0
    %1001 = vmatpush1.msra.mxu0 0.0
    %1002 = vmatprep.subr.mxu0 0.0
    %1003 = vmatpush1.msra.mxu0 0.0
    %1004 = vmatprep.subr.mxu0 0.0
    %1005 = vmatpush1.msra.mxu0 0.0
    %1006 = vmatprep.subr.mxu0 0.0
    %1007 = vmatpush1.msra.mxu0 0.0
    %1008 = vmatprep.mubr.f32.mxu0 0.0
    %1009 = vmatmul.mubr.f32.gmra.mrb[0].mxu0 %v942
    %v1010 = vpop.f32.mrb[0].mxu0
    %v1011 = vadd.f32 0.0, %v1010
    %v1012 = vpop.f32.mrb[0].mxu0
    %1013 = vdwg.mxu0
    %1015 = vrot.lane.b32.xlu0 %v939, 32
    %v1016 = vpop.permute.xlu0 %1015
    %v1017 = vsel %vm113, %v1016, 0
    %1019 = vmatprep.subr.mxu0 0.0
    %1020 = vmatpush1.msra.mxu0 %v255
    %1021 = vmatprep.subr.mxu0 0.0
    %1022 = vmatpush1.msra.mxu0 %v256
    %1023 = vmatprep.subr.mxu0 0.0
    %1024 = vmatpush1.msra.mxu0 %v257
    %1025 = vmatprep.subr.mxu0 0.0
    %1026 = vmatpush1.msra.mxu0 %v258
    %1027 = vmatprep.subr.mxu0 0.0
    %1028 = vmatpush1.msra.mxu0 0.0
    %1029 = vmatprep.subr.mxu0 0.0
    %1030 = vmatpush1.msra.mxu0 0.0
    %1031 = vmatprep.subr.mxu0 0.0
    %1032 = vmatpush1.msra.mxu0 0.0
    %1033 = vmatprep.subr.mxu0 0.0
    %1034 = vmatpush1.msra.mxu0 0.0
    %1035 = vmatprep.subr.mxu0 0.0
    %1036 = vmatpush1.msra.mxu0 0.0
    %1037 = vmatprep.subr.mxu0 0.0
    %1038 = vmatpush1.msra.mxu0 0.0
    %1039 = vmatprep.subr.mxu0 0.0
    %1040 = vmatpush1.msra.mxu0 0.0
    %1041 = vmatprep.subr.mxu0 0.0
    %1042 = vmatpush1.msra.mxu0 0.0
    %1043 = vmatprep.subr.mxu0 0.0
    %1044 = vmatpush1.msra.mxu0 0.0
    %1045 = vmatprep.subr.mxu0 0.0
    %1046 = vmatpush1.msra.mxu0 0.0
    %1047 = vmatprep.subr.mxu0 0.0
    %1048 = vmatpush1.msra.mxu0 0.0
    %1049 = vmatprep.subr.mxu0 0.0
    %1050 = vmatpush1.msra.mxu0 0.0
    %1051 = vmatprep.subr.mxu0 0.0
    %1052 = vmatpush1.msra.mxu0 0.0
    %1053 = vmatprep.subr.mxu0 0.0
    %1054 = vmatpush1.msra.mxu0 0.0
    %1055 = vmatprep.subr.mxu0 0.0
    %1056 = vmatpush1.msra.mxu0 0.0
    %1057 = vmatprep.subr.mxu0 0.0
    %1058 = vmatpush1.msra.mxu0 0.0
    %1059 = vmatprep.subr.mxu0 0.0
    %1060 = vmatpush1.msra.mxu0 0.0
    %1061 = vmatprep.subr.mxu0 0.0
    %1062 = vmatpush1.msra.mxu0 0.0
    %1063 = vmatprep.subr.mxu0 0.0
    %1064 = vmatpush1.msra.mxu0 0.0
    %1065 = vmatprep.subr.mxu0 0.0
    %1066 = vmatpush1.msra.mxu0 0.0
    %1067 = vmatprep.subr.mxu0 0.0
    %1068 = vmatpush1.msra.mxu0 0.0
    %1069 = vmatprep.subr.mxu0 0.0
    %1070 = vmatpush1.msra.mxu0 0.0
    %1071 = vmatprep.subr.mxu0 0.0
    %1072 = vmatpush1.msra.mxu0 0.0
    %1073 = vmatprep.subr.mxu0 0.0
    %1074 = vmatpush1.msra.mxu0 0.0
    %1075 = vmatprep.subr.mxu0 0.0
    %1076 = vmatpush1.msra.mxu0 0.0
    %1077 = vmatprep.subr.mxu0 0.0
    %1078 = vmatpush1.msra.mxu0 0.0
    %1079 = vmatprep.subr.mxu0 0.0
    %1080 = vmatpush1.msra.mxu0 0.0
    %1081 = vmatprep.subr.mxu0 0.0
    %1082 = vmatpush1.msra.mxu0 0.0
    %1083 = vmatprep.mubr.f32.mxu0 0.0
    %1084 = vmatmul.mubr.f32.gmra.mrb[0].mxu0 %v1017
    %v1085 = vpop.f32.mrb[0].mxu0
    %v1086 = vadd.f32 %v1011, %v1085
    %v1087 = vpop.f32.mrb[0].mxu0
    %1088 = vdwg.mxu0
    %v1089 = vadd.f32 %v1086, %v268
    %v1090 = vxor.u32 %v1089, 2147483648
    %v1091 = vmul.f32 %v1090, 1.442695
    %v1092 = vpow.pop %v1091
    %v1093 = vadd.f32 %v1092, 1.0
    %v1094 = vrcp.pop %v1093
    %v1095 = vmul.f32 1.0, %v1094
    %v1096 = vtanh.pop %v1089
    %v1097 = vmul.f32 %v1095, %v824
    %1099 = vrot.lane.b32.xlu0 %v1096, 64
    %v1100 = vpop.permute.xlu0 %1099
    %v1102 = vmul.f32 %v1095, %v1100
    %1104 = vrot.lane.b32.xlu0 %v1102, 32
    %v1105 = vpop.permute.xlu0 %1104
    %v1107 = vadd.f32 %v1097, %v1105
    %v1108 = vtanh.pop %v1107
    %1110 = vrot.lane.b32.xlu0 %v1108, 64
    %v1111 = vpop.permute.xlu0 %1110
    %v1113 = vmul.f32 %v1095, %v1111
    %1115 = vst.msk [vmem:[#allocation11 + $0x10] sm:$0xff] %vm113, %v1016
    %1116 = vst.msk [vmem:[#allocation11 + $0x10] sm:$0xff] %vm547, %v933
    %1118 = vrot.lane.b32.xlu0 %v1113, 96
    %v1119 = vpop.permute.xlu0 %1118
    %1121 = vst.msk [vmem:[#allocation11 + $0x10] sm:$0xff] %vm553, %v1119
    %1123 = vrot.lane.b32.xlu0 %v1107, 64
    %v1124 = vpop.permute.xlu0 %1123
    %1126 = vst.msk [vmem:[#allocation11 + $0x10] sm:$0xff] %vm559, %v1124
    %v1127 = vld [vmem:[#allocation2 + $0x18] sm:$0xff]
    %1128 = vmatprep.subr.mxu0 0.0
    %1129 = vmatpush1.msra.mxu0 %v251
    %1130 = vmatprep.subr.mxu0 0.0
    %1131 = vmatpush1.msra.mxu0 %v252
    %1132 = vmatprep.subr.mxu0 0.0
    %1133 = vmatpush1.msra.mxu0 %v253
    %1134 = vmatprep.subr.mxu0 0.0
    %1135 = vmatpush1.msra.mxu0 %v254
    %1136 = vmatprep.subr.mxu0 0.0
    %1137 = vmatpush1.msra.mxu0 0.0
    %1138 = vmatprep.subr.mxu0 0.0
    %1139 = vmatpush1.msra.mxu0 0.0
    %1140 = vmatprep.subr.mxu0 0.0
    %1141 = vmatpush1.msra.mxu0 0.0
    %1142 = vmatprep.subr.mxu0 0.0
    %1143 = vmatpush1.msra.mxu0 0.0
    %1144 = vmatprep.subr.mxu0 0.0
    %1145 = vmatpush1.msra.mxu0 0.0
    %1146 = vmatprep.subr.mxu0 0.0
    %1147 = vmatpush1.msra.mxu0 0.0
    %1148 = vmatprep.subr.mxu0 0.0
    %1149 = vmatpush1.msra.mxu0 0.0
    %1150 = vmatprep.subr.mxu0 0.0
    %1151 = vmatpush1.msra.mxu0 0.0
    %1152 = vmatprep.subr.mxu0 0.0
    %1153 = vmatpush1.msra.mxu0 0.0
    %1154 = vmatprep.subr.mxu0 0.0
    %1155 = vmatpush1.msra.mxu0 0.0
    %1156 = vmatprep.subr.mxu0 0.0
    %1157 = vmatpush1.msra.mxu0 0.0
    %1158 = vmatprep.subr.mxu0 0.0
    %1159 = vmatpush1.msra.mxu0 0.0
    %1160 = vmatprep.subr.mxu0 0.0
    %1161 = vmatpush1.msra.mxu0 0.0
    %1162 = vmatprep.subr.mxu0 0.0
    %1163 = vmatpush1.msra.mxu0 0.0
    %1164 = vmatprep.subr.mxu0 0.0
    %1165 = vmatpush1.msra.mxu0 0.0
    %1166 = vmatprep.subr.mxu0 0.0
    %1167 = vmatpush1.msra.mxu0 0.0
    %1168 = vmatprep.subr.mxu0 0.0
    %1169 = vmatpush1.msra.mxu0 0.0
    %1170 = vmatprep.subr.mxu0 0.0
    %1171 = vmatpush1.msra.mxu0 0.0
    %1172 = vmatprep.subr.mxu0 0.0
    %1173 = vmatpush1.msra.mxu0 0.0
    %1174 = vmatprep.subr.mxu0 0.0
    %1175 = vmatpush1.msra.mxu0 0.0
    %1176 = vmatprep.subr.mxu0 0.0
    %1177 = vmatpush1.msra.mxu0 0.0
    %1178 = vmatprep.subr.mxu0 0.0
    %1179 = vmatpush1.msra.mxu0 0.0
    %1180 = vmatprep.subr.mxu0 0.0
    %1181 = vmatpush1.msra.mxu0 0.0
    %1182 = vmatprep.subr.mxu0 0.0
    %1183 = vmatpush1.msra.mxu0 0.0
    %1184 = vmatprep.subr.mxu0 0.0
    %1185 = vmatpush1.msra.mxu0 0.0
    %1186 = vmatprep.subr.mxu0 0.0
    %1187 = vmatpush1.msra.mxu0 0.0
    %1188 = vmatprep.subr.mxu0 0.0
    %1189 = vmatpush1.msra.mxu0 0.0
    %1190 = vmatprep.subr.mxu0 0.0
    %1191 = vmatpush1.msra.mxu0 0.0
    %1192 = vmatprep.mubr.f32.mxu0 0.0
    %1193 = vmatmul.mubr.f32.gmra.mrb[0].mxu0 %v1017
    %v1194 = vpop.f32.mrb[0].mxu0
    %v1195 = vadd.f32 0.0, %v1194
    %v1196 = vpop.f32.mrb[0].mxu0
    %1197 = vdwg.mxu0
    %v1198 = vadd.f32 %v1127, %v1195
    %v1199 = vxor.u32 %v1198, 2147483648
    %v1200 = vmul.f32 %v1199, 1.442695
    %v1201 = vpow.pop %v1200
    %v1202 = vadd.f32 %v1201, 1.0
    %v1203 = vrcp.pop %v1202
    %v1204 = vmul.f32 1.0, %v1203
    %v1205 = vtanh.pop %v1198
    %v1206 = vmul.f32 %v1204, %v933
    %1208 = vrot.lane.b32.xlu0 %v1205, 64
    %v1209 = vpop.permute.xlu0 %1208
    %v1211 = vmul.f32 %v1204, %v1209
    %1213 = vrot.lane.b32.xlu0 %v1211, 32
    %v1214 = vpop.permute.xlu0 %1213
    %v1216 = vadd.f32 %v1206, %v1214
    %v1217 = vtanh.pop %v1216
    %1219 = vrot.lane.b32.xlu0 %v1217, 64
    %v1220 = vpop.permute.xlu0 %1219
    %v1222 = vmul.f32 %v1204, %v1220
    %1223 = vrot.lane.b32.xlu0 %v1113, 32
    %v1224 = vpop.permute.xlu0 %1223
    %v1225 = vsel %vm113, %v1224, 0
    %1227 = vmatprep.subr.mxu0 0.0
    %1228 = vmatpush1.msra.mxu0 %v259
    %1229 = vmatprep.subr.mxu0 0.0
    %1230 = vmatpush1.msra.mxu0 %v260
    %1231 = vmatprep.subr.mxu0 0.0
    %1232 = vmatpush1.msra.mxu0 %v261
    %1233 = vmatprep.subr.mxu0 0.0
    %1234 = vmatpush1.msra.mxu0 %v262
    %1235 = vmatprep.subr.mxu0 0.0
    %1236 = vmatpush1.msra.mxu0 0.0
    %1237 = vmatprep.subr.mxu0 0.0
    %1238 = vmatpush1.msra.mxu0 0.0
    %1239 = vmatprep.subr.mxu0 0.0
    %1240 = vmatpush1.msra.mxu0 0.0
    %1241 = vmatprep.subr.mxu0 0.0
    %1242 = vmatpush1.msra.mxu0 0.0
    %1243 = vmatprep.subr.mxu0 0.0
    %1244 = vmatpush1.msra.mxu0 0.0
    %1245 = vmatprep.subr.mxu0 0.0
    %1246 = vmatpush1.msra.mxu0 0.0
    %1247 = vmatprep.subr.mxu0 0.0
    %1248 = vmatpush1.msra.mxu0 0.0
    %1249 = vmatprep.subr.mxu0 0.0
    %1250 = vmatpush1.msra.mxu0 0.0
    %1251 = vmatprep.subr.mxu0 0.0
    %1252 = vmatpush1.msra.mxu0 0.0
    %1253 = vmatprep.subr.mxu0 0.0
    %1254 = vmatpush1.msra.mxu0 0.0
    %1255 = vmatprep.subr.mxu0 0.0
    %1256 = vmatpush1.msra.mxu0 0.0
    %1257 = vmatprep.subr.mxu0 0.0
    %1258 = vmatpush1.msra.mxu0 0.0
    %1259 = vmatprep.subr.mxu0 0.0
    %1260 = vmatpush1.msra.mxu0 0.0
    %1261 = vmatprep.subr.mxu0 0.0
    %1262 = vmatpush1.msra.mxu0 0.0
    %1263 = vmatprep.subr.mxu0 0.0
    %1264 = vmatpush1.msra.mxu0 0.0
    %1265 = vmatprep.subr.mxu0 0.0
    %1266 = vmatpush1.msra.mxu0 0.0
    %1267 = vmatprep.subr.mxu0 0.0
    %1268 = vmatpush1.msra.mxu0 0.0
    %1269 = vmatprep.subr.mxu0 0.0
    %1270 = vmatpush1.msra.mxu0 0.0
    %1271 = vmatprep.subr.mxu0 0.0
    %1272 = vmatpush1.msra.mxu0 0.0
    %1273 = vmatprep.subr.mxu0 0.0
    %1274 = vmatpush1.msra.mxu0 0.0
    %1275 = vmatprep.subr.mxu0 0.0
    %1276 = vmatpush1.msra.mxu0 0.0
    %1277 = vmatprep.subr.mxu0 0.0
    %1278 = vmatpush1.msra.mxu0 0.0
    %1279 = vmatprep.subr.mxu0 0.0
    %1280 = vmatpush1.msra.mxu0 0.0
    %1281 = vmatprep.subr.mxu0 0.0
    %1282 = vmatpush1.msra.mxu0 0.0
    %1283 = vmatprep.subr.mxu0 0.0
    %1284 = vmatpush1.msra.mxu0 0.0
    %1285 = vmatprep.subr.mxu0 0.0
    %1286 = vmatpush1.msra.mxu0 0.0
    %1287 = vmatprep.subr.mxu0 0.0
    %1288 = vmatpush1.msra.mxu0 0.0
    %1289 = vmatprep.subr.mxu0 0.0
    %1290 = vmatpush1.msra.mxu0 0.0
    %1291 = vmatprep.mubr.f32.mxu0 0.0
    %1292 = vmatmul.mubr.f32.gmra.mrb[0].mxu0 %v1225
    %v1293 = vpop.f32.mrb[0].mxu0
    %v1294 = vadd.f32 0.0, %v1293
    %v1295 = vpop.f32.mrb[0].mxu0
    %1296 = vdwg.mxu0
    %1298 = vrot.lane.b32.xlu0 %v1222, 32
    %v1299 = vpop.permute.xlu0 %1298
    %v1300 = vsel %vm113, %v1299, 0
    %1302 = vmatprep.subr.mxu0 0.0
    %1303 = vmatpush1.msra.mxu0 %v255
    %1304 = vmatprep.subr.mxu0 0.0
    %1305 = vmatpush1.msra.mxu0 %v256
    %1306 = vmatprep.subr.mxu0 0.0
    %1307 = vmatpush1.msra.mxu0 %v257
    %1308 = vmatprep.subr.mxu0 0.0
    %1309 = vmatpush1.msra.mxu0 %v258
    %1310 = vmatprep.subr.mxu0 0.0
    %1311 = vmatpush1.msra.mxu0 0.0
    %1312 = vmatprep.subr.mxu0 0.0
    %1313 = vmatpush1.msra.mxu0 0.0
    %1314 = vmatprep.subr.mxu0 0.0
    %1315 = vmatpush1.msra.mxu0 0.0
    %1316 = vmatprep.subr.mxu0 0.0
    %1317 = vmatpush1.msra.mxu0 0.0
    %1318 = vmatprep.subr.mxu0 0.0
    %1319 = vmatpush1.msra.mxu0 0.0
    %1320 = vmatprep.subr.mxu0 0.0
    %1321 = vmatpush1.msra.mxu0 0.0
    %1322 = vmatprep.subr.mxu0 0.0
    %1323 = vmatpush1.msra.mxu0 0.0
    %1324 = vmatprep.subr.mxu0 0.0
    %1325 = vmatpush1.msra.mxu0 0.0
    %1326 = vmatprep.subr.mxu0 0.0
    %1327 = vmatpush1.msra.mxu0 0.0
    %1328 = vmatprep.subr.mxu0 0.0
    %1329 = vmatpush1.msra.mxu0 0.0
    %1330 = vmatprep.subr.mxu0 0.0
    %1331 = vmatpush1.msra.mxu0 0.0
    %1332 = vmatprep.subr.mxu0 0.0
    %1333 = vmatpush1.msra.mxu0 0.0
    %1334 = vmatprep.subr.mxu0 0.0
    %1335 = vmatpush1.msra.mxu0 0.0
    %1336 = vmatprep.subr.mxu0 0.0
    %1337 = vmatpush1.msra.mxu0 0.0
    %1338 = vmatprep.subr.mxu0 0.0
    %1339 = vmatpush1.msra.mxu0 0.0
    %1340 = vmatprep.subr.mxu0 0.0
    %1341 = vmatpush1.msra.mxu0 0.0
    %1342 = vmatprep.subr.mxu0 0.0
    %1343 = vmatpush1.msra.mxu0 0.0
    %1344 = vmatprep.subr.mxu0 0.0
    %1345 = vmatpush1.msra.mxu0 0.0
    %1346 = vmatprep.subr.mxu0 0.0
    %1347 = vmatpush1.msra.mxu0 0.0
    %1348 = vmatprep.subr.mxu0 0.0
    %1349 = vmatpush1.msra.mxu0 0.0
    %1350 = vmatprep.subr.mxu0 0.0
    %1351 = vmatpush1.msra.mxu0 0.0
    %1352 = vmatprep.subr.mxu0 0.0
    %1353 = vmatpush1.msra.mxu0 0.0
    %1354 = vmatprep.subr.mxu0 0.0
    %1355 = vmatpush1.msra.mxu0 0.0
    %1356 = vmatprep.subr.mxu0 0.0
    %1357 = vmatpush1.msra.mxu0 0.0
    %1358 = vmatprep.subr.mxu0 0.0
    %1359 = vmatpush1.msra.mxu0 0.0
    %1360 = vmatprep.subr.mxu0 0.0
    %1361 = vmatpush1.msra.mxu0 0.0
    %1362 = vmatprep.subr.mxu0 0.0
    %1363 = vmatpush1.msra.mxu0 0.0
    %1364 = vmatprep.subr.mxu0 0.0
    %1365 = vmatpush1.msra.mxu0 0.0
    %1366 = vmatprep.mubr.f32.mxu0 0.0
    %1367 = vmatmul.mubr.f32.gmra.mrb[0].mxu0 %v1300
    %v1368 = vpop.f32.mrb[0].mxu0
    %v1369 = vadd.f32 %v1294, %v1368
    %v1370 = vpop.f32.mrb[0].mxu0
    %1371 = vdwg.mxu0
    %v1372 = vadd.f32 %v1369, %v268
    %v1373 = vxor.u32 %v1372, 2147483648
    %v1374 = vmul.f32 %v1373, 1.442695
    %v1375 = vpow.pop %v1374
    %v1376 = vadd.f32 %v1375, 1.0
    %v1377 = vrcp.pop %v1376
    %v1378 = vmul.f32 1.0, %v1377
    %v1379 = vtanh.pop %v1372
    %v1380 = vmul.f32 %v1378, %v1107
    %1382 = vrot.lane.b32.xlu0 %v1379, 64
    %v1383 = vpop.permute.xlu0 %1382
    %v1385 = vmul.f32 %v1378, %v1383
    %1387 = vrot.lane.b32.xlu0 %v1385, 32
    %v1388 = vpop.permute.xlu0 %1387
    %v1390 = vadd.f32 %v1380, %v1388
    %v1391 = vtanh.pop %v1390
    %1393 = vrot.lane.b32.xlu0 %v1391, 64
    %v1394 = vpop.permute.xlu0 %1393
    %v1396 = vmul.f32 %v1378, %v1394
    %1398 = vst.msk [vmem:[#allocation11 + $0x18] sm:$0xff] %vm113, %v1299
    %1399 = vst.msk [vmem:[#allocation11 + $0x18] sm:$0xff] %vm547, %v1216
    %1401 = vrot.lane.b32.xlu0 %v1396, 96
    %v1402 = vpop.permute.xlu0 %1401
    %1404 = vst.msk [vmem:[#allocation11 + $0x18] sm:$0xff] %vm553, %v1402
    %1406 = vrot.lane.b32.xlu0 %v1390, 64
    %v1407 = vpop.permute.xlu0 %1406
    %1409 = vst.msk [vmem:[#allocation11 + $0x18] sm:$0xff] %vm559, %v1407
    %v1410 = vld [vmem:[#allocation2 + $0x20] sm:$0xff]
    %1411 = vmatprep.subr.mxu0 0.0
    %1412 = vmatpush1.msra.mxu0 %v251
    %1413 = vmatprep.subr.mxu0 0.0
    %1414 = vmatpush1.msra.mxu0 %v252
    %1415 = vmatprep.subr.mxu0 0.0
    %1416 = vmatpush1.msra.mxu0 %v253
    %1417 = vmatprep.subr.mxu0 0.0
    %1418 = vmatpush1.msra.mxu0 %v254
    %1419 = vmatprep.subr.mxu0 0.0
    %1420 = vmatpush1.msra.mxu0 0.0
    %1421 = vmatprep.subr.mxu0 0.0
    %1422 = vmatpush1.msra.mxu0 0.0
    %1423 = vmatprep.subr.mxu0 0.0
    %1424 = vmatpush1.msra.mxu0 0.0
    %1425 = vmatprep.subr.mxu0 0.0
    %1426 = vmatpush1.msra.mxu0 0.0
    %1427 = vmatprep.subr.mxu0 0.0
    %1428 = vmatpush1.msra.mxu0 0.0
    %1429 = vmatprep.subr.mxu0 0.0
    %1430 = vmatpush1.msra.mxu0 0.0
    %1431 = vmatprep.subr.mxu0 0.0
    %1432 = vmatpush1.msra.mxu0 0.0
    %1433 = vmatprep.subr.mxu0 0.0
    %1434 = vmatpush1.msra.mxu0 0.0
    %1435 = vmatprep.subr.mxu0 0.0
    %1436 = vmatpush1.msra.mxu0 0.0
    %1437 = vmatprep.subr.mxu0 0.0
    %1438 = vmatpush1.msra.mxu0 0.0
    %1439 = vmatprep.subr.mxu0 0.0
    %1440 = vmatpush1.msra.mxu0 0.0
    %1441 = vmatprep.subr.mxu0 0.0
    %1442 = vmatpush1.msra.mxu0 0.0
    %1443 = vmatprep.subr.mxu0 0.0
    %1444 = vmatpush1.msra.mxu0 0.0
    %1445 = vmatprep.subr.mxu0 0.0
    %1446 = vmatpush1.msra.mxu0 0.0
    %1447 = vmatprep.subr.mxu0 0.0
    %1448 = vmatpush1.msra.mxu0 0.0
    %1449 = vmatprep.subr.mxu0 0.0
    %1450 = vmatpush1.msra.mxu0 0.0
    %1451 = vmatprep.subr.mxu0 0.0
    %1452 = vmatpush1.msra.mxu0 0.0
    %1453 = vmatprep.subr.mxu0 0.0
    %1454 = vmatpush1.msra.mxu0 0.0
    %1455 = vmatprep.subr.mxu0 0.0
    %1456 = vmatpush1.msra.mxu0 0.0
    %1457 = vmatprep.subr.mxu0 0.0
    %1458 = vmatpush1.msra.mxu0 0.0
    %1459 = vmatprep.subr.mxu0 0.0
    %1460 = vmatpush1.msra.mxu0 0.0
    %1461 = vmatprep.subr.mxu0 0.0
    %1462 = vmatpush1.msra.mxu0 0.0
    %1463 = vmatprep.subr.mxu0 0.0
    %1464 = vmatpush1.msra.mxu0 0.0
    %1465 = vmatprep.subr.mxu0 0.0
    %1466 = vmatpush1.msra.mxu0 0.0
    %1467 = vmatprep.subr.mxu0 0.0
    %1468 = vmatpush1.msra.mxu0 0.0
    %1469 = vmatprep.subr.mxu0 0.0
    %1470 = vmatpush1.msra.mxu0 0.0
    %1471 = vmatprep.subr.mxu0 0.0
    %1472 = vmatpush1.msra.mxu0 0.0
    %1473 = vmatprep.subr.mxu0 0.0
    %1474 = vmatpush1.msra.mxu0 0.0
    %1475 = vmatprep.mubr.f32.mxu0 0.0
    %1476 = vmatmul.mubr.f32.gmra.mrb[0].mxu0 %v1300
    %v1477 = vpop.f32.mrb[0].mxu0
    %v1478 = vadd.f32 0.0, %v1477
    %v1479 = vpop.f32.mrb[0].mxu0
    %1480 = vdwg.mxu0
    %v1481 = vadd.f32 %v1410, %v1478
    %v1482 = vxor.u32 %v1481, 2147483648
    %v1483 = vmul.f32 %v1482, 1.442695
    %v1484 = vpow.pop %v1483
    %v1485 = vadd.f32 %v1484, 1.0
    %v1486 = vrcp.pop %v1485
    %v1487 = vmul.f32 1.0, %v1486
    %v1488 = vtanh.pop %v1481
    %v1489 = vmul.f32 %v1487, %v1216
    %1491 = vrot.lane.b32.xlu0 %v1488, 64
    %v1492 = vpop.permute.xlu0 %1491
    %v1494 = vmul.f32 %v1487, %v1492
    %1496 = vrot.lane.b32.xlu0 %v1494, 32
    %v1497 = vpop.permute.xlu0 %1496
    %v1499 = vadd.f32 %v1489, %v1497
    %v1500 = vtanh.pop %v1499
    %1502 = vrot.lane.b32.xlu0 %v1500, 64
    %v1503 = vpop.permute.xlu0 %1502
    %v1505 = vmul.f32 %v1487, %v1503
    %1506 = vrot.lane.b32.xlu0 %v1396, 32
    %v1507 = vpop.permute.xlu0 %1506
    %v1508 = vsel %vm113, %v1507, 0
    %1510 = vmatprep.subr.mxu0 0.0
    %1511 = vmatpush1.msra.mxu0 %v259
    %1512 = vmatprep.subr.mxu0 0.0
    %1513 = vmatpush1.msra.mxu0 %v260
    %1514 = vmatprep.subr.mxu0 0.0
    %1515 = vmatpush1.msra.mxu0 %v261
    %1516 = vmatprep.subr.mxu0 0.0
    %1517 = vmatpush1.msra.mxu0 %v262
    %1518 = vmatprep.subr.mxu0 0.0
    %1519 = vmatpush1.msra.mxu0 0.0
    %1520 = vmatprep.subr.mxu0 0.0
    %1521 = vmatpush1.msra.mxu0 0.0
    %1522 = vmatprep.subr.mxu0 0.0
    %1523 = vmatpush1.msra.mxu0 0.0
    %1524 = vmatprep.subr.mxu0 0.0
    %1525 = vmatpush1.msra.mxu0 0.0
    %1526 = vmatprep.subr.mxu0 0.0
    %1527 = vmatpush1.msra.mxu0 0.0
    %1528 = vmatprep.subr.mxu0 0.0
    %1529 = vmatpush1.msra.mxu0 0.0
    %1530 = vmatprep.subr.mxu0 0.0
    %1531 = vmatpush1.msra.mxu0 0.0
    %1532 = vmatprep.subr.mxu0 0.0
    %1533 = vmatpush1.msra.mxu0 0.0
    %1534 = vmatprep.subr.mxu0 0.0
    %1535 = vmatpush1.msra.mxu0 0.0
    %1536 = vmatprep.subr.mxu0 0.0
    %1537 = vmatpush1.msra.mxu0 0.0
    %1538 = vmatprep.subr.mxu0 0.0
    %1539 = vmatpush1.msra.mxu0 0.0
    %1540 = vmatprep.subr.mxu0 0.0
    %1541 = vmatpush1.msra.mxu0 0.0
    %1542 = vmatprep.subr.mxu0 0.0
    %1543 = vmatpush1.msra.mxu0 0.0
    %1544 = vmatprep.subr.mxu0 0.0
    %1545 = vmatpush1.msra.mxu0 0.0
    %1546 = vmatprep.subr.mxu0 0.0
    %1547 = vmatpush1.msra.mxu0 0.0
    %1548 = vmatprep.subr.mxu0 0.0
    %1549 = vmatpush1.msra.mxu0 0.0
    %1550 = vmatprep.subr.mxu0 0.0
    %1551 = vmatpush1.msra.mxu0 0.0
    %1552 = vmatprep.subr.mxu0 0.0
    %1553 = vmatpush1.msra.mxu0 0.0
    %1554 = vmatprep.subr.mxu0 0.0
    %1555 = vmatpush1.msra.mxu0 0.0
    %1556 = vmatprep.subr.mxu0 0.0
    %1557 = vmatpush1.msra.mxu0 0.0
    %1558 = vmatprep.subr.mxu0 0.0
    %1559 = vmatpush1.msra.mxu0 0.0
    %1560 = vmatprep.subr.mxu0 0.0
    %1561 = vmatpush1.msra.mxu0 0.0
    %1562 = vmatprep.subr.mxu0 0.0
    %1563 = vmatpush1.msra.mxu0 0.0
    %1564 = vmatprep.subr.mxu0 0.0
    %1565 = vmatpush1.msra.mxu0 0.0
    %1566 = vmatprep.subr.mxu0 0.0
    %1567 = vmatpush1.msra.mxu0 0.0
    %1568 = vmatprep.subr.mxu0 0.0
    %1569 = vmatpush1.msra.mxu0 0.0
    %1570 = vmatprep.subr.mxu0 0.0
    %1571 = vmatpush1.msra.mxu0 0.0
    %1572 = vmatprep.subr.mxu0 0.0
    %1573 = vmatpush1.msra.mxu0 0.0
    %1574 = vmatprep.mubr.f32.mxu0 0.0
    %1575 = vmatmul.mubr.f32.gmra.mrb[0].mxu0 %v1508
    %v1576 = vpop.f32.mrb[0].mxu0
    %v1577 = vadd.f32 0.0, %v1576
    %v1578 = vpop.f32.mrb[0].mxu0
    %1579 = vdwg.mxu0
    %1581 = vrot.lane.b32.xlu0 %v1505, 32
    %v1582 = vpop.permute.xlu0 %1581
    %v1583 = vsel %vm113, %v1582, 0
    %1585 = vmatprep.subr.mxu0 0.0
    %1586 = vmatpush1.msra.mxu0 %v255
    %1587 = vmatprep.subr.mxu0 0.0
    %1588 = vmatpush1.msra.mxu0 %v256
    %1589 = vmatprep.subr.mxu0 0.0
    %1590 = vmatpush1.msra.mxu0 %v257
    %1591 = vmatprep.subr.mxu0 0.0
    %1592 = vmatpush1.msra.mxu0 %v258
    %1593 = vmatprep.subr.mxu0 0.0
    %1594 = vmatpush1.msra.mxu0 0.0
    %1595 = vmatprep.subr.mxu0 0.0
    %1596 = vmatpush1.msra.mxu0 0.0
    %1597 = vmatprep.subr.mxu0 0.0
    %1598 = vmatpush1.msra.mxu0 0.0
    %1599 = vmatprep.subr.mxu0 0.0
    %1600 = vmatpush1.msra.mxu0 0.0
    %1601 = vmatprep.subr.mxu0 0.0
    %1602 = vmatpush1.msra.mxu0 0.0
    %1603 = vmatprep.subr.mxu0 0.0
    %1604 = vmatpush1.msra.mxu0 0.0
    %1605 = vmatprep.subr.mxu0 0.0
    %1606 = vmatpush1.msra.mxu0 0.0
    %1607 = vmatprep.subr.mxu0 0.0
    %1608 = vmatpush1.msra.mxu0 0.0
    %1609 = vmatprep.subr.mxu0 0.0
    %1610 = vmatpush1.msra.mxu0 0.0
    %1611 = vmatprep.subr.mxu0 0.0
    %1612 = vmatpush1.msra.mxu0 0.0
    %1613 = vmatprep.subr.mxu0 0.0
    %1614 = vmatpush1.msra.mxu0 0.0
    %1615 = vmatprep.subr.mxu0 0.0
    %1616 = vmatpush1.msra.mxu0 0.0
    %1617 = vmatprep.subr.mxu0 0.0
    %1618 = vmatpush1.msra.mxu0 0.0
    %1619 = vmatprep.subr.mxu0 0.0
    %1620 = vmatpush1.msra.mxu0 0.0
    %1621 = vmatprep.subr.mxu0 0.0
    %1622 = vmatpush1.msra.mxu0 0.0
    %1623 = vmatprep.subr.mxu0 0.0
    %1624 = vmatpush1.msra.mxu0 0.0
    %1625 = vmatprep.subr.mxu0 0.0
    %1626 = vmatpush1.msra.mxu0 0.0
    %1627 = vmatprep.subr.mxu0 0.0
    %1628 = vmatpush1.msra.mxu0 0.0
    %1629 = vmatprep.subr.mxu0 0.0
    %1630 = vmatpush1.msra.mxu0 0.0
    %1631 = vmatprep.subr.mxu0 0.0
    %1632 = vmatpush1.msra.mxu0 0.0
    %1633 = vmatprep.subr.mxu0 0.0
    %1634 = vmatpush1.msra.mxu0 0.0
    %1635 = vmatprep.subr.mxu0 0.0
    %1636 = vmatpush1.msra.mxu0 0.0
    %1637 = vmatprep.subr.mxu0 0.0
    %1638 = vmatpush1.msra.mxu0 0.0
    %1639 = vmatprep.subr.mxu0 0.0
    %1640 = vmatpush1.msra.mxu0 0.0
    %1641 = vmatprep.subr.mxu0 0.0
    %1642 = vmatpush1.msra.mxu0 0.0
    %1643 = vmatprep.subr.mxu0 0.0
    %1644 = vmatpush1.msra.mxu0 0.0
    %1645 = vmatprep.subr.mxu0 0.0
    %1646 = vmatpush1.msra.mxu0 0.0
    %1647 = vmatprep.subr.mxu0 0.0
    %1648 = vmatpush1.msra.mxu0 0.0
    %1649 = vmatprep.mubr.f32.mxu0 0.0
    %1650 = vmatmul.mubr.f32.gmra.mrb[0].mxu0 %v1583
    %v1651 = vpop.f32.mrb[0].mxu0
    %v1652 = vadd.f32 %v1577, %v1651
    %v1653 = vpop.f32.mrb[0].mxu0
    %1654 = vdwg.mxu0
    %v1655 = vadd.f32 %v1652, %v268
    %v1656 = vxor.u32 %v1655, 2147483648
    %v1657 = vmul.f32 %v1656, 1.442695
    %v1658 = vpow.pop %v1657
    %v1659 = vadd.f32 %v1658, 1.0
    %v1660 = vrcp.pop %v1659
    %v1661 = vmul.f32 1.0, %v1660
    %v1662 = vtanh.pop %v1655
    %v1663 = vmul.f32 %v1661, %v1390
    %1665 = vrot.lane.b32.xlu0 %v1662, 64
    %v1666 = vpop.permute.xlu0 %1665
    %v1668 = vmul.f32 %v1661, %v1666
    %1670 = vrot.lane.b32.xlu0 %v1668, 32
    %v1671 = vpop.permute.xlu0 %1670
    %v1673 = vadd.f32 %v1663, %v1671
    %v1674 = vtanh.pop %v1673
    %1676 = vrot.lane.b32.xlu0 %v1674, 64
    %v1677 = vpop.permute.xlu0 %1676
    %v1679 = vmul.f32 %v1661, %v1677
    %1681 = vst.msk [vmem:[#allocation11 + $0x20] sm:$0xff] %vm113, %v1582
    %1682 = vst.msk [vmem:[#allocation11 + $0x20] sm:$0xff] %vm547, %v1499
    %1684 = vrot.lane.b32.xlu0 %v1679, 96
    %v1685 = vpop.permute.xlu0 %1684
    %1687 = vst.msk [vmem:[#allocation11 + $0x20] sm:$0xff] %vm553, %v1685
    %1689 = vrot.lane.b32.xlu0 %v1673, 64
    %v1690 = vpop.permute.xlu0 %1689
    %1692 = vst.msk [vmem:[#allocation11 + $0x20] sm:$0xff] %vm559, %v1690
    %v1693 = vld [vmem:[#allocation2 + $0x28] sm:$0xff]
    %1694 = vmatprep.subr.mxu0 0.0
    %1695 = vmatpush1.msra.mxu0 %v251
    %1696 = vmatprep.subr.mxu0 0.0
    %1697 = vmatpush1.msra.mxu0 %v252
    %1698 = vmatprep.subr.mxu0 0.0
    %1699 = vmatpush1.msra.mxu0 %v253
    %1700 = vmatprep.subr.mxu0 0.0
    %1701 = vmatpush1.msra.mxu0 %v254
    %1702 = vmatprep.subr.mxu0 0.0
    %1703 = vmatpush1.msra.mxu0 0.0
    %1704 = vmatprep.subr.mxu0 0.0
    %1705 = vmatpush1.msra.mxu0 0.0
    %1706 = vmatprep.subr.mxu0 0.0
    %1707 = vmatpush1.msra.mxu0 0.0
    %1708 = vmatprep.subr.mxu0 0.0
    %1709 = vmatpush1.msra.mxu0 0.0
    %1710 = vmatprep.subr.mxu0 0.0
    %1711 = vmatpush1.msra.mxu0 0.0
    %1712 = vmatprep.subr.mxu0 0.0
    %1713 = vmatpush1.msra.mxu0 0.0
    %1714 = vmatprep.subr.mxu0 0.0
    %1715 = vmatpush1.msra.mxu0 0.0
    %1716 = vmatprep.subr.mxu0 0.0
    %1717 = vmatpush1.msra.mxu0 0.0
    %1718 = vmatprep.subr.mxu0 0.0
    %1719 = vmatpush1.msra.mxu0 0.0
    %1720 = vmatprep.subr.mxu0 0.0
    %1721 = vmatpush1.msra.mxu0 0.0
    %1722 = vmatprep.subr.mxu0 0.0
    %1723 = vmatpush1.msra.mxu0 0.0
    %1724 = vmatprep.subr.mxu0 0.0
    %1725 = vmatpush1.msra.mxu0 0.0
    %1726 = vmatprep.subr.mxu0 0.0
    %1727 = vmatpush1.msra.mxu0 0.0
    %1728 = vmatprep.subr.mxu0 0.0
    %1729 = vmatpush1.msra.mxu0 0.0
    %1730 = vmatprep.subr.mxu0 0.0
    %1731 = vmatpush1.msra.mxu0 0.0
    %1732 = vmatprep.subr.mxu0 0.0
    %1733 = vmatpush1.msra.mxu0 0.0
    %1734 = vmatprep.subr.mxu0 0.0
    %1735 = vmatpush1.msra.mxu0 0.0
    %1736 = vmatprep.subr.mxu0 0.0
    %1737 = vmatpush1.msra.mxu0 0.0
    %1738 = vmatprep.subr.mxu0 0.0
    %1739 = vmatpush1.msra.mxu0 0.0
    %1740 = vmatprep.subr.mxu0 0.0
    %1741 = vmatpush1.msra.mxu0 0.0
    %1742 = vmatprep.subr.mxu0 0.0
    %1743 = vmatpush1.msra.mxu0 0.0
    %1744 = vmatprep.subr.mxu0 0.0
    %1745 = vmatpush1.msra.mxu0 0.0
    %1746 = vmatprep.subr.mxu0 0.0
    %1747 = vmatpush1.msra.mxu0 0.0
    %1748 = vmatprep.subr.mxu0 0.0
    %1749 = vmatpush1.msra.mxu0 0.0
    %1750 = vmatprep.subr.mxu0 0.0
    %1751 = vmatpush1.msra.mxu0 0.0
    %1752 = vmatprep.subr.mxu0 0.0
    %1753 = vmatpush1.msra.mxu0 0.0
    %1754 = vmatprep.subr.mxu0 0.0
    %1755 = vmatpush1.msra.mxu0 0.0
    %1756 = vmatprep.subr.mxu0 0.0
    %1757 = vmatpush1.msra.mxu0 0.0
    %1758 = vmatprep.mubr.f32.mxu0 0.0
    %1759 = vmatmul.mubr.f32.gmra.mrb[0].mxu0 %v1583
    %v1760 = vpop.f32.mrb[0].mxu0
    %v1761 = vadd.f32 0.0, %v1760
    %v1762 = vpop.f32.mrb[0].mxu0
    %1763 = vdwg.mxu0
    %v1764 = vadd.f32 %v1693, %v1761
    %v1765 = vxor.u32 %v1764, 2147483648
    %v1766 = vmul.f32 %v1765, 1.442695
    %v1767 = vpow.pop %v1766
    %v1768 = vadd.f32 %v1767, 1.0
    %v1769 = vrcp.pop %v1768
    %v1770 = vmul.f32 1.0, %v1769
    %v1771 = vtanh.pop %v1764
    %v1772 = vmul.f32 %v1770, %v1499
    %1774 = vrot.lane.b32.xlu0 %v1771, 64
    %v1775 = vpop.permute.xlu0 %1774
    %v1777 = vmul.f32 %v1770, %v1775
    %1779 = vrot.lane.b32.xlu0 %v1777, 32
    %v1780 = vpop.permute.xlu0 %1779
    %v1782 = vadd.f32 %v1772, %v1780
    %v1783 = vtanh.pop %v1782
    %1785 = vrot.lane.b32.xlu0 %v1783, 64
    %v1786 = vpop.permute.xlu0 %1785
    %v1788 = vmul.f32 %v1770, %v1786
    %1789 = vrot.lane.b32.xlu0 %v1679, 32
    %v1790 = vpop.permute.xlu0 %1789
    %v1791 = vsel %vm113, %v1790, 0
    %1793 = vmatprep.subr.mxu0 0.0
    %1794 = vmatpush1.msra.mxu0 %v259
    %1795 = vmatprep.subr.mxu0 0.0
    %1796 = vmatpush1.msra.mxu0 %v260
    %1797 = vmatprep.subr.mxu0 0.0
    %1798 = vmatpush1.msra.mxu0 %v261
    %1799 = vmatprep.subr.mxu0 0.0
    %1800 = vmatpush1.msra.mxu0 %v262
    %1801 = vmatprep.subr.mxu0 0.0
    %1802 = vmatpush1.msra.mxu0 0.0
    %1803 = vmatprep.subr.mxu0 0.0
    %1804 = vmatpush1.msra.mxu0 0.0
    %1805 = vmatprep.subr.mxu0 0.0
    %1806 = vmatpush1.msra.mxu0 0.0
    %1807 = vmatprep.subr.mxu0 0.0
    %1808 = vmatpush1.msra.mxu0 0.0
    %1809 = vmatprep.subr.mxu0 0.0
    %1810 = vmatpush1.msra.mxu0 0.0
    %1811 = vmatprep.subr.mxu0 0.0
    %1812 = vmatpush1.msra.mxu0 0.0
    %1813 = vmatprep.subr.mxu0 0.0
    %1814 = vmatpush1.msra.mxu0 0.0
    %1815 = vmatprep.subr.mxu0 0.0
    %1816 = vmatpush1.msra.mxu0 0.0
    %1817 = vmatprep.subr.mxu0 0.0
    %1818 = vmatpush1.msra.mxu0 0.0
    %1819 = vmatprep.subr.mxu0 0.0
    %1820 = vmatpush1.msra.mxu0 0.0
    %1821 = vmatprep.subr.mxu0 0.0
    %1822 = vmatpush1.msra.mxu0 0.0
    %1823 = vmatprep.subr.mxu0 0.0
    %1824 = vmatpush1.msra.mxu0 0.0
    %1825 = vmatprep.subr.mxu0 0.0
    %1826 = vmatpush1.msra.mxu0 0.0
    %1827 = vmatprep.subr.mxu0 0.0
    %1828 = vmatpush1.msra.mxu0 0.0
    %1829 = vmatprep.subr.mxu0 0.0
    %1830 = vmatpush1.msra.mxu0 0.0
    %1831 = vmatprep.subr.mxu0 0.0
    %1832 = vmatpush1.msra.mxu0 0.0
    %1833 = vmatprep.subr.mxu0 0.0
    %1834 = vmatpush1.msra.mxu0 0.0
    %1835 = vmatprep.subr.mxu0 0.0
    %1836 = vmatpush1.msra.mxu0 0.0
    %1837 = vmatprep.subr.mxu0 0.0
    %1838 = vmatpush1.msra.mxu0 0.0
    %1839 = vmatprep.subr.mxu0 0.0
    %1840 = vmatpush1.msra.mxu0 0.0
    %1841 = vmatprep.subr.mxu0 0.0
    %1842 = vmatpush1.msra.mxu0 0.0
    %1843 = vmatprep.subr.mxu0 0.0
    %1844 = vmatpush1.msra.mxu0 0.0
    %1845 = vmatprep.subr.mxu0 0.0
    %1846 = vmatpush1.msra.mxu0 0.0
    %1847 = vmatprep.subr.mxu0 0.0
    %1848 = vmatpush1.msra.mxu0 0.0
    %1849 = vmatprep.subr.mxu0 0.0
    %1850 = vmatpush1.msra.mxu0 0.0
    %1851 = vmatprep.subr.mxu0 0.0
    %1852 = vmatpush1.msra.mxu0 0.0
    %1853 = vmatprep.subr.mxu0 0.0
    %1854 = vmatpush1.msra.mxu0 0.0
    %1855 = vmatprep.subr.mxu0 0.0
    %1856 = vmatpush1.msra.mxu0 0.0
    %1857 = vmatprep.mubr.f32.mxu0 0.0
    %1858 = vmatmul.mubr.f32.gmra.mrb[0].mxu0 %v1791
    %v1859 = vpop.f32.mrb[0].mxu0
    %v1860 = vadd.f32 0.0, %v1859
    %v1861 = vpop.f32.mrb[0].mxu0
    %1862 = vdwg.mxu0
    %1864 = vrot.lane.b32.xlu0 %v1788, 32
    %v1865 = vpop.permute.xlu0 %1864
    %v1866 = vsel %vm113, %v1865, 0
    %1868 = vmatprep.subr.mxu0 0.0
    %1869 = vmatpush1.msra.mxu0 %v255
    %1870 = vmatprep.subr.mxu0 0.0
    %1871 = vmatpush1.msra.mxu0 %v256
    %1872 = vmatprep.subr.mxu0 0.0
    %1873 = vmatpush1.msra.mxu0 %v257
    %1874 = vmatprep.subr.mxu0 0.0
    %1875 = vmatpush1.msra.mxu0 %v258
    %1876 = vmatprep.subr.mxu0 0.0
    %1877 = vmatpush1.msra.mxu0 0.0
    %1878 = vmatprep.subr.mxu0 0.0
    %1879 = vmatpush1.msra.mxu0 0.0
    %1880 = vmatprep.subr.mxu0 0.0
    %1881 = vmatpush1.msra.mxu0 0.0
    %1882 = vmatprep.subr.mxu0 0.0
    %1883 = vmatpush1.msra.mxu0 0.0
    %1884 = vmatprep.subr.mxu0 0.0
    %1885 = vmatpush1.msra.mxu0 0.0
    %1886 = vmatprep.subr.mxu0 0.0
    %1887 = vmatpush1.msra.mxu0 0.0
    %1888 = vmatprep.subr.mxu0 0.0
    %1889 = vmatpush1.msra.mxu0 0.0
    %1890 = vmatprep.subr.mxu0 0.0
    %1891 = vmatpush1.msra.mxu0 0.0
    %1892 = vmatprep.subr.mxu0 0.0
    %1893 = vmatpush1.msra.mxu0 0.0
    %1894 = vmatprep.subr.mxu0 0.0
    %1895 = vmatpush1.msra.mxu0 0.0
    %1896 = vmatprep.subr.mxu0 0.0
    %1897 = vmatpush1.msra.mxu0 0.0
    %1898 = vmatprep.subr.mxu0 0.0
    %1899 = vmatpush1.msra.mxu0 0.0
    %1900 = vmatprep.subr.mxu0 0.0
    %1901 = vmatpush1.msra.mxu0 0.0
    %1902 = vmatprep.subr.mxu0 0.0
    %1903 = vmatpush1.msra.mxu0 0.0
    %1904 = vmatprep.subr.mxu0 0.0
    %1905 = vmatpush1.msra.mxu0 0.0
    %1906 = vmatprep.subr.mxu0 0.0
    %1907 = vmatpush1.msra.mxu0 0.0
    %1908 = vmatprep.subr.mxu0 0.0
    %1909 = vmatpush1.msra.mxu0 0.0
    %1910 = vmatprep.subr.mxu0 0.0
    %1911 = vmatpush1.msra.mxu0 0.0
    %1912 = vmatprep.subr.mxu0 0.0
    %1913 = vmatpush1.msra.mxu0 0.0
    %1914 = vmatprep.subr.mxu0 0.0
    %1915 = vmatpush1.msra.mxu0 0.0
    %1916 = vmatprep.subr.mxu0 0.0
    %1917 = vmatpush1.msra.mxu0 0.0
    %1918 = vmatprep.subr.mxu0 0.0
    %1919 = vmatpush1.msra.mxu0 0.0
    %1920 = vmatprep.subr.mxu0 0.0
    %1921 = vmatpush1.msra.mxu0 0.0
    %1922 = vmatprep.subr.mxu0 0.0
    %1923 = vmatpush1.msra.mxu0 0.0
    %1924 = vmatprep.subr.mxu0 0.0
    %1925 = vmatpush1.msra.mxu0 0.0
    %1926 = vmatprep.subr.mxu0 0.0
    %1927 = vmatpush1.msra.mxu0 0.0
    %1928 = vmatprep.subr.mxu0 0.0
    %1929 = vmatpush1.msra.mxu0 0.0
    %1930 = vmatprep.subr.mxu0 0.0
    %1931 = vmatpush1.msra.mxu0 0.0
    %1932 = vmatprep.mubr.f32.mxu0 0.0
    %1933 = vmatmul.mubr.f32.gmra.mrb[0].mxu0 %v1866
    %v1934 = vpop.f32.mrb[0].mxu0
    %v1935 = vadd.f32 %v1860, %v1934
    %v1936 = vpop.f32.mrb[0].mxu0
    %1937 = vdwg.mxu0
    %v1938 = vadd.f32 %v1935, %v268
    %v1939 = vxor.u32 %v1938, 2147483648
    %v1940 = vmul.f32 %v1939, 1.442695
    %v1941 = vpow.pop %v1940
    %v1942 = vadd.f32 %v1941, 1.0
    %v1943 = vrcp.pop %v1942
    %v1944 = vmul.f32 1.0, %v1943
    %v1945 = vtanh.pop %v1938
    %v1946 = vmul.f32 %v1944, %v1673
    %1948 = vrot.lane.b32.xlu0 %v1945, 64
    %v1949 = vpop.permute.xlu0 %1948
    %v1951 = vmul.f32 %v1944, %v1949
    %1953 = vrot.lane.b32.xlu0 %v1951, 32
    %v1954 = vpop.permute.xlu0 %1953
    %v1956 = vadd.f32 %v1946, %v1954
    %v1957 = vtanh.pop %v1956
    %1959 = vrot.lane.b32.xlu0 %v1957, 64
    %v1960 = vpop.permute.xlu0 %1959
    %v1962 = vmul.f32 %v1944, %v1960
    %1964 = vst.msk [vmem:[#allocation11 + $0x28] sm:$0xff] %vm113, %v1865
    %1965 = vst.msk [vmem:[#allocation11 + $0x28] sm:$0xff] %vm547, %v1782
    %1967 = vrot.lane.b32.xlu0 %v1962, 96
    %v1968 = vpop.permute.xlu0 %1967
    %1970 = vst.msk [vmem:[#allocation11 + $0x28] sm:$0xff] %vm553, %v1968
    %1972 = vrot.lane.b32.xlu0 %v1956, 64
    %v1973 = vpop.permute.xlu0 %1972
    %1975 = vst.msk [vmem:[#allocation11 + $0x28] sm:$0xff] %vm559, %v1973
    %v1976 = vld [vmem:[#allocation2 + $0x30] sm:$0xff]
    %1977 = vmatprep.subr.mxu0 0.0
    %1978 = vmatpush1.msra.mxu0 %v251
    %1979 = vmatprep.subr.mxu0 0.0
    %1980 = vmatpush1.msra.mxu0 %v252
    %1981 = vmatprep.subr.mxu0 0.0
    %1982 = vmatpush1.msra.mxu0 %v253
    %1983 = vmatprep.subr.mxu0 0.0
    %1984 = vmatpush1.msra.mxu0 %v254
    %1985 = vmatprep.subr.mxu0 0.0
    %1986 = vmatpush1.msra.mxu0 0.0
    %1987 = vmatprep.subr.mxu0 0.0
    %1988 = vmatpush1.msra.mxu0 0.0
    %1989 = vmatprep.subr.mxu0 0.0
    %1990 = vmatpush1.msra.mxu0 0.0
    %1991 = vmatprep.subr.mxu0 0.0
    %1992 = vmatpush1.msra.mxu0 0.0
    %1993 = vmatprep.subr.mxu0 0.0
    %1994 = vmatpush1.msra.mxu0 0.0
    %1995 = vmatprep.subr.mxu0 0.0
    %1996 = vmatpush1.msra.mxu0 0.0
    %1997 = vmatprep.subr.mxu0 0.0
    %1998 = vmatpush1.msra.mxu0 0.0
    %1999 = vmatprep.subr.mxu0 0.0
    %2000 = vmatpush1.msra.mxu0 0.0
    %2001 = vmatprep.subr.mxu0 0.0
    %2002 = vmatpush1.msra.mxu0 0.0
    %2003 = vmatprep.subr.mxu0 0.0
    %2004 = vmatpush1.msra.mxu0 0.0
    %2005 = vmatprep.subr.mxu0 0.0
    %2006 = vmatpush1.msra.mxu0 0.0
    %2007 = vmatprep.subr.mxu0 0.0
    %2008 = vmatpush1.msra.mxu0 0.0
    %2009 = vmatprep.subr.mxu0 0.0
    %2010 = vmatpush1.msra.mxu0 0.0
    %2011 = vmatprep.subr.mxu0 0.0
    %2012 = vmatpush1.msra.mxu0 0.0
    %2013 = vmatprep.subr.mxu0 0.0
    %2014 = vmatpush1.msra.mxu0 0.0
    %2015 = vmatprep.subr.mxu0 0.0
    %2016 = vmatpush1.msra.mxu0 0.0
    %2017 = vmatprep.subr.mxu0 0.0
    %2018 = vmatpush1.msra.mxu0 0.0
    %2019 = vmatprep.subr.mxu0 0.0
    %2020 = vmatpush1.msra.mxu0 0.0
    %2021 = vmatprep.subr.mxu0 0.0
    %2022 = vmatpush1.msra.mxu0 0.0
    %2023 = vmatprep.subr.mxu0 0.0
    %2024 = vmatpush1.msra.mxu0 0.0
    %2025 = vmatprep.subr.mxu0 0.0
    %2026 = vmatpush1.msra.mxu0 0.0
    %2027 = vmatprep.subr.mxu0 0.0
    %2028 = vmatpush1.msra.mxu0 0.0
    %2029 = vmatprep.subr.mxu0 0.0
    %2030 = vmatpush1.msra.mxu0 0.0
    %2031 = vmatprep.subr.mxu0 0.0
    %2032 = vmatpush1.msra.mxu0 0.0
    %2033 = vmatprep.subr.mxu0 0.0
    %2034 = vmatpush1.msra.mxu0 0.0
    %2035 = vmatprep.subr.mxu0 0.0
    %2036 = vmatpush1.msra.mxu0 0.0
    %2037 = vmatprep.subr.mxu0 0.0
    %2038 = vmatpush1.msra.mxu0 0.0
    %2039 = vmatprep.subr.mxu0 0.0
    %2040 = vmatpush1.msra.mxu0 0.0
    %2041 = vmatprep.mubr.f32.mxu0 0.0
    %2042 = vmatmul.mubr.f32.gmra.mrb[0].mxu0 %v1866
    %v2043 = vpop.f32.mrb[0].mxu0
    %v2044 = vadd.f32 0.0, %v2043
    %v2045 = vpop.f32.mrb[0].mxu0
    %2046 = vdwg.mxu0
    %v2047 = vadd.f32 %v1976, %v2044
    %v2048 = vxor.u32 %v2047, 2147483648
    %v2049 = vmul.f32 %v2048, 1.442695
    %v2050 = vpow.pop %v2049
    %v2051 = vadd.f32 %v2050, 1.0
    %v2052 = vrcp.pop %v2051
    %v2053 = vmul.f32 1.0, %v2052
    %v2054 = vtanh.pop %v2047
    %v2055 = vmul.f32 %v2053, %v1782
    %2057 = vrot.lane.b32.xlu0 %v2054, 64
    %v2058 = vpop.permute.xlu0 %2057
    %v2060 = vmul.f32 %v2053, %v2058
    %2062 = vrot.lane.b32.xlu0 %v2060, 32
    %v2063 = vpop.permute.xlu0 %2062
    %v2065 = vadd.f32 %v2055, %v2063
    %v2066 = vtanh.pop %v2065
    %2068 = vrot.lane.b32.xlu0 %v2066, 64
    %v2069 = vpop.permute.xlu0 %2068
    %v2071 = vmul.f32 %v2053, %v2069
    %2072 = vrot.lane.b32.xlu0 %v1962, 32
    %v2073 = vpop.permute.xlu0 %2072
    %v2074 = vsel %vm113, %v2073, 0
    %2076 = vmatprep.subr.mxu0 0.0
    %2077 = vmatpush1.msra.mxu0 %v259
    %2078 = vmatprep.subr.mxu0 0.0
    %2079 = vmatpush1.msra.mxu0 %v260
    %2080 = vmatprep.subr.mxu0 0.0
    %2081 = vmatpush1.msra.mxu0 %v261
    %2082 = vmatprep.subr.mxu0 0.0
    %2083 = vmatpush1.msra.mxu0 %v262
    %2084 = vmatprep.subr.mxu0 0.0
    %2085 = vmatpush1.msra.mxu0 0.0
    %2086 = vmatprep.subr.mxu0 0.0
    %2087 = vmatpush1.msra.mxu0 0.0
    %2088 = vmatprep.subr.mxu0 0.0
    %2089 = vmatpush1.msra.mxu0 0.0
    %2090 = vmatprep.subr.mxu0 0.0
    %2091 = vmatpush1.msra.mxu0 0.0
    %2092 = vmatprep.subr.mxu0 0.0
    %2093 = vmatpush1.msra.mxu0 0.0
    %2094 = vmatprep.subr.mxu0 0.0
    %2095 = vmatpush1.msra.mxu0 0.0
    %2096 = vmatprep.subr.mxu0 0.0
    %2097 = vmatpush1.msra.mxu0 0.0
    %2098 = vmatprep.subr.mxu0 0.0
    %2099 = vmatpush1.msra.mxu0 0.0
    %2100 = vmatprep.subr.mxu0 0.0
    %2101 = vmatpush1.msra.mxu0 0.0
    %2102 = vmatprep.subr.mxu0 0.0
    %2103 = vmatpush1.msra.mxu0 0.0
    %2104 = vmatprep.subr.mxu0 0.0
    %2105 = vmatpush1.msra.mxu0 0.0
    %2106 = vmatprep.subr.mxu0 0.0
    %2107 = vmatpush1.msra.mxu0 0.0
    %2108 = vmatprep.subr.mxu0 0.0
    %2109 = vmatpush1.msra.mxu0 0.0
    %2110 = vmatprep.subr.mxu0 0.0
    %2111 = vmatpush1.msra.mxu0 0.0
    %2112 = vmatprep.subr.mxu0 0.0
    %2113 = vmatpush1.msra.mxu0 0.0
    %2114 = vmatprep.subr.mxu0 0.0
    %2115 = vmatpush1.msra.mxu0 0.0
    %2116 = vmatprep.subr.mxu0 0.0
    %2117 = vmatpush1.msra.mxu0 0.0
    %2118 = vmatprep.subr.mxu0 0.0
    %2119 = vmatpush1.msra.mxu0 0.0
    %2120 = vmatprep.subr.mxu0 0.0
    %2121 = vmatpush1.msra.mxu0 0.0
    %2122 = vmatprep.subr.mxu0 0.0
    %2123 = vmatpush1.msra.mxu0 0.0
    %2124 = vmatprep.subr.mxu0 0.0
    %2125 = vmatpush1.msra.mxu0 0.0
    %2126 = vmatprep.subr.mxu0 0.0
    %2127 = vmatpush1.msra.mxu0 0.0
    %2128 = vmatprep.subr.mxu0 0.0
    %2129 = vmatpush1.msra.mxu0 0.0
    %2130 = vmatprep.subr.mxu0 0.0
    %2131 = vmatpush1.msra.mxu0 0.0
    %2132 = vmatprep.subr.mxu0 0.0
    %2133 = vmatpush1.msra.mxu0 0.0
    %2134 = vmatprep.subr.mxu0 0.0
    %2135 = vmatpush1.msra.mxu0 0.0
    %2136 = vmatprep.subr.mxu0 0.0
    %2137 = vmatpush1.msra.mxu0 0.0
    %2138 = vmatprep.subr.mxu0 0.0
    %2139 = vmatpush1.msra.mxu0 0.0
    %2140 = vmatprep.mubr.f32.mxu0 0.0
    %2141 = vmatmul.mubr.f32.gmra.mrb[0].mxu0 %v2074
    %v2142 = vpop.f32.mrb[0].mxu0
    %v2143 = vadd.f32 0.0, %v2142
    %v2144 = vpop.f32.mrb[0].mxu0
    %2145 = vdwg.mxu0
    %2147 = vrot.lane.b32.xlu0 %v2071, 32
    %v2148 = vpop.permute.xlu0 %2147
    %v2149 = vsel %vm113, %v2148, 0
    %2151 = vmatprep.subr.mxu0 0.0
    %2152 = vmatpush1.msra.mxu0 %v255
    %2153 = vmatprep.subr.mxu0 0.0
    %2154 = vmatpush1.msra.mxu0 %v256
    %2155 = vmatprep.subr.mxu0 0.0
    %2156 = vmatpush1.msra.mxu0 %v257
    %2157 = vmatprep.subr.mxu0 0.0
    %2158 = vmatpush1.msra.mxu0 %v258
    %2159 = vmatprep.subr.mxu0 0.0
    %2160 = vmatpush1.msra.mxu0 0.0
    %2161 = vmatprep.subr.mxu0 0.0
    %2162 = vmatpush1.msra.mxu0 0.0
    %2163 = vmatprep.subr.mxu0 0.0
    %2164 = vmatpush1.msra.mxu0 0.0
    %2165 = vmatprep.subr.mxu0 0.0
    %2166 = vmatpush1.msra.mxu0 0.0
    %2167 = vmatprep.subr.mxu0 0.0
    %2168 = vmatpush1.msra.mxu0 0.0
    %2169 = vmatprep.subr.mxu0 0.0
    %2170 = vmatpush1.msra.mxu0 0.0
    %2171 = vmatprep.subr.mxu0 0.0
    %2172 = vmatpush1.msra.mxu0 0.0
    %2173 = vmatprep.subr.mxu0 0.0
    %2174 = vmatpush1.msra.mxu0 0.0
    %2175 = vmatprep.subr.mxu0 0.0
    %2176 = vmatpush1.msra.mxu0 0.0
    %2177 = vmatprep.subr.mxu0 0.0
    %2178 = vmatpush1.msra.mxu0 0.0
    %2179 = vmatprep.subr.mxu0 0.0
    %2180 = vmatpush1.msra.mxu0 0.0
    %2181 = vmatprep.subr.mxu0 0.0
    %2182 = vmatpush1.msra.mxu0 0.0
    %2183 = vmatprep.subr.mxu0 0.0
    %2184 = vmatpush1.msra.mxu0 0.0
    %2185 = vmatprep.subr.mxu0 0.0
    %2186 = vmatpush1.msra.mxu0 0.0
    %2187 = vmatprep.subr.mxu0 0.0
    %2188 = vmatpush1.msra.mxu0 0.0
    %2189 = vmatprep.subr.mxu0 0.0
    %2190 = vmatpush1.msra.mxu0 0.0
    %2191 = vmatprep.subr.mxu0 0.0
    %2192 = vmatpush1.msra.mxu0 0.0
    %2193 = vmatprep.subr.mxu0 0.0
    %2194 = vmatpush1.msra.mxu0 0.0
    %2195 = vmatprep.subr.mxu0 0.0
    %2196 = vmatpush1.msra.mxu0 0.0
    %2197 = vmatprep.subr.mxu0 0.0
    %2198 = vmatpush1.msra.mxu0 0.0
    %2199 = vmatprep.subr.mxu0 0.0
    %2200 = vmatpush1.msra.mxu0 0.0
    %2201 = vmatprep.subr.mxu0 0.0
    %2202 = vmatpush1.msra.mxu0 0.0
    %2203 = vmatprep.subr.mxu0 0.0
    %2204 = vmatpush1.msra.mxu0 0.0
    %2205 = vmatprep.subr.mxu0 0.0
    %2206 = vmatpush1.msra.mxu0 0.0
    %2207 = vmatprep.subr.mxu0 0.0
    %2208 = vmatpush1.msra.mxu0 0.0
    %2209 = vmatprep.subr.mxu0 0.0
    %2210 = vmatpush1.msra.mxu0 0.0
    %2211 = vmatprep.subr.mxu0 0.0
    %2212 = vmatpush1.msra.mxu0 0.0
    %2213 = vmatprep.subr.mxu0 0.0
    %2214 = vmatpush1.msra.mxu0 0.0
    %2215 = vmatprep.mubr.f32.mxu0 0.0
    %2216 = vmatmul.mubr.f32.gmra.mrb[0].mxu0 %v2149
    %v2217 = vpop.f32.mrb[0].mxu0
    %v2218 = vadd.f32 %v2143, %v2217
    %v2219 = vpop.f32.mrb[0].mxu0
    %2220 = vdwg.mxu0
    %v2221 = vadd.f32 %v2218, %v268
    %v2222 = vxor.u32 %v2221, 2147483648
    %v2223 = vmul.f32 %v2222, 1.442695
    %v2224 = vpow.pop %v2223
    %v2225 = vadd.f32 %v2224, 1.0
    %v2226 = vrcp.pop %v2225
    %v2227 = vmul.f32 1.0, %v2226
    %v2228 = vtanh.pop %v2221
    %v2229 = vmul.f32 %v2227, %v1956
    %2231 = vrot.lane.b32.xlu0 %v2228, 64
    %v2232 = vpop.permute.xlu0 %2231
    %v2234 = vmul.f32 %v2227, %v2232
    %2236 = vrot.lane.b32.xlu0 %v2234, 32
    %v2237 = vpop.permute.xlu0 %2236
    %v2239 = vadd.f32 %v2229, %v2237
    %v2240 = vtanh.pop %v2239
    %2242 = vrot.lane.b32.xlu0 %v2240, 64
    %v2243 = vpop.permute.xlu0 %2242
    %v2245 = vmul.f32 %v2227, %v2243
    %2247 = vst.msk [vmem:[#allocation11 + $0x30] sm:$0xff] %vm113, %v2148
    %2248 = vst.msk [vmem:[#allocation11 + $0x30] sm:$0xff] %vm547, %v2065
    %2250 = vrot.lane.b32.xlu0 %v2245, 96
    %v2251 = vpop.permute.xlu0 %2250
    %2253 = vst.msk [vmem:[#allocation11 + $0x30] sm:$0xff] %vm553, %v2251
    %2255 = vrot.lane.b32.xlu0 %v2239, 64
    %v2256 = vpop.permute.xlu0 %2255
    %2258 = vst.msk [vmem:[#allocation11 + $0x30] sm:$0xff] %vm559, %v2256
    %v2259 = vld [vmem:[#allocation2 + $0x38] sm:$0xff]
    %2260 = vmatprep.subr.mxu0 0.0
    %2261 = vmatpush1.msra.mxu0 %v251
    %2262 = vmatprep.subr.mxu0 0.0
    %2263 = vmatpush1.msra.mxu0 %v252
    %2264 = vmatprep.subr.mxu0 0.0
    %2265 = vmatpush1.msra.mxu0 %v253
    %2266 = vmatprep.subr.mxu0 0.0
    %2267 = vmatpush1.msra.mxu0 %v254
    %2268 = vmatprep.subr.mxu0 0.0
    %2269 = vmatpush1.msra.mxu0 0.0
    %2270 = vmatprep.subr.mxu0 0.0
    %2271 = vmatpush1.msra.mxu0 0.0
    %2272 = vmatprep.subr.mxu0 0.0
    %2273 = vmatpush1.msra.mxu0 0.0
    %2274 = vmatprep.subr.mxu0 0.0
    %2275 = vmatpush1.msra.mxu0 0.0
    %2276 = vmatprep.subr.mxu0 0.0
    %2277 = vmatpush1.msra.mxu0 0.0
    %2278 = vmatprep.subr.mxu0 0.0
    %2279 = vmatpush1.msra.mxu0 0.0
    %2280 = vmatprep.subr.mxu0 0.0
    %2281 = vmatpush1.msra.mxu0 0.0
    %2282 = vmatprep.subr.mxu0 0.0
    %2283 = vmatpush1.msra.mxu0 0.0
    %2284 = vmatprep.subr.mxu0 0.0
    %2285 = vmatpush1.msra.mxu0 0.0
    %2286 = vmatprep.subr.mxu0 0.0
    %2287 = vmatpush1.msra.mxu0 0.0
    %2288 = vmatprep.subr.mxu0 0.0
    %2289 = vmatpush1.msra.mxu0 0.0
    %2290 = vmatprep.subr.mxu0 0.0
    %2291 = vmatpush1.msra.mxu0 0.0
    %2292 = vmatprep.subr.mxu0 0.0
    %2293 = vmatpush1.msra.mxu0 0.0
    %2294 = vmatprep.subr.mxu0 0.0
    %2295 = vmatpush1.msra.mxu0 0.0
    %2296 = vmatprep.subr.mxu0 0.0
    %2297 = vmatpush1.msra.mxu0 0.0
    %2298 = vmatprep.subr.mxu0 0.0
    %2299 = vmatpush1.msra.mxu0 0.0
    %2300 = vmatprep.subr.mxu0 0.0
    %2301 = vmatpush1.msra.mxu0 0.0
    %2302 = vmatprep.subr.mxu0 0.0
    %2303 = vmatpush1.msra.mxu0 0.0
    %2304 = vmatprep.subr.mxu0 0.0
    %2305 = vmatpush1.msra.mxu0 0.0
    %2306 = vmatprep.subr.mxu0 0.0
    %2307 = vmatpush1.msra.mxu0 0.0
    %2308 = vmatprep.subr.mxu0 0.0
    %2309 = vmatpush1.msra.mxu0 0.0
    %2310 = vmatprep.subr.mxu0 0.0
    %2311 = vmatpush1.msra.mxu0 0.0
    %2312 = vmatprep.subr.mxu0 0.0
    %2313 = vmatpush1.msra.mxu0 0.0
    %2314 = vmatprep.subr.mxu0 0.0
    %2315 = vmatpush1.msra.mxu0 0.0
    %2316 = vmatprep.subr.mxu0 0.0
    %2317 = vmatpush1.msra.mxu0 0.0
    %2318 = vmatprep.subr.mxu0 0.0
    %2319 = vmatpush1.msra.mxu0 0.0
    %2320 = vmatprep.subr.mxu0 0.0
    %2321 = vmatpush1.msra.mxu0 0.0
    %2322 = vmatprep.subr.mxu0 0.0
    %2323 = vmatpush1.msra.mxu0 0.0
    %2324 = vmatprep.mubr.f32.mxu0 0.0
    %2325 = vmatmul.mubr.f32.gmra.mrb[0].mxu0 %v2149
    %v2326 = vpop.f32.mrb[0].mxu0
    %v2327 = vadd.f32 0.0, %v2326
    %v2328 = vpop.f32.mrb[0].mxu0
    %2329 = vdwg.mxu0
    %v2330 = vadd.f32 %v2259, %v2327
    %v2331 = vxor.u32 %v2330, 2147483648
    %v2332 = vmul.f32 %v2331, 1.442695
    %v2333 = vpow.pop %v2332
    %v2334 = vadd.f32 %v2333, 1.0
    %v2335 = vrcp.pop %v2334
    %v2336 = vmul.f32 1.0, %v2335
    %v2337 = vtanh.pop %v2330
    %v2338 = vmul.f32 %v2336, %v2065
    %2340 = vrot.lane.b32.xlu0 %v2337, 64
    %v2341 = vpop.permute.xlu0 %2340
    %v2343 = vmul.f32 %v2336, %v2341
    %2345 = vrot.lane.b32.xlu0 %v2343, 32
    %v2346 = vpop.permute.xlu0 %2345
    %v2348 = vadd.f32 %v2338, %v2346
    %v2349 = vtanh.pop %v2348
    %2351 = vrot.lane.b32.xlu0 %v2349, 64
    %v2352 = vpop.permute.xlu0 %2351
    %v2354 = vmul.f32 %v2336, %v2352
    %2355 = vrot.lane.b32.xlu0 %v2245, 32
    %v2356 = vpop.permute.xlu0 %2355
    %v2357 = vsel %vm113, %v2356, 0
    %2359 = vmatprep.subr.mxu0 0.0
    %2360 = vmatpush1.msra.mxu0 %v259
    %2361 = vmatprep.subr.mxu0 0.0
    %2362 = vmatpush1.msra.mxu0 %v260
    %2363 = vmatprep.subr.mxu0 0.0
    %2364 = vmatpush1.msra.mxu0 %v261
    %2365 = vmatprep.subr.mxu0 0.0
    %2366 = vmatpush1.msra.mxu0 %v262
    %2367 = vmatprep.subr.mxu0 0.0
    %2368 = vmatpush1.msra.mxu0 0.0
    %2369 = vmatprep.subr.mxu0 0.0
    %2370 = vmatpush1.msra.mxu0 0.0
    %2371 = vmatprep.subr.mxu0 0.0
    %2372 = vmatpush1.msra.mxu0 0.0
    %2373 = vmatprep.subr.mxu0 0.0
    %2374 = vmatpush1.msra.mxu0 0.0
    %2375 = vmatprep.subr.mxu0 0.0
    %2376 = vmatpush1.msra.mxu0 0.0
    %2377 = vmatprep.subr.mxu0 0.0
    %2378 = vmatpush1.msra.mxu0 0.0
    %2379 = vmatprep.subr.mxu0 0.0
    %2380 = vmatpush1.msra.mxu0 0.0
    %2381 = vmatprep.subr.mxu0 0.0
    %2382 = vmatpush1.msra.mxu0 0.0
    %2383 = vmatprep.subr.mxu0 0.0
    %2384 = vmatpush1.msra.mxu0 0.0
    %2385 = vmatprep.subr.mxu0 0.0
    %2386 = vmatpush1.msra.mxu0 0.0
    %2387 = vmatprep.subr.mxu0 0.0
    %2388 = vmatpush1.msra.mxu0 0.0
    %2389 = vmatprep.subr.mxu0 0.0
    %2390 = vmatpush1.msra.mxu0 0.0
    %2391 = vmatprep.subr.mxu0 0.0
    %2392 = vmatpush1.msra.mxu0 0.0
    %2393 = vmatprep.subr.mxu0 0.0
    %2394 = vmatpush1.msra.mxu0 0.0
    %2395 = vmatprep.subr.mxu0 0.0
    %2396 = vmatpush1.msra.mxu0 0.0
    %2397 = vmatprep.subr.mxu0 0.0
    %2398 = vmatpush1.msra.mxu0 0.0
    %2399 = vmatprep.subr.mxu0 0.0
    %2400 = vmatpush1.msra.mxu0 0.0
    %2401 = vmatprep.subr.mxu0 0.0
    %2402 = vmatpush1.msra.mxu0 0.0
    %2403 = vmatprep.subr.mxu0 0.0
    %2404 = vmatpush1.msra.mxu0 0.0
    %2405 = vmatprep.subr.mxu0 0.0
    %2406 = vmatpush1.msra.mxu0 0.0
    %2407 = vmatprep.subr.mxu0 0.0
    %2408 = vmatpush1.msra.mxu0 0.0
    %2409 = vmatprep.subr.mxu0 0.0
    %2410 = vmatpush1.msra.mxu0 0.0
    %2411 = vmatprep.subr.mxu0 0.0
    %2412 = vmatpush1.msra.mxu0 0.0
    %2413 = vmatprep.subr.mxu0 0.0
    %2414 = vmatpush1.msra.mxu0 0.0
    %2415 = vmatprep.subr.mxu0 0.0
    %2416 = vmatpush1.msra.mxu0 0.0
    %2417 = vmatprep.subr.mxu0 0.0
    %2418 = vmatpush1.msra.mxu0 0.0
    %2419 = vmatprep.subr.mxu0 0.0
    %2420 = vmatpush1.msra.mxu0 0.0
    %2421 = vmatprep.subr.mxu0 0.0
    %2422 = vmatpush1.msra.mxu0 0.0
    %2423 = vmatprep.mubr.f32.mxu0 0.0
    %2424 = vmatmul.mubr.f32.gmra.mrb[0].mxu0 %v2357
    %v2425 = vpop.f32.mrb[0].mxu0
    %v2426 = vadd.f32 0.0, %v2425
    %v2427 = vpop.f32.mrb[0].mxu0
    %2428 = vdwg.mxu0
    %2430 = vrot.lane.b32.xlu0 %v2354, 32
    %v2431 = vpop.permute.xlu0 %2430
    %v2432 = vsel %vm113, %v2431, 0
    %2434 = vmatprep.subr.mxu0 0.0
    %2435 = vmatpush1.msra.mxu0 %v255
    %2436 = vmatprep.subr.mxu0 0.0
    %2437 = vmatpush1.msra.mxu0 %v256
    %2438 = vmatprep.subr.mxu0 0.0
    %2439 = vmatpush1.msra.mxu0 %v257
    %2440 = vmatprep.subr.mxu0 0.0
    %2441 = vmatpush1.msra.mxu0 %v258
    %2442 = vmatprep.subr.mxu0 0.0
    %2443 = vmatpush1.msra.mxu0 0.0
    %2444 = vmatprep.subr.mxu0 0.0
    %2445 = vmatpush1.msra.mxu0 0.0
    %2446 = vmatprep.subr.mxu0 0.0
    %2447 = vmatpush1.msra.mxu0 0.0
    %2448 = vmatprep.subr.mxu0 0.0
    %2449 = vmatpush1.msra.mxu0 0.0
    %2450 = vmatprep.subr.mxu0 0.0
    %2451 = vmatpush1.msra.mxu0 0.0
    %2452 = vmatprep.subr.mxu0 0.0
    %2453 = vmatpush1.msra.mxu0 0.0
    %2454 = vmatprep.subr.mxu0 0.0
    %2455 = vmatpush1.msra.mxu0 0.0
    %2456 = vmatprep.subr.mxu0 0.0
    %2457 = vmatpush1.msra.mxu0 0.0
    %2458 = vmatprep.subr.mxu0 0.0
    %2459 = vmatpush1.msra.mxu0 0.0
    %2460 = vmatprep.subr.mxu0 0.0
    %2461 = vmatpush1.msra.mxu0 0.0
    %2462 = vmatprep.subr.mxu0 0.0
    %2463 = vmatpush1.msra.mxu0 0.0
    %2464 = vmatprep.subr.mxu0 0.0
    %2465 = vmatpush1.msra.mxu0 0.0
    %2466 = vmatprep.subr.mxu0 0.0
    %2467 = vmatpush1.msra.mxu0 0.0
    %2468 = vmatprep.subr.mxu0 0.0
    %2469 = vmatpush1.msra.mxu0 0.0
    %2470 = vmatprep.subr.mxu0 0.0
    %2471 = vmatpush1.msra.mxu0 0.0
    %2472 = vmatprep.subr.mxu0 0.0
    %2473 = vmatpush1.msra.mxu0 0.0
    %2474 = vmatprep.subr.mxu0 0.0
    %2475 = vmatpush1.msra.mxu0 0.0
    %2476 = vmatprep.subr.mxu0 0.0
    %2477 = vmatpush1.msra.mxu0 0.0
    %2478 = vmatprep.subr.mxu0 0.0
    %2479 = vmatpush1.msra.mxu0 0.0
    %2480 = vmatprep.subr.mxu0 0.0
    %2481 = vmatpush1.msra.mxu0 0.0
    %2482 = vmatprep.subr.mxu0 0.0
    %2483 = vmatpush1.msra.mxu0 0.0
    %2484 = vmatprep.subr.mxu0 0.0
    %2485 = vmatpush1.msra.mxu0 0.0
    %2486 = vmatprep.subr.mxu0 0.0
    %2487 = vmatpush1.msra.mxu0 0.0
    %2488 = vmatprep.subr.mxu0 0.0
    %2489 = vmatpush1.msra.mxu0 0.0
    %2490 = vmatprep.subr.mxu0 0.0
    %2491 = vmatpush1.msra.mxu0 0.0
    %2492 = vmatprep.subr.mxu0 0.0
    %2493 = vmatpush1.msra.mxu0 0.0
    %2494 = vmatprep.subr.mxu0 0.0
    %2495 = vmatpush1.msra.mxu0 0.0
    %2496 = vmatprep.subr.mxu0 0.0
    %2497 = vmatpush1.msra.mxu0 0.0
    %2498 = vmatprep.mubr.f32.mxu0 0.0
    %2499 = vmatmul.mubr.f32.gmra.mrb[0].mxu0 %v2432
    %v2500 = vpop.f32.mrb[0].mxu0
    %v2501 = vadd.f32 %v2426, %v2500
    %v2502 = vpop.f32.mrb[0].mxu0
    %2503 = vdwg.mxu0
    %v2504 = vadd.f32 %v2501, %v268
    %v2505 = vxor.u32 %v2504, 2147483648
    %v2506 = vmul.f32 %v2505, 1.442695
    %v2507 = vpow.pop %v2506
    %v2508 = vadd.f32 %v2507, 1.0
    %v2509 = vrcp.pop %v2508
    %v2510 = vmul.f32 1.0, %v2509
    %v2511 = vtanh.pop %v2504
    %v2512 = vmul.f32 %v2510, %v2239
    %2514 = vrot.lane.b32.xlu0 %v2511, 64
    %v2515 = vpop.permute.xlu0 %2514
    %v2517 = vmul.f32 %v2510, %v2515
    %2519 = vrot.lane.b32.xlu0 %v2517, 32
    %v2520 = vpop.permute.xlu0 %2519
    %v2522 = vadd.f32 %v2512, %v2520
    %v2523 = vtanh.pop %v2522
    %2525 = vrot.lane.b32.xlu0 %v2523, 64
    %v2526 = vpop.permute.xlu0 %2525
    %v2528 = vmul.f32 %v2510, %v2526
    %2530 = vst.msk [vmem:[#allocation11 + $0x38] sm:$0xff] %vm113, %v2431
    %2531 = vst.msk [vmem:[#allocation11 + $0x38] sm:$0xff] %vm547, %v2348
    %2533 = vrot.lane.b32.xlu0 %v2528, 96
    %v2534 = vpop.permute.xlu0 %2533
    %2536 = vst.msk [vmem:[#allocation11 + $0x38] sm:$0xff] %vm553, %v2534
    %2538 = vrot.lane.b32.xlu0 %v2522, 64
    %v2539 = vpop.permute.xlu0 %2538
    %2541 = vst.msk [vmem:[#allocation11 + $0x38] sm:$0xff] %vm559, %v2539
    %v2542 = vld [vmem:[#allocation11] sm:$0xff]
    %v2543 = vld [vmem:[#allocation11 + $0x8] sm:$0xff]
    %v2544 = vld [vmem:[#allocation11 + $0x10] sm:$0xff]
    %v2545 = vld [vmem:[#allocation11 + $0x18] sm:$0xff]
    %v2546 = vld [vmem:[#allocation11 + $0x20] sm:$0xff]
    %v2547 = vld [vmem:[#allocation11 + $0x28] sm:$0xff]
    %v2548 = vld [vmem:[#allocation11 + $0x30] sm:$0xff]
    %v2549 = vld [vmem:[#allocation11 + $0x38] sm:$0xff]
    %v2550 = vld [vmem:[%s9] sm:$0xff]
    %v2551 = vld [vmem:[%s9 + $0x8] sm:$0xff]
    %v2552 = vld [vmem:[%s9 + $0x10] sm:$0xff]
    %v2553 = vld [vmem:[%s9 + $0x18] sm:$0xff]
    %v2554 = vld [vmem:[%s9 + $0x20] sm:$0xff]
    %v2555 = vld [vmem:[%s9 + $0x28] sm:$0xff]
    %v2556 = vld [vmem:[%s9 + $0x30] sm:$0xff]
    %v2557 = vld [vmem:[%s9 + $0x38] sm:$0xff]
    %v2558 = vld [vmem:[%s9 + $0x40] sm:$0xff]
    %v2559 = vld [vmem:[%s9 + $0x48] sm:$0xff]
    %v2560 = vld [vmem:[%s9 + $0x50] sm:$0xff]
    %v2561 = vld [vmem:[%s9 + $0x58] sm:$0xff]
    %v2562 = vld [vmem:[%s9 + $0x60] sm:$0xff]
    %v2563 = vld [vmem:[%s9 + $0x68] sm:$0xff]
    %v2564 = vld [vmem:[%s9 + $0x70] sm:$0xff]
    %v2565 = vld [vmem:[%s9 + $0x78] sm:$0xff]
    %v2566 = vld [vmem:[%s8] sm:$0xff]
    %v2567 = vld [vmem:[%s8 + $0x8] sm:$0xff]
    %v2568 = vld [vmem:[%s8 + $0x10] sm:$0xff]
    %v2569 = vld [vmem:[%s8 + $0x18] sm:$0xff]
    %v2570 = vld [vmem:[%s8 + $0x20] sm:$0xff]
    %v2571 = vld [vmem:[%s8 + $0x28] sm:$0xff]
    %v2572 = vld [vmem:[%s8 + $0x30] sm:$0xff]
    %v2573 = vld [vmem:[%s8 + $0x38] sm:$0xff]
    %v2574 = vld [vmem:[%s10] sm:$0xff]
    %v2575 = vld [vmem:[%s10 + $0x8] sm:$0xff]
    %v2576 = vld [vmem:[%s10 + $0x10] sm:$0xff]
    %vm2577 = vcmask 195584
    %v2579 = vsel %vm2577, %v2566, 0
    %v2582 = vsel %vm2577, %v2567, 0
    %v2585 = vsel %vm2577, %v2568, 0
    %v2588 = vsel %vm2577, %v2569, 0
    %v2591 = vsel %vm2577, %v2570, 0
    %v2594 = vsel %vm2577, %v2571, 0
    %v2597 = vsel %vm2577, %v2572, 0
    %v2600 = vsel %vm2577, %v2573, 0
    %2602 = vmatprep.subr.mxu0 0.0
    %2603 = vmatpush1.msra.mxu0 %v2574
    %2604 = vmatprep.subr.mxu0 0.0
    %2605 = vmatpush1.msra.mxu0 %v2575
    %2606 = vmatprep.subr.mxu0 0.0
    %2607 = vmatpush1.msra.mxu0 %v2576
    %2608 = vmatprep.subr.mxu0 0.0
    %2609 = vmatpush1.msra.mxu0 0.0
    %2610 = vmatprep.subr.mxu0 0.0
    %2611 = vmatpush1.msra.mxu0 0.0
    %2612 = vmatprep.subr.mxu0 0.0
    %2613 = vmatpush1.msra.mxu0 0.0
    %2614 = vmatprep.subr.mxu0 0.0
    %2615 = vmatpush1.msra.mxu0 0.0
    %2616 = vmatprep.subr.mxu0 0.0
    %2617 = vmatpush1.msra.mxu0 0.0
    %2618 = vmatprep.subr.mxu0 0.0
    %2619 = vmatpush1.msra.mxu0 0.0
    %2620 = vmatprep.subr.mxu0 0.0
    %2621 = vmatpush1.msra.mxu0 0.0
    %2622 = vmatprep.subr.mxu0 0.0
    %2623 = vmatpush1.msra.mxu0 0.0
    %2624 = vmatprep.subr.mxu0 0.0
    %2625 = vmatpush1.msra.mxu0 0.0
    %2626 = vmatprep.subr.mxu0 0.0
    %2627 = vmatpush1.msra.mxu0 0.0
    %2628 = vmatprep.subr.mxu0 0.0
    %2629 = vmatpush1.msra.mxu0 0.0
    %2630 = vmatprep.subr.mxu0 0.0
    %2631 = vmatpush1.msra.mxu0 0.0
    %2632 = vmatprep.subr.mxu0 0.0
    %2633 = vmatpush1.msra.mxu0 0.0
    %2634 = vmatprep.subr.mxu0 0.0
    %2635 = vmatpush1.msra.mxu0 0.0
    %2636 = vmatprep.subr.mxu0 0.0
    %2637 = vmatpush1.msra.mxu0 0.0
    %2638 = vmatprep.subr.mxu0 0.0
    %2639 = vmatpush1.msra.mxu0 0.0
    %2640 = vmatprep.subr.mxu0 0.0
    %2641 = vmatpush1.msra.mxu0 0.0
    %2642 = vmatprep.subr.mxu0 0.0
    %2643 = vmatpush1.msra.mxu0 0.0
    %2644 = vmatprep.subr.mxu0 0.0
    %2645 = vmatpush1.msra.mxu0 0.0
    %2646 = vmatprep.subr.mxu0 0.0
    %2647 = vmatpush1.msra.mxu0 0.0
    %2648 = vmatprep.subr.mxu0 0.0
    %2649 = vmatpush1.msra.mxu0 0.0
    %2650 = vmatprep.subr.mxu0 0.0
    %2651 = vmatpush1.msra.mxu0 0.0
    %2652 = vmatprep.subr.mxu0 0.0
    %2653 = vmatpush1.msra.mxu0 0.0
    %2654 = vmatprep.subr.mxu0 0.0
    %2655 = vmatpush1.msra.mxu0 0.0
    %2656 = vmatprep.subr.mxu0 0.0
    %2657 = vmatpush1.msra.mxu0 0.0
    %2658 = vmatprep.subr.mxu0 0.0
    %2659 = vmatpush1.msra.mxu0 0.0
    %2660 = vmatprep.subr.mxu0 0.0
    %2661 = vmatpush1.msra.mxu0 0.0
    %2662 = vmatprep.subr.mxu0 0.0
    %2663 = vmatpush1.msra.mxu0 0.0
    %2664 = vmatprep.subr.mxu0 0.0
    %2665 = vmatpush1.msra.mxu0 0.0
    %2666 = vmatprep.mubr.f32.mxu0 0.0
    %2667 = vmatmul.mubr.f32.gmra.mrb[0].mxu0 %v2579
    %v2668 = vpop.f32.mrb[0].mxu0
    %v2669 = vadd.f32 0.0, %v2668
    %v2670 = vpop.f32.mrb[0].mxu0
    %2671 = vmatprep.mubr.f32.mxu0 0.0
    %2672 = vmatmul.mubr.f32.gmra.mrb[0].mxu0 %v2582
    %v2673 = vpop.f32.mrb[0].mxu0
    %v2674 = vadd.f32 0.0, %v2673
    %v2675 = vpop.f32.mrb[0].mxu0
    %2676 = vmatprep.mubr.f32.mxu0 0.0
    %2677 = vmatmul.mubr.f32.gmra.mrb[0].mxu0 %v2585
    %v2678 = vpop.f32.mrb[0].mxu0
    %v2679 = vadd.f32 0.0, %v2678
    %v2680 = vpop.f32.mrb[0].mxu0
    %2681 = vmatprep.mubr.f32.mxu0 0.0
    %2682 = vmatmul.mubr.f32.gmra.mrb[0].mxu0 %v2588
    %v2683 = vpop.f32.mrb[0].mxu0
    %v2684 = vadd.f32 0.0, %v2683
    %v2685 = vpop.f32.mrb[0].mxu0
    %2686 = vmatprep.mubr.f32.mxu0 0.0
    %2687 = vmatmul.mubr.f32.gmra.mrb[0].mxu0 %v2591
    %v2688 = vpop.f32.mrb[0].mxu0
    %v2689 = vadd.f32 0.0, %v2688
    %v2690 = vpop.f32.mrb[0].mxu0
    %2691 = vmatprep.mubr.f32.mxu0 0.0
    %2692 = vmatmul.mubr.f32.gmra.mrb[0].mxu0 %v2594
    %v2693 = vpop.f32.mrb[0].mxu0
    %v2694 = vadd.f32 0.0, %v2693
    %v2695 = vpop.f32.mrb[0].mxu0
    %2696 = vmatprep.mubr.f32.mxu0 0.0
    %2697 = vmatmul.mubr.f32.gmra.mrb[0].mxu0 %v2597
    %v2698 = vpop.f32.mrb[0].mxu0
    %v2699 = vadd.f32 0.0, %v2698
    %v2700 = vpop.f32.mrb[0].mxu0
    %2701 = vmatprep.mubr.f32.mxu0 0.0
    %2702 = vmatmul.mubr.f32.gmra.mrb[0].mxu0 %v2600
    %v2703 = vpop.f32.mrb[0].mxu0
    %v2704 = vadd.f32 0.0, %v2703
    %v2705 = vpop.f32.mrb[0].mxu0
    %2706 = vdwg.mxu0
    %2707 = vmatprep.subr.mxu0 0.0
    %2708 = vmatpush1.msra.mxu0 %v2550
    %2709 = vmatprep.subr.mxu0 0.0
    %2710 = vmatpush1.msra.mxu0 %v2551
    %2711 = vmatprep.subr.mxu0 0.0
    %2712 = vmatpush1.msra.mxu0 %v2552
    %2713 = vmatprep.subr.mxu0 0.0
    %2714 = vmatpush1.msra.mxu0 %v2553
    %2715 = vmatprep.subr.mxu0 0.0
    %2716 = vmatpush1.msra.mxu0 %v2554
    %2717 = vmatprep.subr.mxu0 0.0
    %2718 = vmatpush1.msra.mxu0 %v2555
    %2719 = vmatprep.subr.mxu0 0.0
    %2720 = vmatpush1.msra.mxu0 %v2556
    %2721 = vmatprep.subr.mxu0 0.0
    %2722 = vmatpush1.msra.mxu0 %v2557
    %2723 = vmatprep.subr.mxu0 0.0
    %2724 = vmatpush1.msra.mxu0 %v2558
    %2725 = vmatprep.subr.mxu0 0.0
    %2726 = vmatpush1.msra.mxu0 %v2559
    %2727 = vmatprep.subr.mxu0 0.0
    %2728 = vmatpush1.msra.mxu0 %v2560
    %2729 = vmatprep.subr.mxu0 0.0
    %2730 = vmatpush1.msra.mxu0 %v2561
    %2731 = vmatprep.subr.mxu0 0.0
    %2732 = vmatpush1.msra.mxu0 %v2562
    %2733 = vmatprep.subr.mxu0 0.0
    %2734 = vmatpush1.msra.mxu0 %v2563
    %2735 = vmatprep.subr.mxu0 0.0
    %2736 = vmatpush1.msra.mxu0 %v2564
    %2737 = vmatprep.subr.mxu0 0.0
    %2738 = vmatpush1.msra.mxu0 %v2565
    %2739 = vmatprep.subr.mxu0 0.0
    %2740 = vmatpush1.msra.mxu0 0.0
    %2741 = vmatprep.subr.mxu0 0.0
    %2742 = vmatpush1.msra.mxu0 0.0
    %2743 = vmatprep.subr.mxu0 0.0
    %2744 = vmatpush1.msra.mxu0 0.0
    %2745 = vmatprep.subr.mxu0 0.0
    %2746 = vmatpush1.msra.mxu0 0.0
    %2747 = vmatprep.subr.mxu0 0.0
    %2748 = vmatpush1.msra.mxu0 0.0
    %2749 = vmatprep.subr.mxu0 0.0
    %2750 = vmatpush1.msra.mxu0 0.0
    %2751 = vmatprep.subr.mxu0 0.0
    %2752 = vmatpush1.msra.mxu0 0.0
    %2753 = vmatprep.subr.mxu0 0.0
    %2754 = vmatpush1.msra.mxu0 0.0
    %2755 = vmatprep.subr.mxu0 0.0
    %2756 = vmatpush1.msra.mxu0 0.0
    %2757 = vmatprep.subr.mxu0 0.0
    %2758 = vmatpush1.msra.mxu0 0.0
    %2759 = vmatprep.subr.mxu0 0.0
    %2760 = vmatpush1.msra.mxu0 0.0
    %2761 = vmatprep.subr.mxu0 0.0
    %2762 = vmatpush1.msra.mxu0 0.0
    %2763 = vmatprep.subr.mxu0 0.0
    %2764 = vmatpush1.msra.mxu0 0.0
    %2765 = vmatprep.subr.mxu0 0.0
    %2766 = vmatpush1.msra.mxu0 0.0
    %2767 = vmatprep.subr.mxu0 0.0
    %2768 = vmatpush1.msra.mxu0 0.0
    %2769 = vmatprep.subr.mxu0 0.0
    %2770 = vmatpush1.msra.mxu0 0.0
    %2771 = vmatprep.mubr.f32.mxu0 0.0
    %2772 = vmatmul.mubr.f32.gmra.mrb[0].mxu0 %v2542
    %v2773 = vpop.f32.mrb[0].mxu0
    %v2774 = vadd.f32 %v2669, %v2773
    %v2775 = vpop.f32.mrb[0].mxu0
    %2776 = vmatprep.mubr.f32.mxu0 0.0
    %2777 = vmatmul.mubr.f32.gmra.mrb[0].mxu0 %v2543
    %v2778 = vpop.f32.mrb[0].mxu0
    %v2779 = vadd.f32 %v2674, %v2778
    %v2780 = vpop.f32.mrb[0].mxu0
    %2781 = vmatprep.mubr.f32.mxu0 0.0
    %2782 = vmatmul.mubr.f32.gmra.mrb[0].mxu0 %v2544
    %v2783 = vpop.f32.mrb[0].mxu0
    %v2784 = vadd.f32 %v2679, %v2783
    %v2785 = vpop.f32.mrb[0].mxu0
    %2786 = vmatprep.mubr.f32.mxu0 0.0
    %2787 = vmatmul.mubr.f32.gmra.mrb[0].mxu0 %v2545
    %v2788 = vpop.f32.mrb[0].mxu0
    %v2789 = vadd.f32 %v2684, %v2788
    %v2790 = vpop.f32.mrb[0].mxu0
    %2791 = vmatprep.mubr.f32.mxu0 0.0
    %2792 = vmatmul.mubr.f32.gmra.mrb[0].mxu0 %v2546
    %v2793 = vpop.f32.mrb[0].mxu0
    %v2794 = vadd.f32 %v2689, %v2793
    %v2795 = vpop.f32.mrb[0].mxu0
    %2796 = vmatprep.mubr.f32.mxu0 0.0
    %2797 = vmatmul.mubr.f32.gmra.mrb[0].mxu0 %v2547
    %v2798 = vpop.f32.mrb[0].mxu0
    %v2799 = vadd.f32 %v2694, %v2798
    %v2800 = vpop.f32.mrb[0].mxu0
    %2801 = vmatprep.mubr.f32.mxu0 0.0
    %2802 = vmatmul.mubr.f32.gmra.mrb[0].mxu0 %v2548
    %v2803 = vpop.f32.mrb[0].mxu0
    %v2804 = vadd.f32 %v2699, %v2803
    %v2805 = vpop.f32.mrb[0].mxu0
    %2806 = vmatprep.mubr.f32.mxu0 0.0
    %2807 = vmatmul.mubr.f32.gmra.mrb[0].mxu0 %v2549
    %v2808 = vpop.f32.mrb[0].mxu0
    %v2809 = vadd.f32 %v2704, %v2808
    %v2810 = vpop.f32.mrb[0].mxu0
    %2811 = vdwg.mxu0
    %v2812 = vld [vmem:[#allocation9] sm:$0x1]
    %v2814 = vlaneseq
    %v2815 = vshrl.u32 %v2814, 7
    %v2816 = vsub.s32 0, %v2815
    %v2817 = vrot.slane %v2812, %v2816
    %v2819 = vadd.f32 %v2774, %v2817
    %v2820 = vadd.f32 %v2779, %v2817
    %v2821 = vadd.f32 %v2784, %v2817
    %v2822 = vadd.f32 %v2789, %v2817
    %v2823 = vadd.f32 %v2794, %v2817
    %v2824 = vadd.f32 %v2799, %v2817
    %v2825 = vadd.f32 %v2804, %v2817
    %v2826 = vadd.f32 %v2809, %v2817
    %v2827 = vxor.u32 %v2819, 2147483648
    %v2828 = vxor.u32 %v2820, 2147483648
    %v2829 = vxor.u32 %v2821, 2147483648
    %v2830 = vxor.u32 %v2822, 2147483648
    %v2831 = vxor.u32 %v2823, 2147483648
    %v2832 = vxor.u32 %v2824, 2147483648
    %v2833 = vxor.u32 %v2825, 2147483648
    %v2834 = vxor.u32 %v2826, 2147483648
    %v2835 = vmul.f32 %v2827, 1.442695
    %v2836 = vpow.pop %v2835
    %v2837 = vmul.f32 %v2828, 1.442695
    %v2838 = vpow.pop %v2837
    %v2839 = vmul.f32 %v2829, 1.442695
    %v2840 = vpow.pop %v2839
    %v2841 = vmul.f32 %v2830, 1.442695
    %v2842 = vpow.pop %v2841
    %v2843 = vmul.f32 %v2831, 1.442695
    %v2844 = vpow.pop %v2843
    %v2845 = vmul.f32 %v2832, 1.442695
    %v2846 = vpow.pop %v2845
    %v2847 = vmul.f32 %v2833, 1.442695
    %v2848 = vpow.pop %v2847
    %v2849 = vmul.f32 %v2834, 1.442695
    %v2850 = vpow.pop %v2849
    %v2851 = vadd.f32 %v2836, 1.0
    %v2852 = vadd.f32 %v2838, 1.0
    %v2853 = vadd.f32 %v2840, 1.0
    %v2854 = vadd.f32 %v2842, 1.0
    %v2855 = vadd.f32 %v2844, 1.0
    %v2856 = vadd.f32 %v2846, 1.0
    %v2857 = vadd.f32 %v2848, 1.0
    %v2858 = vadd.f32 %v2850, 1.0
    %v2859 = vrcp.pop %v2851
    %v2860 = vmul.f32 1.0, %v2859
    %v2861 = vrcp.pop %v2852
    %v2862 = vmul.f32 1.0, %v2861
    %v2863 = vrcp.pop %v2853
    %v2864 = vmul.f32 1.0, %v2863
    %v2865 = vrcp.pop %v2854
    %v2866 = vmul.f32 1.0, %v2865
    %v2867 = vrcp.pop %v2855
    %v2868 = vmul.f32 1.0, %v2867
    %v2869 = vrcp.pop %v2856
    %v2870 = vmul.f32 1.0, %v2869
    %v2871 = vrcp.pop %v2857
    %v2872 = vmul.f32 1.0, %v2871
    %v2873 = vrcp.pop %v2858
    %v2874 = vmul.f32 1.0, %v2873
    %vm2875 = vcmask 130048
    %2876 = vst.msk [vmem:[#allocation12] sm:$0xff] %vm2875, %v2860
    %2877 = vst.msk [vmem:[#allocation12 + $0x8] sm:$0xff] %vm2875, %v2862
    %2878 = vst.msk [vmem:[#allocation12 + $0x10] sm:$0xff] %vm2875, %v2864
    %2879 = vst.msk [vmem:[#allocation12 + $0x18] sm:$0xff] %vm2875, %v2866
    %2880 = vst.msk [vmem:[#allocation12 + $0x20] sm:$0xff] %vm2875, %v2868
    %2881 = vst.msk [vmem:[#allocation12 + $0x28] sm:$0xff] %vm2875, %v2870
    %2882 = vst.msk [vmem:[#allocation12 + $0x30] sm:$0xff] %vm2875, %v2872
    %2883 = vst.msk [vmem:[#allocation12 + $0x38] sm:$0xff] %vm2875, %v2874
    // Predicated region
    $region66: #{controller_rollout.1} parent=1 // pred_check
      _
    $region67: #{controller_rollout.1} parent=1 // pred_check_branch
      %2885 = sbr.rel (0) target = $region69
    $region68: #{controller_rollout.1} parent=1 // pred_region
      %s2887 = ssub.s32 1024, 1024
      %2888 = vsyncadd [#allocation5], %s2887
      %s2889 = sshll.u32 [#allocation11], 4
      %s2890 = int_to_ptr.vmem [resolvable:$true] %s2889
      %2895 = dma.vmem_to_hbm [thread:$0]  %s2890, 1024, %s12, [#allocation5], 128, 128, 8
    $region69: #{controller_rollout.1} parent=1 // pred_fallthru
      _
    // Predicated region
    $region70: #{controller_rollout.1} parent=1 // pred_check
      _
    $region71: #{controller_rollout.1} parent=1 // pred_check_branch
      %2897 = sbr.rel (0) target = $region73
    $region72: #{controller_rollout.1} parent=1 // pred_region
      %s2899 = ssub.s32 1024, 1024
      %2900 = vsyncadd [#allocation13], %s2899
      %s2901 = sshll.u32 [#allocation12], 4
      %s2902 = int_to_ptr.vmem [resolvable:$true] %s2901
      %2907 = dma.vmem_to_hbm [thread:$0]  %s2902, 1024, %s13, [#allocation13], 128, 128, 8
    $region73: #{controller_rollout.1} parent=1 // pred_fallthru
      _
    // Predicated region
    $region74: #{controller_rollout.1} parent=1 // pred_check
      _
    $region75: #{controller_rollout.1} parent=1 // pred_check_branch
      %2909 = sbr.rel (0) target = $region77
    $region76: #{controller_rollout.1} parent=1 // pred_region
      %2910 = dma.done [#allocation5], 1024
    $region77: #{controller_rollout.1} parent=1 // pred_fallthru
      _
    // Predicated region
    $region78: #{controller_rollout.1} parent=1 // pred_check
      _
    $region79: #{controller_rollout.1} parent=1 // pred_check_branch
      %2912 = sbr.rel (0) target = $region81
    $region80: #{controller_rollout.1} parent=1 // pred_region
      %2913 = dma.done [#allocation13], 1024
    $region81: #{controller_rollout.1} parent=1 // pred_fallthru
      _
    %2914 = vsyncpa [#allocation4], 1
    %2915 = vsyncpa [#allocation7], 1
    %2916 = vsyncpa [#allocation10], 1
    %2917 = vsyncpa [#allocation5], 1
    %2918 = vsyncpa [#allocation13], 1

</llo_original>
